<compile_context>
chip_gen: v7x
topology: tpu7x:2x2x1
jax: 0.10.0
libtpu: 0.0.40
codegen_flags: <defaults>
</compile_context>

<pallas_src>
import math

import jax
import jax.numpy as jnp
from jax.experimental import pallas as pl
from jax.experimental.pallas import tpu as pltpu

# ----------------------------- config (small) --------------------------------
BATCH = 2
CHANNELS = 3
IMAGE_SIZE = 16
IMAGE_PATCH = 8
FRAMES = 4
FRAME_PATCH = 2

DIM = 64            # surrogate mapping_vit(backbone=None)
DEPTH = 2
HEADS = 2
DIM_HEAD = 32
MLP_DIM = 128
NUM_CLASSES = 5

SCALE_FACTOR = 8
FREQ_NUMS = 0.25
PROMPT_DIM = DIM // SCALE_FACTOR                                          # 8
NUM_PATCHES = (IMAGE_SIZE // IMAGE_PATCH) ** 2 * (FRAMES // FRAME_PATCH)  # 8
SEQ = NUM_PATCHES + 1                                                     # 9 tokens
INNER = HEADS * DIM_HEAD                                                  # 64
PATCH_DIM = CHANNELS * FRAME_PATCH * IMAGE_PATCH * IMAGE_PATCH            # 384

NP = BATCH * NUM_PATCHES                                                  # 16 patch rows
ROWS = 24                                                                 # 18 tokens -> pad to 24
OUT_ROWS = 8                                                              # 2 -> pad to 8
OUT_PAD = 128                                                             # lane-dense head
NEG_MASK = -1e30

# constants-slab row offsets (must match pack_params)
CST_LW = 0          # (8, 16)   lightweight_mlp weights, both depths along lanes
CST_SH = 8          # (16, 128) block-diag shared_mlp
CST_EXPAND = 24     # (24, 16)  patch-row -> token-row scatter
CST_TOKBASE = 48    # (24, 64)  pos embedding + cls token
CST_BIAS = 72       # (24, 24)  block-diag batch attention mask (+pad mask)
CST_SEL = 96        # (8, 24)   cls-token pooling matrix
CST_HEADW = 104     # (64, 128) mlp_head weight (lane-padded)
CST_ROWS = 168

# vector-slab rows (must match pack_params)
VEC_CONV_B, VEC_FEAT_B, VEC_LW_B, VEC_SH_B = 0, 1, 2, 3
VEC_FIN_G, VEC_FIN_B, VEC_HEAD_B = 4, 5, 6
VEC_LAYER0 = 8      # per layer i: base = 8 + 8*i ; +0 ln1_g, +1 ln1_b, +2 out_b,
VEC_ROWS = 24       #              +3 ln2_g, +4 ln2_b, +5 ff1_b, +6 ff2_b


# --------------------------- in-kernel math helpers ---------------------------
def _erf_approx(x):
    # TODO(synk): exact erf (nn.GELU) replaced by Abramowitz & Stegun 7.1.26
    # (<=1.5e-7 abs error); lax.erf lowering inside Mosaic is not guaranteed.
    a1, a2, a3, a4, a5 = 0.254829592, -0.284496736, 1.421413741, -1.453152027, 1.061405429
    pc = 0.3275911
    ax = jnp.abs(x)
    t = 1.0 / (1.0 + pc * ax)
    poly = ((((a5 * t + a4) * t + a3) * t + a2) * t + a1) * t
    y = 1.0 - poly * jnp.exp(-ax * ax)
    return jnp.where(x >= 0, y, -y)


def _gelu(x):
    return 0.5 * x * (1.0 + _erf_approx(x * (1.0 / math.sqrt(2.0))))


def _layernorm(x, g, b, eps=1e-5):
    mu = jnp.mean(x, axis=-1, keepdims=True)
    xc = x - mu
    var = jnp.mean(xc * xc, axis=-1, keepdims=True)
    return xc * jax.lax.rsqrt(var + eps) * g + b


# ------------------------------ fused Pallas kernel ----------------------------
def _evp_fused_kernel(xin_ref, pe_w_ref, cst_ref, vec_ref,
                      qkv_w_ref, ff1_w_ref, w2_ref, o_ref):
    """Whole EVP forward (post FFT / patch extraction), fully VMEM-resident."""

    def dot(a, b):
        return jnp.dot(a, b, preferred_element_type=jnp.float32)

    vec = vec_ref[...]                                       # (24, 128) bias/LN slab
    conv_b = vec[VEC_CONV_B:VEC_CONV_B + 1, 0:DIM]
    feat_b = vec[VEC_FEAT_B:VEC_FEAT_B + 1, 0:PROMPT_DIM]
    lw_b = vec[VEC_LW_B:VEC_LW_B + 1, 0:DEPTH * PROMPT_DIM]
    sh_b = vec[VEC_SH_B:VEC_SH_B + 1, :]
    fin_g = vec[VEC_FIN_G:VEC_FIN_G + 1, 0:DIM]
    fin_b = vec[VEC_FIN_B:VEC_FIN_B + 1, 0:DIM]
    head_b = vec[VEC_HEAD_B:VEC_HEAD_B + 1, :]

    lw_cat = cst_ref[CST_LW:CST_LW + PROMPT_DIM, 0:DEPTH * PROMPT_DIM]        # (8, 16)
    sh_blk = cst_ref[CST_SH:CST_SH + DEPTH * PROMPT_DIM, :]                   # (16, 128)
    expand = cst_ref[CST_EXPAND:CST_EXPAND + ROWS, 0:NP]                      # (24, 16)
    tok_base = cst_ref[CST_TOKBASE:CST_TOKBASE + ROWS, 0:DIM]                 # (24, 64)
    attn_bias = cst_ref[CST_BIAS:CST_BIAS + ROWS, 0:ROWS]                     # (24, 24)
    sel = cst_ref[CST_SEL:CST_SEL + OUT_ROWS, 0:ROWS]                         # (8, 24)
    head_w = cst_ref[CST_HEADW:CST_HEADW + DIM, :]                            # (64, 128)

    # --- both Conv3d(kernel==stride) patch embeddings + embedding_generator ----
    # pe_w columns: [conv_proj | conv_proj @ embedding_generator | prompt_conv]
    y = dot(xin_ref[...], pe_w_ref[...])                     # (32, 80)
    x_seq = y[0:NP, 0:DIM] + conv_b                          # (16, 64) token embeddings
    feat = (y[0:NP, DIM:DIM + PROMPT_DIM]                    # embedding_generator path
            + y[NP:2 * NP, DIM + PROMPT_DIM:DIM + 2 * PROMPT_DIM]   # handcrafted path
            + feat_b)                                        # (16, 8)

    # --- prompt generator: both depths lane-packed, one shared_mlp matmul ------
    g = _gelu(dot(feat, lw_cat) + lw_b)                      # (16, 16)
    prompts = dot(g, sh_blk) + sh_b                          # (16, 128) [depth0|depth1]

    # --- token assembly + one-shot prompt injection for both layers ------------
    x = tok_base + dot(expand, x_seq)                        # (24, 64)
    inj = dot(expand, prompts)                               # (24, 128)

    for i in range(DEPTH):
        base = VEC_LAYER0 + 8 * i
        ln1_g = vec[base + 0:base + 1, 0:DIM]
        ln1_b = vec[base + 1:base + 2, 0:DIM]
        out_b = vec[base + 2:base + 3, 0:DIM]
        ln2_g = vec[base + 3:base + 4, 0:DIM]
        ln2_b = vec[base + 4:base + 5, 0:DIM]
        ff1_b = vec[base + 5:base + 6, 0:MLP_DIM]
        ff2_b = vec[base + 6:base + 7, 0:DIM]

        # prompt injection on patch tokens (cls + pad rows receive zero)
        x = x + inj[:, i * DIM:(i + 1) * DIM]

        # ------------------------- attention (pre-norm) ------------------------
        xn = _layernorm(x, ln1_g, ln1_b)
        qkv = dot(xn, qkv_w_ref[i])                          # (24, 192); scale folded in Q
        head_outs = []
        for h in range(HEADS):
            q = qkv[:, h * DIM_HEAD:(h + 1) * DIM_HEAD]
            k = qkv[:, INNER + h * DIM_HEAD:INNER + (h + 1) * DIM_HEAD]
            v = qkv[:, 2 * INNER + h * DIM_HEAD:2 * INNER + (h + 1) * DIM_HEAD]
            s = jax.lax.dot_general(q, k, (((1,), (1,)), ((), ())),
                                    preferred_element_type=jnp.float32) + attn_bias
            m = jnp.max(s, axis=-1, keepdims=True)
            p = jnp.exp(s - m)
            p = p * pl.reciprocal(jnp.sum(p, axis=-1, keepdims=True), approx=True)
            head_outs.append(dot(p, v))                      # (24, 32)
        out_cat = jnp.concatenate(head_outs, axis=-1)        # (24, 64)
        w2 = w2_ref[i]                                       # (192, 64): [out_proj ; ff2]
        x = x + dot(out_cat, w2[0:INNER, :]) + out_b

        # ------------------------ feed-forward (pre-norm) ----------------------
        xn = _layernorm(x, ln2_g, ln2_b)
        hdn = _gelu(dot(xn, ff1_w_ref[i]) + ff1_b)           # (24, 128)
        x = x + dot(hdn, w2[INNER:INNER + MLP_DIM, :]) + ff2_b

    # --- final LayerNorm, cls pooling, lane-padded mlp_head ---------------------
    xf = _layernorm(x, fin_g, fin_b)
    cls_rows = dot(sel, xf)                                  # (8, 64) (rows 2..7 dead)
    o_ref[...] = dot(cls_rows, head_w) + head_b              # (8, 128) dense store


# ------------------------------- plain-JAX glue --------------------------------
def fft_filter(x, rate):
    """PromptGenerator.fft — faithful to the original code (window sized from the
    last two dims, but the mask indexes dims 2/3 of the 5-D tensor)."""
    # TODO(synk): FFT has no Pallas TPU primitive; kept in plain JAX/XLA.
    w, h = x.shape[-2], x.shape[-1]
    line = int((w * h * rate) ** 0.5 // 2)
    d2, d3 = x.shape[2], x.shape[3]
    i2 = jnp.arange(d2)
    i3 = jnp.arange(d3)
    m2 = (i2 >= w // 2 - line) & (i2 < w // 2 + line)
    m3 = (i3 >= h // 2 - line) & (i3 < h // 2 + line)
    keep = jnp.logical_not(m2[:, None] & m3[None, :]).astype(x.dtype)      # == (1 - mask)
    f = jnp.fft.fftshift(jnp.fft.fft2(x, norm="forward"))
    f = f * keep[None, None, :, :, None]
    inv = jnp.real(jnp.fft.ifft2(jnp.fft.ifftshift(f), norm="forward"))
    return jnp.abs(inv)


def _extract_patches(x, pd, ph, pw):
    """(N, C, D, H, W) -> (N*P, C*pd*ph*pw) with (d', h', w') patch ordering,
    matching the PyTorch conv output flattened as flatten(2).transpose(1, 2)."""
    N, C, D, H, W = x.shape
    xp = x.reshape(N, C, D // pd, pd, H // ph, ph, W // pw, pw)
    xp = xp.transpose(0, 2, 4, 6, 1, 3, 5, 7)   # N, D', H', W', C, kd, kh, kw
    P = (D // pd) * (H // ph) * (W // pw)
    return xp.reshape(N * P, C * pd * ph * pw)


# -------------------------------- parameters -----------------------------------
def init_params(key):
    keys = list(jax.random.split(key, 64))
    it = iter(keys)

    def nk():
        return next(it)

    def lin(in_d, out_d, std=0.02, bias=True):
        return {
            "w": std * jax.random.normal(nk(), (in_d, out_d), jnp.float32),
            "b": jnp.zeros((out_d,), jnp.float32) if bias else None,
        }

    p = {}
    p["conv_proj_w"] = 0.02 * jax.random.normal(
        nk(), (DIM, CHANNELS, FRAME_PATCH, IMAGE_PATCH, IMAGE_PATCH), jnp.float32)
    p["conv_proj_b"] = jnp.zeros((DIM,), jnp.float32)
    p["cls_token"] = jax.random.normal(nk(), (1, 1, DIM), jnp.float32)
    p["pos_embedding"] = jax.random.normal(nk(), (1, NUM_PATCHES + 1, DIM), jnp.float32)

    p["pg_conv_w"] = 0.02 * jax.random.normal(
        nk(), (PROMPT_DIM, CHANNELS, FRAME_PATCH, IMAGE_PATCH, IMAGE_PATCH), jnp.float32)
    p["pg_conv_b"] = jnp.zeros((PROMPT_DIM,), jnp.float32)
    p["embedding_generator"] = lin(DIM, PROMPT_DIM)
    p["shared_mlp"] = lin(PROMPT_DIM, DIM)
    p["lightweight_mlp"] = [lin(PROMPT_DIM, PROMPT_DIM) for _ in range(DEPTH)]

    layers = []
    for _ in range(DEPTH):
        layers.append({
            "attn_ln_g": jnp.ones((DIM,), jnp.float32),
            "attn_ln_b": jnp.zeros((DIM,), jnp.float32),
            "attn_qkv": lin(DIM, 3 * INNER, bias=False),
            "attn_out": lin(INNER, DIM),
            "ff_ln_g": jnp.ones((DIM,), jnp.float32),
            "ff_ln_b": jnp.zeros((DIM,), jnp.float32),
            "ff1": lin(DIM, MLP_DIM),
            "ff2": lin(MLP_DIM, DIM),
        })
    p["layers"] = layers
    p["final_ln_g"] = jnp.ones((DIM,), jnp.float32)
    p["final_ln_b"] = jnp.zeros((DIM,), jnp.float32)
    p["mlp_head"] = lin(DIM, NUM_CLASSES)
    return p


def pack_params(params):
    """One-time packing (OUTSIDE the jitted forward) into lane/sublane-aligned slabs."""
    f32 = jnp.float32
    N, P, S = BATCH, NUM_PATCHES, SEQ

    conv_w = params["conv_proj_w"].reshape(DIM, -1).T.astype(f32)          # (384, 64)
    conv_b = params["conv_proj_b"].reshape(1, DIM).astype(f32)
    pg_w = params["pg_conv_w"].reshape(PROMPT_DIM, -1).T.astype(f32)       # (384, 8)
    pg_b = params["pg_conv_b"].reshape(1, PROMPT_DIM).astype(f32)
    eg_w = params["embedding_generator"]["w"].astype(f32)                  # (64, 8)
    eg_b = params["embedding_generator"]["b"].reshape(1, PROMPT_DIM).astype(f32)

    # fused patch-embed weight + fused feature bias
    pe_w = jnp.concatenate([conv_w, conv_w @ eg_w, pg_w], axis=1)          # (384, 80)
    feat_b = conv_b @ eg_w + eg_b + pg_b                                   # (1, 8)

    # lane-packed prompt generator
    lw_cat = jnp.concatenate(
        [params["lightweight_mlp"][i]["w"].astype(f32) for i in range(DEPTH)], axis=1)
    lw_b = jnp.concatenate(
        [params["lightweight_mlp"][i]["b"].reshape(1, PROMPT_DIM).astype(f32)
         for i in range(DEPTH)], axis=1)                                   # (1, 16)
    sh_w = params["shared_mlp"]["w"].astype(f32)                           # (8, 64)
    sh_b = params["shared_mlp"]["b"].reshape(1, DIM).astype(f32)
    sh_blk = jnp.zeros((DEPTH * PROMPT_DIM, DEPTH * DIM), f32)
    for i in range(DEPTH):
        sh_blk = sh_blk.at[i * PROMPT_DIM:(i + 1) * PROMPT_DIM,
                           i * DIM:(i + 1) * DIM].set(sh_w)
    sh_b2 = jnp.tile(sh_b, (1, DEPTH))                                     # (1, 128)

    # constant scatter / pooling matrices (token rows padded to ROWS=24)
    patch_ids = jnp.arange(N * P)
    tok_rows = (patch_ids // P) * S + 1 + (patch_ids % P)
    expand = jnp.zeros((ROWS, N * P), f32).at[tok_rows, patch_ids].set(1.0)

    pos = params["pos_embedding"][0, :S, :].astype(f32)
    cls_row = params["cls_token"][0, 0].astype(f32)
    tok_base = jnp.zeros((ROWS, DIM), f32).at[:N * S].set(jnp.tile(pos, (N, 1)))
    tok_base = tok_base.at[jnp.arange(N) * S].add(jnp.broadcast_to(cls_row, (N, DIM)))

    valid = jnp.arange(ROWS) < N * S
    tok_batch = jnp.where(valid, jnp.arange(ROWS) // S, -1)
    attn_bias = jnp.where(
        (tok_batch[:, None] == tok_batch[None, :]) & valid[:, None] & valid[None, :],
        0.0, NEG_MASK).astype(f32)                                         # (24, 24)

    sel = jnp.zeros((OUT_ROWS, ROWS), f32).at[jnp.arange(N), jnp.arange(N) * S].set(1.0)

    head_w = jnp.zeros((DIM, OUT_PAD), f32).at[:, :NUM_CLASSES].set(
        params["mlp_head"]["w"].astype(f32))
    head_b = jnp.zeros((1, OUT_PAD), f32).at[:, :NUM_CLASSES].set(
        params["mlp_head"]["b"].reshape(1, NUM_CLASSES).astype(f32))

    def pad128(a):
        r, c = a.shape
        return jnp.zeros((r, 128), f32).at[:, :c].set(a)

    cst = jnp.concatenate([
        pad128(lw_cat),       # CST_LW
        pad128(sh_blk),       # CST_SH
        pad128(expand),       # CST_EXPAND
        pad128(tok_base),     # CST_TOKBASE
        pad128(attn_bias),    # CST_BIAS
        pad128(sel),          # CST_SEL
        pad128(head_w),       # CST_HEADW
    ], axis=0)
    assert cst.shape == (CST_ROWS, 128)

    vec = jnp.zeros((VEC_ROWS, 128), f32)
    vec = vec.at[VEC_CONV_B, :DIM].set(conv_b[0])
    vec = vec.at[VEC_FEAT_B, :PROMPT_DIM].set(feat_b[0])
    vec = vec.at[VEC_LW_B, :DEPTH * PROMPT_DIM].set(lw_b[0])
    vec = vec.at[VEC_SH_B, :].set(sh_b2[0])
    vec = vec.at[VEC_FIN_G, :DIM].set(params["final_ln_g"].astype(f32))
    vec = vec.at[VEC_FIN_B, :DIM].set(params["final_ln_b"].astype(f32))
    vec = vec.at[VEC_HEAD_B, :].set(head_b[0])

    scale = DIM_HEAD ** -0.5
    qkv_list, ff1_list, w2_list = [], [], []
    for i, l in enumerate(params["layers"]):
        base = VEC_LAYER0 + 8 * i
        vec = vec.at[base + 0, :DIM].set(l["attn_ln_g"].astype(f32))
        vec = vec.at[base + 1, :DIM].set(l["attn_ln_b"].astype(f32))
        vec = vec.at[base + 2, :DIM].set(l["attn_out"]["b"].astype(f32))
        vec = vec.at[base + 3, :DIM].set(l["ff_ln_g"].astype(f32))
        vec = vec.at[base + 4, :DIM].set(l["ff_ln_b"].astype(f32))
        vec = vec.at[base + 5, :MLP_DIM].set(l["ff1"]["b"].astype(f32))
        vec = vec.at[base + 6, :DIM].set(l["ff2"]["b"].astype(f32))

        qkv = l["attn_qkv"]["w"].astype(f32)                               # (64, 192)
        qkv = qkv.at[:, :INNER].multiply(scale)        # fold attention scale into Q
        qkv_list.append(qkv)
        ff1_list.append(l["ff1"]["w"].astype(f32))                         # (64, 128)
        w2_list.append(jnp.concatenate(
            [l["attn_out"]["w"].astype(f32), l["ff2"]["w"].astype(f32)], axis=0))

    return {
        "pe_w": pe_w,                               # (384, 80)
        "cst": cst,                                 # (168, 128)
        "vec": vec,                                 # (24, 128)
        "qkv_w": jnp.stack(qkv_list),               # (2, 64, 192)
        "ff1_w": jnp.stack(ff1_list),               # (2, 64, 128)
        "w2": jnp.stack(w2_list),                   # (2, 192, 64)
    }


# -------------------------------- forward pass ----------------------------------
def forward(packed, img):
    # layout: img (N, C, D, H, W) float32 (NCDHW, as PyTorch Conv3d expects)
    patches = _extract_patches(img, FRAME_PATCH, IMAGE_PATCH, IMAGE_PATCH
                               ).astype(jnp.float32)
    x_freq = fft_filter(img, FREQ_NUMS)
    fpatches = _extract_patches(x_freq, FRAME_PATCH, IMAGE_PATCH, IMAGE_PATCH
                                ).astype(jnp.float32)
    xin = jnp.concatenate([patches, fpatches], axis=0)                     # (32, 384)

    out_pad = pl.pallas_call(
        _evp_fused_kernel,
        out_shape=jax.ShapeDtypeStruct((OUT_ROWS, OUT_PAD), jnp.float32),
        compiler_params=pltpu.CompilerParams(vmem_limit_bytes=32 * 1024 * 1024),
    )(xin, packed["pe_w"], packed["cst"], packed["vec"],
      packed["qkv_w"], packed["ff1_w"], packed["w2"])

    return out_pad[:BATCH, :NUM_CLASSES]


# ------------------------------------ main ---------------------------------------
if __name__ == "__main__":
    key = jax.random.PRNGKey(0)
    pkey, xkey = jax.random.split(key)
    params = init_params(pkey)
    packed = pack_params(params)          # once, outside the jitted hot path
    img = jax.random.normal(
        xkey, (BATCH, CHANNELS, FRAMES, IMAGE_SIZE, IMAGE_SIZE), jnp.float32)

    out = jax.jit(forward)(packed, img)
    out = jax.block_until_ready(out)
    assert out.shape == (BATCH, NUM_CLASSES)
    assert bool(jnp.all(jnp.isfinite(out)))
    print("KERNEL_OK")
</pallas_src>

<mosaic_0001>
module attributes {stable_mosaic.version = 11 : i64} {
  func.func @_evp_fused_kernel(%arg0: memref<32x384xf32, #tpu.memory_space<vmem>>, %arg1: memref<384x80xf32, #tpu.memory_space<vmem>>, %arg2: memref<168x128xf32, #tpu.memory_space<vmem>>, %arg3: memref<24x128xf32, #tpu.memory_space<vmem>>, %arg4: memref<2x64x192xf32, #tpu.memory_space<vmem>>, %arg5: memref<2x64x128xf32, #tpu.memory_space<vmem>>, %arg6: memref<2x192x64xf32, #tpu.memory_space<vmem>>, %arg7: memref<8x128xf32, #tpu.memory_space<vmem>>) attributes {dimension_semantics = [], scalar_prefetch = 0 : i64, scratch_operands = 0 : i64, tpu.core_type = #tpu.core_type<tc>} {
    %c0 = arith.constant 0 : index
    %c0_0 = arith.constant 0 : index
    %0 = vector.load %arg3[%c0, %c0_0] : memref<24x128xf32, #tpu.memory_space<vmem>>, vector<24x128xf32>
    %1 = vector.extract_strided_slice %0 {offsets = [0, 0], sizes = [1, 64], strides = [1, 1]} : vector<24x128xf32> to vector<1x64xf32>
    %2 = vector.extract_strided_slice %0 {offsets = [1, 0], sizes = [1, 8], strides = [1, 1]} : vector<24x128xf32> to vector<1x8xf32>
    %3 = vector.extract_strided_slice %0 {offsets = [2, 0], sizes = [1, 16], strides = [1, 1]} : vector<24x128xf32> to vector<1x16xf32>
    %4 = vector.extract_strided_slice %0 {offsets = [3, 0], sizes = [1, 128], strides = [1, 1]} : vector<24x128xf32> to vector<1x128xf32>
    %5 = vector.extract_strided_slice %0 {offsets = [4, 0], sizes = [1, 64], strides = [1, 1]} : vector<24x128xf32> to vector<1x64xf32>
    %6 = vector.extract_strided_slice %0 {offsets = [5, 0], sizes = [1, 64], strides = [1, 1]} : vector<24x128xf32> to vector<1x64xf32>
    %7 = vector.extract_strided_slice %0 {offsets = [6, 0], sizes = [1, 128], strides = [1, 1]} : vector<24x128xf32> to vector<1x128xf32>
    %c0_1 = arith.constant 0 : index
    %c0_2 = arith.constant 0 : index
    %8 = vector.load %arg2[%c0_1, %c0_2] : memref<168x128xf32, #tpu.memory_space<vmem>>, vector<8x16xf32>
    %c8 = arith.constant 8 : index
    %c0_3 = arith.constant 0 : index
    %9 = vector.load %arg2[%c8, %c0_3] : memref<168x128xf32, #tpu.memory_space<vmem>>, vector<16x128xf32>
    %c24 = arith.constant 24 : index
    %c0_4 = arith.constant 0 : index
    %10 = vector.load %arg2[%c24, %c0_4] : memref<168x128xf32, #tpu.memory_space<vmem>>, vector<24x16xf32>
    %c48 = arith.constant 48 : index
    %c0_5 = arith.constant 0 : index
    %11 = vector.load %arg2[%c48, %c0_5] : memref<168x128xf32, #tpu.memory_space<vmem>>, vector<24x64xf32>
    %c72 = arith.constant 72 : index
    %c0_6 = arith.constant 0 : index
    %12 = vector.load %arg2[%c72, %c0_6] : memref<168x128xf32, #tpu.memory_space<vmem>>, vector<24x24xf32>
    %c96 = arith.constant 96 : index
    %c0_7 = arith.constant 0 : index
    %13 = vector.load %arg2[%c96, %c0_7] : memref<168x128xf32, #tpu.memory_space<vmem>>, vector<8x24xf32>
    %c104 = arith.constant 104 : index
    %c0_8 = arith.constant 0 : index
    %14 = vector.load %arg2[%c104, %c0_8] : memref<168x128xf32, #tpu.memory_space<vmem>>, vector<64x128xf32>
    %c0_9 = arith.constant 0 : index
    %c0_10 = arith.constant 0 : index
    %15 = vector.load %arg0[%c0_9, %c0_10] : memref<32x384xf32, #tpu.memory_space<vmem>>, vector<32x384xf32>
    %c0_11 = arith.constant 0 : index
    %c0_12 = arith.constant 0 : index
    %16 = vector.load %arg1[%c0_11, %c0_12] : memref<384x80xf32, #tpu.memory_space<vmem>>, vector<384x80xf32>
    %cst = arith.constant dense<0.000000e+00> : vector<32x80xf32>
    %17 = tpu.matmul %15, %16, %cst {dimension_numbers = #tpu.dot_dimension_numbers<[1], [0], [0], [1], [0, 0, 1, 1], [], []>} : vector<32x384xf32>, vector<384x80xf32>, vector<32x80xf32> -> vector<32x80xf32>
    %18 = vector.extract_strided_slice %17 {offsets = [0, 0], sizes = [16, 64], strides = [1, 1]} : vector<32x80xf32> to vector<16x64xf32>
    %19 = vector.broadcast %1 : vector<1x64xf32> to vector<16x64xf32>
    %20 = arith.addf %18, %19 : vector<16x64xf32>
    %21 = vector.extract_strided_slice %17 {offsets = [0, 64], sizes = [16, 8], strides = [1, 1]} : vector<32x80xf32> to vector<16x8xf32>
    %22 = vector.extract_strided_slice %17 {offsets = [16, 72], sizes = [16, 8], strides = [1, 1]} : vector<32x80xf32> to vector<16x8xf32>
    %23 = arith.addf %21, %22 : vector<16x8xf32>
    %24 = vector.broadcast %2 : vector<1x8xf32> to vector<16x8xf32>
    %25 = arith.addf %23, %24 : vector<16x8xf32>
    %cst_13 = arith.constant dense<0.000000e+00> : vector<16x16xf32>
    %26 = tpu.matmul %25, %8, %cst_13 {dimension_numbers = #tpu.dot_dimension_numbers<[1], [0], [0], [1], [0, 0, 1, 1], [], []>} : vector<16x8xf32>, vector<8x16xf32>, vector<16x16xf32> -> vector<16x16xf32>
    %27 = vector.broadcast %3 : vector<1x16xf32> to vector<16x16xf32>
    %28 = arith.addf %26, %27 : vector<16x16xf32>
    %cst_14 = arith.constant 5.000000e-01 : f32
    %29 = vector.broadcast %cst_14 : f32 to vector<16x16xf32>
    %30 = arith.mulf %29, %28 : vector<16x16xf32>
    %cst_15 = arith.constant 0.707106769 : f32
    %31 = vector.broadcast %cst_15 : f32 to vector<16x16xf32>
    %32 = arith.mulf %28, %31 : vector<16x16xf32>
    %33 = math.absf %32 : vector<16x16xf32>
    %cst_16 = arith.constant 0.327591091 : f32
    %34 = vector.broadcast %cst_16 : f32 to vector<16x16xf32>
    %35 = arith.mulf %34, %33 : vector<16x16xf32>
    %cst_17 = arith.constant 1.000000e+00 : f32
    %36 = vector.broadcast %cst_17 : f32 to vector<16x16xf32>
    %37 = arith.addf %36, %35 : vector<16x16xf32>
    %cst_18 = arith.constant 1.000000e+00 : f32
    %38 = vector.broadcast %cst_18 : f32 to vector<16x16xf32>
    %39 = arith.divf %38, %37 : vector<16x16xf32>
    %cst_19 = arith.constant 1.06140542 : f32
    %40 = vector.broadcast %cst_19 : f32 to vector<16x16xf32>
    %41 = arith.mulf %40, %39 : vector<16x16xf32>
    %cst_20 = arith.constant -1.45315206 : f32
    %42 = vector.broadcast %cst_20 : f32 to vector<16x16xf32>
    %43 = arith.addf %41, %42 : vector<16x16xf32>
    %44 = arith.mulf %43, %39 : vector<16x16xf32>
    %cst_21 = arith.constant 1.42141378 : f32
    %45 = vector.broadcast %cst_21 : f32 to vector<16x16xf32>
    %46 = arith.addf %44, %45 : vector<16x16xf32>
    %47 = arith.mulf %46, %39 : vector<16x16xf32>
    %cst_22 = arith.constant -0.284496725 : f32
    %48 = vector.broadcast %cst_22 : f32 to vector<16x16xf32>
    %49 = arith.addf %47, %48 : vector<16x16xf32>
    %50 = arith.mulf %49, %39 : vector<16x16xf32>
    %cst_23 = arith.constant 0.254829586 : f32
    %51 = vector.broadcast %cst_23 : f32 to vector<16x16xf32>
    %52 = arith.addf %50, %51 : vector<16x16xf32>
    %53 = arith.mulf %52, %39 : vector<16x16xf32>
    %cst_24 = arith.constant 0.000000e+00 : f32
    %54 = vector.broadcast %cst_24 : f32 to vector<16x16xf32>
    %55 = arith.subf %54, %33 : vector<16x16xf32>
    %56 = arith.mulf %55, %33 : vector<16x16xf32>
    %57 = math.exp %56 : vector<16x16xf32>
    %58 = arith.mulf %53, %57 : vector<16x16xf32>
    %cst_25 = arith.constant 1.000000e+00 : f32
    %59 = vector.broadcast %cst_25 : f32 to vector<16x16xf32>
    %60 = arith.subf %59, %58 : vector<16x16xf32>
    %cst_26 = arith.constant 0.000000e+00 : f32
    %61 = vector.broadcast %cst_26 : f32 to vector<16x16xf32>
    %62 = arith.cmpf oge, %32, %61 : vector<16x16xf32>
    %cst_27 = arith.constant 0.000000e+00 : f32
    %63 = vector.broadcast %cst_27 : f32 to vector<16x16xf32>
    %64 = arith.subf %63, %60 : vector<16x16xf32>
    %65 = arith.select %62, %60, %64 : vector<16x16xi1>, vector<16x16xf32>
    %cst_28 = arith.constant 1.000000e+00 : f32
    %66 = vector.broadcast %cst_28 : f32 to vector<16x16xf32>
    %67 = arith.addf %66, %65 : vector<16x16xf32>
    %68 = arith.mulf %30, %67 : vector<16x16xf32>
    %cst_29 = arith.constant dense<0.000000e+00> : vector<16x128xf32>
    %69 = tpu.matmul %68, %9, %cst_29 {dimension_numbers = #tpu.dot_dimension_numbers<[1], [0], [0], [1], [0, 0, 1, 1], [], []>} : vector<16x16xf32>, vector<16x128xf32>, vector<16x128xf32> -> vector<16x128xf32>
    %70 = vector.broadcast %4 : vector<1x128xf32> to vector<16x128xf32>
    %71 = arith.addf %69, %70 : vector<16x128xf32>
    %cst_30 = arith.constant dense<0.000000e+00> : vector<24x64xf32>
    %72 = tpu.matmul %10, %20, %cst_30 {dimension_numbers = #tpu.dot_dimension_numbers<[1], [0], [0], [1], [0, 0, 1, 1], [], []>} : vector<24x16xf32>, vector<16x64xf32>, vector<24x64xf32> -> vector<24x64xf32>
    %73 = arith.addf %11, %72 : vector<24x64xf32>
    %cst_31 = arith.constant dense<0.000000e+00> : vector<24x128xf32>
    %74 = tpu.matmul %10, %71, %cst_31 {dimension_numbers = #tpu.dot_dimension_numbers<[1], [0], [0], [1], [0, 0, 1, 1], [], []>} : vector<24x16xf32>, vector<16x128xf32>, vector<24x128xf32> -> vector<24x128xf32>
    %75 = vector.extract_strided_slice %0 {offsets = [8, 0], sizes = [1, 64], strides = [1, 1]} : vector<24x128xf32> to vector<1x64xf32>
    %76 = vector.extract_strided_slice %0 {offsets = [9, 0], sizes = [1, 64], strides = [1, 1]} : vector<24x128xf32> to vector<1x64xf32>
    %77 = vector.extract_strided_slice %0 {offsets = [10, 0], sizes = [1, 64], strides = [1, 1]} : vector<24x128xf32> to vector<1x64xf32>
    %78 = vector.extract_strided_slice %0 {offsets = [11, 0], sizes = [1, 64], strides = [1, 1]} : vector<24x128xf32> to vector<1x64xf32>
    %79 = vector.extract_strided_slice %0 {offsets = [12, 0], sizes = [1, 64], strides = [1, 1]} : vector<24x128xf32> to vector<1x64xf32>
    %80 = vector.extract_strided_slice %0 {offsets = [13, 0], sizes = [1, 128], strides = [1, 1]} : vector<24x128xf32> to vector<1x128xf32>
    %81 = vector.extract_strided_slice %0 {offsets = [14, 0], sizes = [1, 64], strides = [1, 1]} : vector<24x128xf32> to vector<1x64xf32>
    %82 = vector.extract_strided_slice %74 {offsets = [0, 0], sizes = [24, 64], strides = [1, 1]} : vector<24x128xf32> to vector<24x64xf32>
    %83 = arith.addf %73, %82 : vector<24x64xf32>
    %cst_32 = arith.constant dense<0.000000e+00> : vector<24xf32>
    %84 = vector.multi_reduction <add>, %83, %cst_32 [1] : vector<24x64xf32> to vector<24xf32>
    %85 = vector.shape_cast %84 : vector<24xf32> to vector<24x1xf32>
    %cst_33 = arith.constant 6.400000e+01 : f32
    %86 = vector.broadcast %cst_33 : f32 to vector<24x1xf32>
    %87 = arith.divf %85, %86 : vector<24x1xf32>
    %88 = vector.broadcast %87 : vector<24x1xf32> to vector<24x64xf32>
    %89 = arith.subf %83, %88 : vector<24x64xf32>
    %90 = arith.mulf %89, %89 : vector<24x64xf32>
    %cst_34 = arith.constant dense<0.000000e+00> : vector<24xf32>
    %91 = vector.multi_reduction <add>, %90, %cst_34 [1] : vector<24x64xf32> to vector<24xf32>
    %92 = vector.shape_cast %91 : vector<24xf32> to vector<24x1xf32>
    %cst_35 = arith.constant 6.400000e+01 : f32
    %93 = vector.broadcast %cst_35 : f32 to vector<24x1xf32>
    %94 = arith.divf %92, %93 : vector<24x1xf32>
    %cst_36 = arith.constant 9.99999974E-6 : f32
    %95 = vector.broadcast %cst_36 : f32 to vector<24x1xf32>
    %96 = arith.addf %94, %95 : vector<24x1xf32>
    %97 = math.rsqrt %96 : vector<24x1xf32>
    %98 = vector.broadcast %97 : vector<24x1xf32> to vector<24x64xf32>
    %99 = arith.mulf %89, %98 : vector<24x64xf32>
    %100 = vector.broadcast %75 : vector<1x64xf32> to vector<24x64xf32>
    %101 = arith.mulf %99, %100 : vector<24x64xf32>
    %102 = vector.broadcast %76 : vector<1x64xf32> to vector<24x64xf32>
    %103 = arith.addf %101, %102 : vector<24x64xf32>
    %c0_37 = arith.constant 0 : index
    %c0_38 = arith.constant 0 : index
    %c0_39 = arith.constant 0 : index
    %104 = vector.load %arg4[%c0_37, %c0_38, %c0_39] : memref<2x64x192xf32, #tpu.memory_space<vmem>>, vector<1x64x192xf32>
    %105 = vector.shape_cast %104 : vector<1x64x192xf32> to vector<64x192xf32>
    %cst_40 = arith.constant dense<0.000000e+00> : vector<24x192xf32>
    %106 = tpu.matmul %103, %105, %cst_40 {dimension_numbers = #tpu.dot_dimension_numbers<[1], [0], [0], [1], [0, 0, 1, 1], [], []>} : vector<24x64xf32>, vector<64x192xf32>, vector<24x192xf32> -> vector<24x192xf32>
    %107 = vector.extract_strided_slice %106 {offsets = [0, 0], sizes = [24, 32], strides = [1, 1]} : vector<24x192xf32> to vector<24x32xf32>
    %108 = vector.extract_strided_slice %106 {offsets = [0, 64], sizes = [24, 32], strides = [1, 1]} : vector<24x192xf32> to vector<24x32xf32>
    %109 = vector.extract_strided_slice %106 {offsets = [0, 128], sizes = [24, 32], strides = [1, 1]} : vector<24x192xf32> to vector<24x32xf32>
    %cst_41 = arith.constant dense<0.000000e+00> : vector<24x24xf32>
    %110 = tpu.matmul %107, %108, %cst_41 {dimension_numbers = #tpu.dot_dimension_numbers<[1], [1], [0], [0], [0, 0, 1, 0], [], []>} : vector<24x32xf32>, vector<24x32xf32>, vector<24x24xf32> -> vector<24x24xf32>
    %111 = arith.addf %110, %12 : vector<24x24xf32>
    %cst_42 = arith.constant dense<0xFF800000> : vector<24xf32>
    %112 = vector.multi_reduction <maximumf>, %111, %cst_42 [1] : vector<24x24xf32> to vector<24xf32>
    %113 = vector.shape_cast %112 : vector<24xf32> to vector<24x1xf32>
    %114 = vector.broadcast %113 : vector<24x1xf32> to vector<24x24xf32>
    %115 = arith.subf %111, %114 : vector<24x24xf32>
    %116 = math.exp %115 : vector<24x24xf32>
    %cst_43 = arith.constant dense<0.000000e+00> : vector<24xf32>
    %117 = vector.multi_reduction <add>, %116, %cst_43 [1] : vector<24x24xf32> to vector<24xf32>
    %118 = vector.shape_cast %117 : vector<24xf32> to vector<24x1xf32>
    %119 = tpu.reciprocal %118 {approx = true} : vector<24x1xf32> -> vector<24x1xf32>
    %120 = vector.broadcast %119 : vector<24x1xf32> to vector<24x24xf32>
    %121 = arith.mulf %116, %120 : vector<24x24xf32>
    %cst_44 = arith.constant dense<0.000000e+00> : vector<24x32xf32>
    %122 = tpu.matmul %121, %109, %cst_44 {dimension_numbers = #tpu.dot_dimension_numbers<[1], [0], [0], [1], [0, 0, 1, 1], [], []>} : vector<24x24xf32>, vector<24x32xf32>, vector<24x32xf32> -> vector<24x32xf32>
    %123 = vector.extract_strided_slice %106 {offsets = [0, 32], sizes = [24, 32], strides = [1, 1]} : vector<24x192xf32> to vector<24x32xf32>
    %124 = vector.extract_strided_slice %106 {offsets = [0, 96], sizes = [24, 32], strides = [1, 1]} : vector<24x192xf32> to vector<24x32xf32>
    %125 = vector.extract_strided_slice %106 {offsets = [0, 160], sizes = [24, 32], strides = [1, 1]} : vector<24x192xf32> to vector<24x32xf32>
    %cst_45 = arith.constant dense<0.000000e+00> : vector<24x24xf32>
    %126 = tpu.matmul %123, %124, %cst_45 {dimension_numbers = #tpu.dot_dimension_numbers<[1], [1], [0], [0], [0, 0, 1, 0], [], []>} : vector<24x32xf32>, vector<24x32xf32>, vector<24x24xf32> -> vector<24x24xf32>
    %127 = arith.addf %126, %12 : vector<24x24xf32>
    %cst_46 = arith.constant dense<0xFF800000> : vector<24xf32>
    %128 = vector.multi_reduction <maximumf>, %127, %cst_46 [1] : vector<24x24xf32> to vector<24xf32>
    %129 = vector.shape_cast %128 : vector<24xf32> to vector<24x1xf32>
    %130 = vector.broadcast %129 : vector<24x1xf32> to vector<24x24xf32>
    %131 = arith.subf %127, %130 : vector<24x24xf32>
    %132 = math.exp %131 : vector<24x24xf32>
    %cst_47 = arith.constant dense<0.000000e+00> : vector<24xf32>
    %133 = vector.multi_reduction <add>, %132, %cst_47 [1] : vector<24x24xf32> to vector<24xf32>
    %134 = vector.shape_cast %133 : vector<24xf32> to vector<24x1xf32>
    %135 = tpu.reciprocal %134 {approx = true} : vector<24x1xf32> -> vector<24x1xf32>
    %136 = vector.broadcast %135 : vector<24x1xf32> to vector<24x24xf32>
    %137 = arith.mulf %132, %136 : vector<24x24xf32>
    %cst_48 = arith.constant dense<0.000000e+00> : vector<24x32xf32>
    %138 = tpu.matmul %137, %125, %cst_48 {dimension_numbers = #tpu.dot_dimension_numbers<[1], [0], [0], [1], [0, 0, 1, 1], [], []>} : vector<24x24xf32>, vector<24x32xf32>, vector<24x32xf32> -> vector<24x32xf32>
    %139 = tpu.concatenate %122, %138 in 1 : vector<24x32xf32>, vector<24x32xf32> -> vector<24x64xf32>
    %c0_49 = arith.constant 0 : index
    %c0_50 = arith.constant 0 : index
    %c0_51 = arith.constant 0 : index
    %140 = vector.load %arg6[%c0_49, %c0_50, %c0_51] : memref<2x192x64xf32, #tpu.memory_space<vmem>>, vector<1x192x64xf32>
    %141 = vector.shape_cast %140 : vector<1x192x64xf32> to vector<192x64xf32>
    %142 = vector.extract_strided_slice %141 {offsets = [0, 0], sizes = [64, 64], strides = [1, 1]} : vector<192x64xf32> to vector<64x64xf32>
    %cst_52 = arith.constant dense<0.000000e+00> : vector<24x64xf32>
    %143 = tpu.matmul %139, %142, %cst_52 {dimension_numbers = #tpu.dot_dimension_numbers<[1], [0], [0], [1], [0, 0, 1, 1], [], []>} : vector<24x64xf32>, vector<64x64xf32>, vector<24x64xf32> -> vector<24x64xf32>
    %144 = arith.addf %83, %143 : vector<24x64xf32>
    %145 = vector.broadcast %77 : vector<1x64xf32> to vector<24x64xf32>
    %146 = arith.addf %144, %145 : vector<24x64xf32>
    %cst_53 = arith.constant dense<0.000000e+00> : vector<24xf32>
    %147 = vector.multi_reduction <add>, %146, %cst_53 [1] : vector<24x64xf32> to vector<24xf32>
    %148 = vector.shape_cast %147 : vector<24xf32> to vector<24x1xf32>
    %cst_54 = arith.constant 6.400000e+01 : f32
    %149 = vector.broadcast %cst_54 : f32 to vector<24x1xf32>
    %150 = arith.divf %148, %149 : vector<24x1xf32>
    %151 = vector.broadcast %150 : vector<24x1xf32> to vector<24x64xf32>
    %152 = arith.subf %146, %151 : vector<24x64xf32>
    %153 = arith.mulf %152, %152 : vector<24x64xf32>
    %cst_55 = arith.constant dense<0.000000e+00> : vector<24xf32>
    %154 = vector.multi_reduction <add>, %153, %cst_55 [1] : vector<24x64xf32> to vector<24xf32>
    %155 = vector.shape_cast %154 : vector<24xf32> to vector<24x1xf32>
    %cst_56 = arith.constant 6.400000e+01 : f32
    %156 = vector.broadcast %cst_56 : f32 to vector<24x1xf32>
    %157 = arith.divf %155, %156 : vector<24x1xf32>
    %cst_57 = arith.constant 9.99999974E-6 : f32
    %158 = vector.broadcast %cst_57 : f32 to vector<24x1xf32>
    %159 = arith.addf %157, %158 : vector<24x1xf32>
    %160 = math.rsqrt %159 : vector<24x1xf32>
    %161 = vector.broadcast %160 : vector<24x1xf32> to vector<24x64xf32>
    %162 = arith.mulf %152, %161 : vector<24x64xf32>
    %163 = vector.broadcast %78 : vector<1x64xf32> to vector<24x64xf32>
    %164 = arith.mulf %162, %163 : vector<24x64xf32>
    %165 = vector.broadcast %79 : vector<1x64xf32> to vector<24x64xf32>
    %166 = arith.addf %164, %165 : vector<24x64xf32>
    %c0_58 = arith.constant 0 : index
    %c0_59 = arith.constant 0 : index
    %c0_60 = arith.constant 0 : index
    %167 = vector.load %arg5[%c0_58, %c0_59, %c0_60] : memref<2x64x128xf32, #tpu.memory_space<vmem>>, vector<1x64x128xf32>
    %168 = vector.shape_cast %167 : vector<1x64x128xf32> to vector<64x128xf32>
    %cst_61 = arith.constant dense<0.000000e+00> : vector<24x128xf32>
    %169 = tpu.matmul %166, %168, %cst_61 {dimension_numbers = #tpu.dot_dimension_numbers<[1], [0], [0], [1], [0, 0, 1, 1], [], []>} : vector<24x64xf32>, vector<64x128xf32>, vector<24x128xf32> -> vector<24x128xf32>
    %170 = vector.broadcast %80 : vector<1x128xf32> to vector<24x128xf32>
    %171 = arith.addf %169, %170 : vector<24x128xf32>
    %cst_62 = arith.constant 5.000000e-01 : f32
    %172 = vector.broadcast %cst_62 : f32 to vector<24x128xf32>
    %173 = arith.mulf %172, %171 : vector<24x128xf32>
    %cst_63 = arith.constant 0.707106769 : f32
    %174 = vector.broadcast %cst_63 : f32 to vector<24x128xf32>
    %175 = arith.mulf %171, %174 : vector<24x128xf32>
    %176 = math.absf %175 : vector<24x128xf32>
    %cst_64 = arith.constant 0.327591091 : f32
    %177 = vector.broadcast %cst_64 : f32 to vector<24x128xf32>
    %178 = arith.mulf %177, %176 : vector<24x128xf32>
    %cst_65 = arith.constant 1.000000e+00 : f32
    %179 = vector.broadcast %cst_65 : f32 to vector<24x128xf32>
    %180 = arith.addf %179, %178 : vector<24x128xf32>
    %cst_66 = arith.constant 1.000000e+00 : f32
    %181 = vector.broadcast %cst_66 : f32 to vector<24x128xf32>
    %182 = arith.divf %181, %180 : vector<24x128xf32>
    %cst_67 = arith.constant 1.06140542 : f32
    %183 = vector.broadcast %cst_67 : f32 to vector<24x128xf32>
    %184 = arith.mulf %183, %182 : vector<24x128xf32>
    %cst_68 = arith.constant -1.45315206 : f32
    %185 = vector.broadcast %cst_68 : f32 to vector<24x128xf32>
    %186 = arith.addf %184, %185 : vector<24x128xf32>
    %187 = arith.mulf %186, %182 : vector<24x128xf32>
    %cst_69 = arith.constant 1.42141378 : f32
    %188 = vector.broadcast %cst_69 : f32 to vector<24x128xf32>
    %189 = arith.addf %187, %188 : vector<24x128xf32>
    %190 = arith.mulf %189, %182 : vector<24x128xf32>
    %cst_70 = arith.constant -0.284496725 : f32
    %191 = vector.broadcast %cst_70 : f32 to vector<24x128xf32>
    %192 = arith.addf %190, %191 : vector<24x128xf32>
    %193 = arith.mulf %192, %182 : vector<24x128xf32>
    %cst_71 = arith.constant 0.254829586 : f32
    %194 = vector.broadcast %cst_71 : f32 to vector<24x128xf32>
    %195 = arith.addf %193, %194 : vector<24x128xf32>
    %196 = arith.mulf %195, %182 : vector<24x128xf32>
    %cst_72 = arith.constant 0.000000e+00 : f32
    %197 = vector.broadcast %cst_72 : f32 to vector<24x128xf32>
    %198 = arith.subf %197, %176 : vector<24x128xf32>
    %199 = arith.mulf %198, %176 : vector<24x128xf32>
    %200 = math.exp %199 : vector<24x128xf32>
    %201 = arith.mulf %196, %200 : vector<24x128xf32>
    %cst_73 = arith.constant 1.000000e+00 : f32
    %202 = vector.broadcast %cst_73 : f32 to vector<24x128xf32>
    %203 = arith.subf %202, %201 : vector<24x128xf32>
    %cst_74 = arith.constant 0.000000e+00 : f32
    %204 = vector.broadcast %cst_74 : f32 to vector<24x128xf32>
    %205 = arith.cmpf oge, %175, %204 : vector<24x128xf32>
    %cst_75 = arith.constant 0.000000e+00 : f32
    %206 = vector.broadcast %cst_75 : f32 to vector<24x128xf32>
    %207 = arith.subf %206, %203 : vector<24x128xf32>
    %208 = arith.select %205, %203, %207 : vector<24x128xi1>, vector<24x128xf32>
    %cst_76 = arith.constant 1.000000e+00 : f32
    %209 = vector.broadcast %cst_76 : f32 to vector<24x128xf32>
    %210 = arith.addf %209, %208 : vector<24x128xf32>
    %211 = arith.mulf %173, %210 : vector<24x128xf32>
    %212 = vector.extract_strided_slice %141 {offsets = [64, 0], sizes = [128, 64], strides = [1, 1]} : vector<192x64xf32> to vector<128x64xf32>
    %cst_77 = arith.constant dense<0.000000e+00> : vector<24x64xf32>
    %213 = tpu.matmul %211, %212, %cst_77 {dimension_numbers = #tpu.dot_dimension_numbers<[1], [0], [0], [1], [0, 0, 1, 1], [], []>} : vector<24x128xf32>, vector<128x64xf32>, vector<24x64xf32> -> vector<24x64xf32>
    %214 = arith.addf %146, %213 : vector<24x64xf32>
    %215 = vector.broadcast %81 : vector<1x64xf32> to vector<24x64xf32>
    %216 = arith.addf %214, %215 : vector<24x64xf32>
    %217 = vector.extract_strided_slice %0 {offsets = [16, 0], sizes = [1, 64], strides = [1, 1]} : vector<24x128xf32> to vector<1x64xf32>
    %218 = vector.extract_strided_slice %0 {offsets = [17, 0], sizes = [1, 64], strides = [1, 1]} : vector<24x128xf32> to vector<1x64xf32>
    %219 = vector.extract_strided_slice %0 {offsets = [18, 0], sizes = [1, 64], strides = [1, 1]} : vector<24x128xf32> to vector<1x64xf32>
    %220 = vector.extract_strided_slice %0 {offsets = [19, 0], sizes = [1, 64], strides = [1, 1]} : vector<24x128xf32> to vector<1x64xf32>
    %221 = vector.extract_strided_slice %0 {offsets = [20, 0], sizes = [1, 64], strides = [1, 1]} : vector<24x128xf32> to vector<1x64xf32>
    %222 = vector.extract_strided_slice %0 {offsets = [21, 0], sizes = [1, 128], strides = [1, 1]} : vector<24x128xf32> to vector<1x128xf32>
    %223 = vector.extract_strided_slice %0 {offsets = [22, 0], sizes = [1, 64], strides = [1, 1]} : vector<24x128xf32> to vector<1x64xf32>
    %224 = vector.extract_strided_slice %74 {offsets = [0, 64], sizes = [24, 64], strides = [1, 1]} : vector<24x128xf32> to vector<24x64xf32>
    %225 = arith.addf %216, %224 : vector<24x64xf32>
    %cst_78 = arith.constant dense<0.000000e+00> : vector<24xf32>
    %226 = vector.multi_reduction <add>, %225, %cst_78 [1] : vector<24x64xf32> to vector<24xf32>
    %227 = vector.shape_cast %226 : vector<24xf32> to vector<24x1xf32>
    %cst_79 = arith.constant 6.400000e+01 : f32
    %228 = vector.broadcast %cst_79 : f32 to vector<24x1xf32>
    %229 = arith.divf %227, %228 : vector<24x1xf32>
    %230 = vector.broadcast %229 : vector<24x1xf32> to vector<24x64xf32>
    %231 = arith.subf %225, %230 : vector<24x64xf32>
    %232 = arith.mulf %231, %231 : vector<24x64xf32>
    %cst_80 = arith.constant dense<0.000000e+00> : vector<24xf32>
    %233 = vector.multi_reduction <add>, %232, %cst_80 [1] : vector<24x64xf32> to vector<24xf32>
    %234 = vector.shape_cast %233 : vector<24xf32> to vector<24x1xf32>
    %cst_81 = arith.constant 6.400000e+01 : f32
    %235 = vector.broadcast %cst_81 : f32 to vector<24x1xf32>
    %236 = arith.divf %234, %235 : vector<24x1xf32>
    %cst_82 = arith.constant 9.99999974E-6 : f32
    %237 = vector.broadcast %cst_82 : f32 to vector<24x1xf32>
    %238 = arith.addf %236, %237 : vector<24x1xf32>
    %239 = math.rsqrt %238 : vector<24x1xf32>
    %240 = vector.broadcast %239 : vector<24x1xf32> to vector<24x64xf32>
    %241 = arith.mulf %231, %240 : vector<24x64xf32>
    %242 = vector.broadcast %217 : vector<1x64xf32> to vector<24x64xf32>
    %243 = arith.mulf %241, %242 : vector<24x64xf32>
    %244 = vector.broadcast %218 : vector<1x64xf32> to vector<24x64xf32>
    %245 = arith.addf %243, %244 : vector<24x64xf32>
    %c1 = arith.constant 1 : index
    %c0_83 = arith.constant 0 : index
    %c0_84 = arith.constant 0 : index
    %246 = vector.load %arg4[%c1, %c0_83, %c0_84] : memref<2x64x192xf32, #tpu.memory_space<vmem>>, vector<1x64x192xf32>
    %247 = vector.shape_cast %246 : vector<1x64x192xf32> to vector<64x192xf32>
    %cst_85 = arith.constant dense<0.000000e+00> : vector<24x192xf32>
    %248 = tpu.matmul %245, %247, %cst_85 {dimension_numbers = #tpu.dot_dimension_numbers<[1], [0], [0], [1], [0, 0, 1, 1], [], []>} : vector<24x64xf32>, vector<64x192xf32>, vector<24x192xf32> -> vector<24x192xf32>
    %249 = vector.extract_strided_slice %248 {offsets = [0, 0], sizes = [24, 32], strides = [1, 1]} : vector<24x192xf32> to vector<24x32xf32>
    %250 = vector.extract_strided_slice %248 {offsets = [0, 64], sizes = [24, 32], strides = [1, 1]} : vector<24x192xf32> to vector<24x32xf32>
    %251 = vector.extract_strided_slice %248 {offsets = [0, 128], sizes = [24, 32], strides = [1, 1]} : vector<24x192xf32> to vector<24x32xf32>
    %cst_86 = arith.constant dense<0.000000e+00> : vector<24x24xf32>
    %252 = tpu.matmul %249, %250, %cst_86 {dimension_numbers = #tpu.dot_dimension_numbers<[1], [1], [0], [0], [0, 0, 1, 0], [], []>} : vector<24x32xf32>, vector<24x32xf32>, vector<24x24xf32> -> vector<24x24xf32>
    %253 = arith.addf %252, %12 : vector<24x24xf32>
    %cst_87 = arith.constant dense<0xFF800000> : vector<24xf32>
    %254 = vector.multi_reduction <maximumf>, %253, %cst_87 [1] : vector<24x24xf32> to vector<24xf32>
    %255 = vector.shape_cast %254 : vector<24xf32> to vector<24x1xf32>
    %256 = vector.broadcast %255 : vector<24x1xf32> to vector<24x24xf32>
    %257 = arith.subf %253, %256 : vector<24x24xf32>
    %258 = math.exp %257 : vector<24x24xf32>
    %cst_88 = arith.constant dense<0.000000e+00> : vector<24xf32>
    %259 = vector.multi_reduction <add>, %258, %cst_88 [1] : vector<24x24xf32> to vector<24xf32>
    %260 = vector.shape_cast %259 : vector<24xf32> to vector<24x1xf32>
    %261 = tpu.reciprocal %260 {approx = true} : vector<24x1xf32> -> vector<24x1xf32>
    %262 = vector.broadcast %261 : vector<24x1xf32> to vector<24x24xf32>
    %263 = arith.mulf %258, %262 : vector<24x24xf32>
    %cst_89 = arith.constant dense<0.000000e+00> : vector<24x32xf32>
    %264 = tpu.matmul %263, %251, %cst_89 {dimension_numbers = #tpu.dot_dimension_numbers<[1], [0], [0], [1], [0, 0, 1, 1], [], []>} : vector<24x24xf32>, vector<24x32xf32>, vector<24x32xf32> -> vector<24x32xf32>
    %265 = vector.extract_strided_slice %248 {offsets = [0, 32], sizes = [24, 32], strides = [1, 1]} : vector<24x192xf32> to vector<24x32xf32>
    %266 = vector.extract_strided_slice %248 {offsets = [0, 96], sizes = [24, 32], strides = [1, 1]} : vector<24x192xf32> to vector<24x32xf32>
    %267 = vector.extract_strided_slice %248 {offsets = [0, 160], sizes = [24, 32], strides = [1, 1]} : vector<24x192xf32> to vector<24x32xf32>
    %cst_90 = arith.constant dense<0.000000e+00> : vector<24x24xf32>
    %268 = tpu.matmul %265, %266, %cst_90 {dimension_numbers = #tpu.dot_dimension_numbers<[1], [1], [0], [0], [0, 0, 1, 0], [], []>} : vector<24x32xf32>, vector<24x32xf32>, vector<24x24xf32> -> vector<24x24xf32>
    %269 = arith.addf %268, %12 : vector<24x24xf32>
    %cst_91 = arith.constant dense<0xFF800000> : vector<24xf32>
    %270 = vector.multi_reduction <maximumf>, %269, %cst_91 [1] : vector<24x24xf32> to vector<24xf32>
    %271 = vector.shape_cast %270 : vector<24xf32> to vector<24x1xf32>
    %272 = vector.broadcast %271 : vector<24x1xf32> to vector<24x24xf32>
    %273 = arith.subf %269, %272 : vector<24x24xf32>
    %274 = math.exp %273 : vector<24x24xf32>
    %cst_92 = arith.constant dense<0.000000e+00> : vector<24xf32>
    %275 = vector.multi_reduction <add>, %274, %cst_92 [1] : vector<24x24xf32> to vector<24xf32>
    %276 = vector.shape_cast %275 : vector<24xf32> to vector<24x1xf32>
    %277 = tpu.reciprocal %276 {approx = true} : vector<24x1xf32> -> vector<24x1xf32>
    %278 = vector.broadcast %277 : vector<24x1xf32> to vector<24x24xf32>
    %279 = arith.mulf %274, %278 : vector<24x24xf32>
    %cst_93 = arith.constant dense<0.000000e+00> : vector<24x32xf32>
    %280 = tpu.matmul %279, %267, %cst_93 {dimension_numbers = #tpu.dot_dimension_numbers<[1], [0], [0], [1], [0, 0, 1, 1], [], []>} : vector<24x24xf32>, vector<24x32xf32>, vector<24x32xf32> -> vector<24x32xf32>
    %281 = tpu.concatenate %264, %280 in 1 : vector<24x32xf32>, vector<24x32xf32> -> vector<24x64xf32>
    %c1_94 = arith.constant 1 : index
    %c0_95 = arith.constant 0 : index
    %c0_96 = arith.constant 0 : index
    %282 = vector.load %arg6[%c1_94, %c0_95, %c0_96] : memref<2x192x64xf32, #tpu.memory_space<vmem>>, vector<1x192x64xf32>
    %283 = vector.shape_cast %282 : vector<1x192x64xf32> to vector<192x64xf32>
    %284 = vector.extract_strided_slice %283 {offsets = [0, 0], sizes = [64, 64], strides = [1, 1]} : vector<192x64xf32> to vector<64x64xf32>
    %cst_97 = arith.constant dense<0.000000e+00> : vector<24x64xf32>
    %285 = tpu.matmul %281, %284, %cst_97 {dimension_numbers = #tpu.dot_dimension_numbers<[1], [0], [0], [1], [0, 0, 1, 1], [], []>} : vector<24x64xf32>, vector<64x64xf32>, vector<24x64xf32> -> vector<24x64xf32>
    %286 = arith.addf %225, %285 : vector<24x64xf32>
    %287 = vector.broadcast %219 : vector<1x64xf32> to vector<24x64xf32>
    %288 = arith.addf %286, %287 : vector<24x64xf32>
    %cst_98 = arith.constant dense<0.000000e+00> : vector<24xf32>
    %289 = vector.multi_reduction <add>, %288, %cst_98 [1] : vector<24x64xf32> to vector<24xf32>
    %290 = vector.shape_cast %289 : vector<24xf32> to vector<24x1xf32>
    %cst_99 = arith.constant 6.400000e+01 : f32
    %291 = vector.broadcast %cst_99 : f32 to vector<24x1xf32>
    %292 = arith.divf %290, %291 : vector<24x1xf32>
    %293 = vector.broadcast %292 : vector<24x1xf32> to vector<24x64xf32>
    %294 = arith.subf %288, %293 : vector<24x64xf32>
    %295 = arith.mulf %294, %294 : vector<24x64xf32>
    %cst_100 = arith.constant dense<0.000000e+00> : vector<24xf32>
    %296 = vector.multi_reduction <add>, %295, %cst_100 [1] : vector<24x64xf32> to vector<24xf32>
    %297 = vector.shape_cast %296 : vector<24xf32> to vector<24x1xf32>
    %cst_101 = arith.constant 6.400000e+01 : f32
    %298 = vector.broadcast %cst_101 : f32 to vector<24x1xf32>
    %299 = arith.divf %297, %298 : vector<24x1xf32>
    %cst_102 = arith.constant 9.99999974E-6 : f32
    %300 = vector.broadcast %cst_102 : f32 to vector<24x1xf32>
    %301 = arith.addf %299, %300 : vector<24x1xf32>
    %302 = math.rsqrt %301 : vector<24x1xf32>
    %303 = vector.broadcast %302 : vector<24x1xf32> to vector<24x64xf32>
    %304 = arith.mulf %294, %303 : vector<24x64xf32>
    %305 = vector.broadcast %220 : vector<1x64xf32> to vector<24x64xf32>
    %306 = arith.mulf %304, %305 : vector<24x64xf32>
    %307 = vector.broadcast %221 : vector<1x64xf32> to vector<24x64xf32>
    %308 = arith.addf %306, %307 : vector<24x64xf32>
    %c1_103 = arith.constant 1 : index
    %c0_104 = arith.constant 0 : index
    %c0_105 = arith.constant 0 : index
    %309 = vector.load %arg5[%c1_103, %c0_104, %c0_105] : memref<2x64x128xf32, #tpu.memory_space<vmem>>, vector<1x64x128xf32>
    %310 = vector.shape_cast %309 : vector<1x64x128xf32> to vector<64x128xf32>
    %cst_106 = arith.constant dense<0.000000e+00> : vector<24x128xf32>
    %311 = tpu.matmul %308, %310, %cst_106 {dimension_numbers = #tpu.dot_dimension_numbers<[1], [0], [0], [1], [0, 0, 1, 1], [], []>} : vector<24x64xf32>, vector<64x128xf32>, vector<24x128xf32> -> vector<24x128xf32>
    %312 = vector.broadcast %222 : vector<1x128xf32> to vector<24x128xf32>
    %313 = arith.addf %311, %312 : vector<24x128xf32>
    %cst_107 = arith.constant 5.000000e-01 : f32
    %314 = vector.broadcast %cst_107 : f32 to vector<24x128xf32>
    %315 = arith.mulf %314, %313 : vector<24x128xf32>
    %cst_108 = arith.constant 0.707106769 : f32
    %316 = vector.broadcast %cst_108 : f32 to vector<24x128xf32>
    %317 = arith.mulf %313, %316 : vector<24x128xf32>
    %318 = math.absf %317 : vector<24x128xf32>
    %cst_109 = arith.constant 0.327591091 : f32
    %319 = vector.broadcast %cst_109 : f32 to vector<24x128xf32>
    %320 = arith.mulf %319, %318 : vector<24x128xf32>
    %cst_110 = arith.constant 1.000000e+00 : f32
    %321 = vector.broadcast %cst_110 : f32 to vector<24x128xf32>
    %322 = arith.addf %321, %320 : vector<24x128xf32>
    %cst_111 = arith.constant 1.000000e+00 : f32
    %323 = vector.broadcast %cst_111 : f32 to vector<24x128xf32>
    %324 = arith.divf %323, %322 : vector<24x128xf32>
    %cst_112 = arith.constant 1.06140542 : f32
    %325 = vector.broadcast %cst_112 : f32 to vector<24x128xf32>
    %326 = arith.mulf %325, %324 : vector<24x128xf32>
    %cst_113 = arith.constant -1.45315206 : f32
    %327 = vector.broadcast %cst_113 : f32 to vector<24x128xf32>
    %328 = arith.addf %326, %327 : vector<24x128xf32>
    %329 = arith.mulf %328, %324 : vector<24x128xf32>
    %cst_114 = arith.constant 1.42141378 : f32
    %330 = vector.broadcast %cst_114 : f32 to vector<24x128xf32>
    %331 = arith.addf %329, %330 : vector<24x128xf32>
    %332 = arith.mulf %331, %324 : vector<24x128xf32>
    %cst_115 = arith.constant -0.284496725 : f32
    %333 = vector.broadcast %cst_115 : f32 to vector<24x128xf32>
    %334 = arith.addf %332, %333 : vector<24x128xf32>
    %335 = arith.mulf %334, %324 : vector<24x128xf32>
    %cst_116 = arith.constant 0.254829586 : f32
    %336 = vector.broadcast %cst_116 : f32 to vector<24x128xf32>
    %337 = arith.addf %335, %336 : vector<24x128xf32>
    %338 = arith.mulf %337, %324 : vector<24x128xf32>
    %cst_117 = arith.constant 0.000000e+00 : f32
    %339 = vector.broadcast %cst_117 : f32 to vector<24x128xf32>
    %340 = arith.subf %339, %318 : vector<24x128xf32>
    %341 = arith.mulf %340, %318 : vector<24x128xf32>
    %342 = math.exp %341 : vector<24x128xf32>
    %343 = arith.mulf %338, %342 : vector<24x128xf32>
    %cst_118 = arith.constant 1.000000e+00 : f32
    %344 = vector.broadcast %cst_118 : f32 to vector<24x128xf32>
    %345 = arith.subf %344, %343 : vector<24x128xf32>
    %cst_119 = arith.constant 0.000000e+00 : f32
    %346 = vector.broadcast %cst_119 : f32 to vector<24x128xf32>
    %347 = arith.cmpf oge, %317, %346 : vector<24x128xf32>
    %cst_120 = arith.constant 0.000000e+00 : f32
    %348 = vector.broadcast %cst_120 : f32 to vector<24x128xf32>
    %349 = arith.subf %348, %345 : vector<24x128xf32>
    %350 = arith.select %347, %345, %349 : vector<24x128xi1>, vector<24x128xf32>
    %cst_121 = arith.constant 1.000000e+00 : f32
    %351 = vector.broadcast %cst_121 : f32 to vector<24x128xf32>
    %352 = arith.addf %351, %350 : vector<24x128xf32>
    %353 = arith.mulf %315, %352 : vector<24x128xf32>
    %354 = vector.extract_strided_slice %283 {offsets = [64, 0], sizes = [128, 64], strides = [1, 1]} : vector<192x64xf32> to vector<128x64xf32>
    %cst_122 = arith.constant dense<0.000000e+00> : vector<24x64xf32>
    %355 = tpu.matmul %353, %354, %cst_122 {dimension_numbers = #tpu.dot_dimension_numbers<[1], [0], [0], [1], [0, 0, 1, 1], [], []>} : vector<24x128xf32>, vector<128x64xf32>, vector<24x64xf32> -> vector<24x64xf32>
    %356 = arith.addf %288, %355 : vector<24x64xf32>
    %357 = vector.broadcast %223 : vector<1x64xf32> to vector<24x64xf32>
    %358 = arith.addf %356, %357 : vector<24x64xf32>
    %cst_123 = arith.constant dense<0.000000e+00> : vector<24xf32>
    %359 = vector.multi_reduction <add>, %358, %cst_123 [1] : vector<24x64xf32> to vector<24xf32>
    %360 = vector.shape_cast %359 : vector<24xf32> to vector<24x1xf32>
    %cst_124 = arith.constant 6.400000e+01 : f32
    %361 = vector.broadcast %cst_124 : f32 to vector<24x1xf32>
    %362 = arith.divf %360, %361 : vector<24x1xf32>
    %363 = vector.broadcast %362 : vector<24x1xf32> to vector<24x64xf32>
    %364 = arith.subf %358, %363 : vector<24x64xf32>
    %365 = arith.mulf %364, %364 : vector<24x64xf32>
    %cst_125 = arith.constant dense<0.000000e+00> : vector<24xf32>
    %366 = vector.multi_reduction <add>, %365, %cst_125 [1] : vector<24x64xf32> to vector<24xf32>
    %367 = vector.shape_cast %366 : vector<24xf32> to vector<24x1xf32>
    %cst_126 = arith.constant 6.400000e+01 : f32
    %368 = vector.broadcast %cst_126 : f32 to vector<24x1xf32>
    %369 = arith.divf %367, %368 : vector<24x1xf32>
    %cst_127 = arith.constant 9.99999974E-6 : f32
    %370 = vector.broadcast %cst_127 : f32 to vector<24x1xf32>
    %371 = arith.addf %369, %370 : vector<24x1xf32>
    %372 = math.rsqrt %371 : vector<24x1xf32>
    %373 = vector.broadcast %372 : vector<24x1xf32> to vector<24x64xf32>
    %374 = arith.mulf %364, %373 : vector<24x64xf32>
    %375 = vector.broadcast %5 : vector<1x64xf32> to vector<24x64xf32>
    %376 = arith.mulf %374, %375 : vector<24x64xf32>
    %377 = vector.broadcast %6 : vector<1x64xf32> to vector<24x64xf32>
    %378 = arith.addf %376, %377 : vector<24x64xf32>
    %cst_128 = arith.constant dense<0.000000e+00> : vector<8x64xf32>
    %379 = tpu.matmul %13, %378, %cst_128 {dimension_numbers = #tpu.dot_dimension_numbers<[1], [0], [0], [1], [0, 0, 1, 1], [], []>} : vector<8x24xf32>, vector<24x64xf32>, vector<8x64xf32> -> vector<8x64xf32>
    %cst_129 = arith.constant dense<0.000000e+00> : vector<8x128xf32>
    %380 = tpu.matmul %379, %14, %cst_129 {dimension_numbers = #tpu.dot_dimension_numbers<[1], [0], [0], [1], [0, 0, 1, 1], [], []>} : vector<8x64xf32>, vector<64x128xf32>, vector<8x128xf32> -> vector<8x128xf32>
    %381 = vector.broadcast %7 : vector<1x128xf32> to vector<8x128xf32>
    %382 = arith.addf %380, %381 : vector<8x128xf32>
    %c0_130 = arith.constant 0 : index
    %c0_131 = arith.constant 0 : index
    %383 = vector.load %arg7[%c0_130, %c0_131] : memref<8x128xf32, #tpu.memory_space<vmem>>, vector<8x128xf32>
    tpu.vector_store %arg7[%c0_130, %c0_131], %382 {strides = array<i32>} : memref<8x128xf32, #tpu.memory_space<vmem>>, vector<8x128xf32>,
    return
  }
}

</mosaic_0001>

<llo_original>
// kernel: forward.1
$region0: #{forward.1}
  #allocation0 [shape = 'u32[]', space=smem, size = 0x4, offset = 0x4, fixed_abs, tag = 'smem constant byte address 0x4 - core index']
  #allocation1 [shape = 'u32[144,128]{1,0:T(1,128)}', space=vmem, size = 0x12000, scoped, tag = 'internal scratch']
  %s0 = inlined_call_operand.vmem [shape: f32[32,384], index: 0, kind: input, shape index: {}]
  %s1 = inlined_call_operand.vmem [shape: f32[384,80], index: 1, kind: input, shape index: {}]
  %s2 = inlined_call_operand.vmem [shape: f32[168,128], index: 2, kind: input, shape index: {}]
  %s3 = inlined_call_operand.vmem [shape: f32[24,128], index: 3, kind: input, shape index: {}]
  %s4 = inlined_call_operand.vmem [shape: f32[2,64,192], index: 4, kind: input, shape index: {}]
  %s5 = inlined_call_operand.vmem [shape: f32[2,64,128], index: 5, kind: input, shape index: {}]
  %s6 = inlined_call_operand.vmem [shape: f32[2,192,64], index: 6, kind: input, shape index: {}]
  %s7 = inlined_call_operand.vmem [shape: f32[8,128], index: 7, kind: output, shape index: {}]
  %s8 = sld [smem:[#allocation0]]
  $region38: #{forward.1} parent=0
    _
  %s10 = ssub.s32 1, %s8
  %s11 = scalar_select 0, %s10, %s8
  // Predicated region
  $region2: #{forward.1} parent=0 // pred_check
    _
  $region3: #{forward.1} parent=0 // pred_check_branch
    %13 = sbr.rel (0) target = $region5
  $region4: #{forward.1} parent=0 // pred_region
    _
  $region5: #{forward.1} parent=0 // pred_fallthru
    _
  // Predicated region
  $region6: #{forward.1} parent=0 // pred_check
    _
  $region7: #{forward.1} parent=0 // pred_check_branch
    %15 = sbr.rel (0) target = $region9
  $region8: #{forward.1} parent=0 // pred_region
    _
  $region9: #{forward.1} parent=0 // pred_fallthru
    _
  // Predicated region
  $region10: #{forward.1} parent=0 // pred_check
    _
  $region11: #{forward.1} parent=0 // pred_check_branch
    %17 = sbr.rel (0) target = $region13
  $region12: #{forward.1} parent=0 // pred_region
    _
  $region13: #{forward.1} parent=0 // pred_fallthru
    _
  // Predicated region
  $region14: #{forward.1} parent=0 // pred_check
    _
  $region15: #{forward.1} parent=0 // pred_check_branch
    %19 = sbr.rel (0) target = $region17
  $region16: #{forward.1} parent=0 // pred_region
    _
  $region17: #{forward.1} parent=0 // pred_fallthru
    _
  // Predicated region
  $region18: #{forward.1} parent=0 // pred_check
    _
  $region19: #{forward.1} parent=0 // pred_check_branch
    %21 = sbr.rel (0) target = $region21
  $region20: #{forward.1} parent=0 // pred_region
    _
  $region21: #{forward.1} parent=0 // pred_fallthru
    _
  // Predicated region
  $region22: #{forward.1} parent=0 // pred_check
    _
  $region23: #{forward.1} parent=0 // pred_check_branch
    %23 = sbr.rel (0) target = $region25
  $region24: #{forward.1} parent=0 // pred_region
    _
  $region25: #{forward.1} parent=0 // pred_fallthru
    _
  // Predicated region
  $region26: #{forward.1} parent=0 // pred_check
    _
  $region27: #{forward.1} parent=0 // pred_check_branch
    %25 = sbr.rel (0) target = $region29
  $region28: #{forward.1} parent=0 // pred_region
    _
  $region29: #{forward.1} parent=0 // pred_fallthru
    _
  %v26 = vld [vmem:[%s3] sm:$0xff]
  %v27 = vld [vmem:[%s3 + $0x8] sm:$0xff]
  %v28 = vld [vmem:[%s3 + $0x10] sm:$0xff]
  %v29 = vld [vmem:[%s2] sm:$0xff]
  %v30 = vld [vmem:[%s2 + $0x8] sm:$0xff]
  %v31 = vld [vmem:[%s2 + $0x10] sm:$0xff]
  %v32 = vld [vmem:[%s2 + $0x18] sm:$0xff]
  %v33 = vld [vmem:[%s2 + $0x20] sm:$0xff]
  %v34 = vld [vmem:[%s2 + $0x28] sm:$0xff]
  %v35 = vld [vmem:[%s2 + $0x30] sm:$0xff]
  %v36 = vld [vmem:[%s2 + $0x38] sm:$0xff]
  %v37 = vld [vmem:[%s2 + $0x40] sm:$0xff]
  %v38 = vld [vmem:[%s2 + $0x48] sm:$0xff]
  %v39 = vld [vmem:[%s2 + $0x50] sm:$0xff]
  %v40 = vld [vmem:[%s2 + $0x58] sm:$0xff]
  %v41 = vld [vmem:[%s2 + $0x60] sm:$0xff]
  %v42 = vld [vmem:[%s2 + $0x68] sm:$0xff]
  %v43 = vld [vmem:[%s2 + $0x70] sm:$0xff]
  %v44 = vld [vmem:[%s2 + $0x78] sm:$0xff]
  %v45 = vld [vmem:[%s2 + $0x80] sm:$0xff]
  %v46 = vld [vmem:[%s2 + $0x88] sm:$0xff]
  %v47 = vld [vmem:[%s2 + $0x90] sm:$0xff]
  %v48 = vld [vmem:[%s2 + $0x98] sm:$0xff]
  %v49 = vld [vmem:[%s2 + $0xa0] sm:$0xff]
  %v50 = vld [vmem:[%s0] sm:$0xff]
  %v51 = vld [vmem:[%s0 + $0x8] sm:$0xff]
  %v52 = vld [vmem:[%s0 + $0x10] sm:$0xff]
  %v53 = vld [vmem:[%s0 + $0x18] sm:$0xff]
  %v54 = vld [vmem:[%s0 + $0x20] sm:$0xff]
  %v55 = vld [vmem:[%s0 + $0x28] sm:$0xff]
  %v56 = vld [vmem:[%s0 + $0x30] sm:$0xff]
  %v57 = vld [vmem:[%s0 + $0x38] sm:$0xff]
  %v58 = vld [vmem:[%s0 + $0x40] sm:$0xff]
  %v59 = vld [vmem:[%s0 + $0x48] sm:$0xff]
  %v60 = vld [vmem:[%s0 + $0x50] sm:$0xff]
  %v61 = vld [vmem:[%s0 + $0x58] sm:$0xff]
  %v62 = vld [vmem:[%s1] sm:$0xff]
  %v63 = vld [vmem:[%s1 + $0x8] sm:$0xff]
  %v64 = vld [vmem:[%s1 + $0x10] sm:$0xff]
  %v65 = vld [vmem:[%s1 + $0x18] sm:$0xff]
  %v66 = vld [vmem:[%s1 + $0x20] sm:$0xff]
  %v67 = vld [vmem:[%s1 + $0x28] sm:$0xff]
  %v68 = vld [vmem:[%s1 + $0x30] sm:$0xff]
  %v69 = vld [vmem:[%s1 + $0x38] sm:$0xff]
  %v70 = vld [vmem:[%s1 + $0x40] sm:$0xff]
  %v71 = vld [vmem:[%s1 + $0x48] sm:$0xff]
  %v72 = vld [vmem:[%s1 + $0x50] sm:$0xff]
  %v73 = vld [vmem:[%s1 + $0x58] sm:$0xff]
  %v74 = vld [vmem:[%s1 + $0x60] sm:$0xff]
  %v75 = vld [vmem:[%s1 + $0x68] sm:$0xff]
  %v76 = vld [vmem:[%s1 + $0x70] sm:$0xff]
  %v77 = vld [vmem:[%s1 + $0x78] sm:$0xff]
  %v78 = vld [vmem:[%s1 + $0x80] sm:$0xff]
  %v79 = vld [vmem:[%s1 + $0x88] sm:$0xff]
  %v80 = vld [vmem:[%s1 + $0x90] sm:$0xff]
  %v81 = vld [vmem:[%s1 + $0x98] sm:$0xff]
  %v82 = vld [vmem:[%s1 + $0xa0] sm:$0xff]
  %v83 = vld [vmem:[%s1 + $0xa8] sm:$0xff]
  %v84 = vld [vmem:[%s1 + $0xb0] sm:$0xff]
  %v85 = vld [vmem:[%s1 + $0xb8] sm:$0xff]
  %v86 = vld [vmem:[%s1 + $0xc0] sm:$0xff]
  %v87 = vld [vmem:[%s1 + $0xc8] sm:$0xff]
  %v88 = vld [vmem:[%s1 + $0xd0] sm:$0xff]
  %v89 = vld [vmem:[%s1 + $0xd8] sm:$0xff]
  %v90 = vld [vmem:[%s1 + $0xe0] sm:$0xff]
  %v91 = vld [vmem:[%s1 + $0xe8] sm:$0xff]
  %v92 = vld [vmem:[%s1 + $0xf0] sm:$0xff]
  %v93 = vld [vmem:[%s1 + $0xf8] sm:$0xff]
  %v94 = vld [vmem:[%s1 + $0x100] sm:$0xff]
  %v95 = vld [vmem:[%s1 + $0x108] sm:$0xff]
  %v96 = vld [vmem:[%s1 + $0x110] sm:$0xff]
  %v97 = vld [vmem:[%s1 + $0x118] sm:$0xff]
  %v98 = vld [vmem:[%s1 + $0x120] sm:$0xff]
  %v99 = vld [vmem:[%s1 + $0x128] sm:$0xff]
  %v100 = vld [vmem:[%s1 + $0x130] sm:$0xff]
  %v101 = vld [vmem:[%s1 + $0x138] sm:$0xff]
  %v102 = vld [vmem:[%s1 + $0x140] sm:$0xff]
  %v103 = vld [vmem:[%s1 + $0x148] sm:$0xff]
  %v104 = vld [vmem:[%s1 + $0x150] sm:$0xff]
  %v105 = vld [vmem:[%s1 + $0x158] sm:$0xff]
  %v106 = vld [vmem:[%s1 + $0x160] sm:$0xff]
  %v107 = vld [vmem:[%s1 + $0x168] sm:$0xff]
  %v108 = vld [vmem:[%s1 + $0x170] sm:$0xff]
  %v109 = vld [vmem:[%s1 + $0x178] sm:$0xff]
  %110 = vmatprep.subr.mxu0 0.0
  %111 = vmatpush1.msra.mxu0 %v62
  %112 = vmatprep.subr.mxu0 0.0
  %113 = vmatpush1.msra.mxu0 %v63
  %114 = vmatprep.subr.mxu0 0.0
  %115 = vmatpush1.msra.mxu0 %v64
  %116 = vmatprep.subr.mxu0 0.0
  %117 = vmatpush1.msra.mxu0 %v65
  %118 = vmatprep.subr.mxu0 0.0
  %119 = vmatpush1.msra.mxu0 %v66
  %120 = vmatprep.subr.mxu0 0.0
  %121 = vmatpush1.msra.mxu0 %v67
  %122 = vmatprep.subr.mxu0 0.0
  %123 = vmatpush1.msra.mxu0 %v68
  %124 = vmatprep.subr.mxu0 0.0
  %125 = vmatpush1.msra.mxu0 %v69
  %126 = vmatprep.subr.mxu0 0.0
  %127 = vmatpush1.msra.mxu0 %v70
  %128 = vmatprep.subr.mxu0 0.0
  %129 = vmatpush1.msra.mxu0 %v71
  %130 = vmatprep.subr.mxu0 0.0
  %131 = vmatpush1.msra.mxu0 %v72
  %132 = vmatprep.subr.mxu0 0.0
  %133 = vmatpush1.msra.mxu0 %v73
  %134 = vmatprep.subr.mxu0 0.0
  %135 = vmatpush1.msra.mxu0 %v74
  %136 = vmatprep.subr.mxu0 0.0
  %137 = vmatpush1.msra.mxu0 %v75
  %138 = vmatprep.subr.mxu0 0.0
  %139 = vmatpush1.msra.mxu0 %v76
  %140 = vmatprep.subr.mxu0 0.0
  %141 = vmatpush1.msra.mxu0 %v77
  %142 = vmatprep.subr.mxu0 0.0
  %143 = vmatpush1.msra.mxu0 %v78
  %144 = vmatprep.subr.mxu0 0.0
  %145 = vmatpush1.msra.mxu0 %v79
  %146 = vmatprep.subr.mxu0 0.0
  %147 = vmatpush1.msra.mxu0 %v80
  %148 = vmatprep.subr.mxu0 0.0
  %149 = vmatpush1.msra.mxu0 %v81
  %150 = vmatprep.subr.mxu0 0.0
  %151 = vmatpush1.msra.mxu0 %v82
  %152 = vmatprep.subr.mxu0 0.0
  %153 = vmatpush1.msra.mxu0 %v83
  %154 = vmatprep.subr.mxu0 0.0
  %155 = vmatpush1.msra.mxu0 %v84
  %156 = vmatprep.subr.mxu0 0.0
  %157 = vmatpush1.msra.mxu0 %v85
  %158 = vmatprep.subr.mxu0 0.0
  %159 = vmatpush1.msra.mxu0 %v86
  %160 = vmatprep.subr.mxu0 0.0
  %161 = vmatpush1.msra.mxu0 %v87
  %162 = vmatprep.subr.mxu0 0.0
  %163 = vmatpush1.msra.mxu0 %v88
  %164 = vmatprep.subr.mxu0 0.0
  %165 = vmatpush1.msra.mxu0 %v89
  %166 = vmatprep.subr.mxu0 0.0
  %167 = vmatpush1.msra.mxu0 %v90
  %168 = vmatprep.subr.mxu0 0.0
  %169 = vmatpush1.msra.mxu0 %v91
  %170 = vmatprep.subr.mxu0 0.0
  %171 = vmatpush1.msra.mxu0 %v92
  %172 = vmatprep.subr.mxu0 0.0
  %173 = vmatpush1.msra.mxu0 %v93
  %174 = vmatprep.mubr.f32.mxu0 %v51
  %175 = vmatmul.mubr.f32.gmra.mrb[0].mxu0 %v50
  %v176 = vpop.f32.mrb[0].mxu0
  %v177 = vadd.f32 0.0, %v176
  %v178 = vpop.f32.mrb[0].mxu0
  %179 = vmatprep.mubr.f32.mxu0 %v54
  %180 = vmatmul.mubr.f32.gmra.mrb[0].mxu0 %v53
  %v181 = vpop.f32.mrb[0].mxu0
  %v182 = vadd.f32 0.0, %v181
  %v183 = vpop.f32.mrb[0].mxu0
  %184 = vmatprep.mubr.f32.mxu0 %v57
  %185 = vmatmul.mubr.f32.gmra.mrb[0].mxu0 %v56
  %v186 = vpop.f32.mrb[0].mxu0
  %v187 = vadd.f32 0.0, %v186
  %v188 = vpop.f32.mrb[0].mxu0
  %189 = vmatprep.mubr.f32.mxu0 %v60
  %190 = vmatmul.mubr.f32.gmra.mrb[0].mxu0 %v59
  %v191 = vpop.f32.mrb[0].mxu0
  %v192 = vadd.f32 0.0, %v191
  %v193 = vpop.f32.mrb[0].mxu0
  %194 = vdwg.mxu0
  %195 = vmatprep.subr.mxu0 0.0
  %196 = vmatpush1.msra.mxu0 %v94
  %197 = vmatprep.subr.mxu0 0.0
  %198 = vmatpush1.msra.mxu0 %v95
  %199 = vmatprep.subr.mxu0 0.0
  %200 = vmatpush1.msra.mxu0 %v96
  %201 = vmatprep.subr.mxu0 0.0
  %202 = vmatpush1.msra.mxu0 %v97
  %203 = vmatprep.subr.mxu0 0.0
  %204 = vmatpush1.msra.mxu0 %v98
  %205 = vmatprep.subr.mxu0 0.0
  %206 = vmatpush1.msra.mxu0 %v99
  %207 = vmatprep.subr.mxu0 0.0
  %208 = vmatpush1.msra.mxu0 %v100
  %209 = vmatprep.subr.mxu0 0.0
  %210 = vmatpush1.msra.mxu0 %v101
  %211 = vmatprep.subr.mxu0 0.0
  %212 = vmatpush1.msra.mxu0 %v102
  %213 = vmatprep.subr.mxu0 0.0
  %214 = vmatpush1.msra.mxu0 %v103
  %215 = vmatprep.subr.mxu0 0.0
  %216 = vmatpush1.msra.mxu0 %v104
  %217 = vmatprep.subr.mxu0 0.0
  %218 = vmatpush1.msra.mxu0 %v105
  %219 = vmatprep.subr.mxu0 0.0
  %220 = vmatpush1.msra.mxu0 %v106
  %221 = vmatprep.subr.mxu0 0.0
  %222 = vmatpush1.msra.mxu0 %v107
  %223 = vmatprep.subr.mxu0 0.0
  %224 = vmatpush1.msra.mxu0 %v108
  %225 = vmatprep.subr.mxu0 0.0
  %226 = vmatpush1.msra.mxu0 %v109
  %227 = vmatprep.subr.mxu0 0.0
  %228 = vmatpush1.msra.mxu0 0.0
  %229 = vmatprep.subr.mxu0 0.0
  %230 = vmatpush1.msra.mxu0 0.0
  %231 = vmatprep.subr.mxu0 0.0
  %232 = vmatpush1.msra.mxu0 0.0
  %233 = vmatprep.subr.mxu0 0.0
  %234 = vmatpush1.msra.mxu0 0.0
  %235 = vmatprep.subr.mxu0 0.0
  %236 = vmatpush1.msra.mxu0 0.0
  %237 = vmatprep.subr.mxu0 0.0
  %238 = vmatpush1.msra.mxu0 0.0
  %239 = vmatprep.subr.mxu0 0.0
  %240 = vmatpush1.msra.mxu0 0.0
  %241 = vmatprep.subr.mxu0 0.0
  %242 = vmatpush1.msra.mxu0 0.0
  %243 = vmatprep.subr.mxu0 0.0
  %244 = vmatpush1.msra.mxu0 0.0
  %245 = vmatprep.subr.mxu0 0.0
  %246 = vmatpush1.msra.mxu0 0.0
  %247 = vmatprep.subr.mxu0 0.0
  %248 = vmatpush1.msra.mxu0 0.0
  %249 = vmatprep.subr.mxu0 0.0
  %250 = vmatpush1.msra.mxu0 0.0
  %251 = vmatprep.subr.mxu0 0.0
  %252 = vmatpush1.msra.mxu0 0.0
  %253 = vmatprep.subr.mxu0 0.0
  %254 = vmatpush1.msra.mxu0 0.0
  %255 = vmatprep.subr.mxu0 0.0
  %256 = vmatpush1.msra.mxu0 0.0
  %257 = vmatprep.subr.mxu0 0.0
  %258 = vmatpush1.msra.mxu0 0.0
  %259 = vmatprep.mubr.f32.mxu0 0.0
  %260 = vmatmul.mubr.f32.gmra.mrb[0].mxu0 %v52
  %v261 = vpop.f32.mrb[0].mxu0
  %v262 = vadd.f32 %v177, %v261
  %v263 = vpop.f32.mrb[0].mxu0
  %264 = vmatprep.mubr.f32.mxu0 0.0
  %265 = vmatmul.mubr.f32.gmra.mrb[0].mxu0 %v55
  %v266 = vpop.f32.mrb[0].mxu0
  %v267 = vadd.f32 %v182, %v266
  %v268 = vpop.f32.mrb[0].mxu0
  %269 = vmatprep.mubr.f32.mxu0 0.0
  %270 = vmatmul.mubr.f32.gmra.mrb[0].mxu0 %v58
  %v271 = vpop.f32.mrb[0].mxu0
  %v272 = vadd.f32 %v187, %v271
  %v273 = vpop.f32.mrb[0].mxu0
  %274 = vmatprep.mubr.f32.mxu0 0.0
  %275 = vmatmul.mubr.f32.gmra.mrb[0].mxu0 %v61
  %v276 = vpop.f32.mrb[0].mxu0
  %v277 = vadd.f32 %v192, %v276
  %v278 = vpop.f32.mrb[0].mxu0
  %279 = vdwg.mxu0
  %v280 = vlaneseq
  %v281 = vshrl.u32 %v280, 7
  %v282 = vsub.s32 0, %v281
  %v283 = vrot.slane %v26, %v282
  %v284 = vadd.f32 %v262, %v283
  %v285 = vadd.f32 %v267, %v283
  %288 = vrot.lane.b32.xlu0 %v272, 120
  %v289 = vpop.permute.xlu0 %288
  %290 = vrot.lane.b32.xlu0 %v277, 120
  %v291 = vpop.permute.xlu0 %290
  %v294 = vadd.f32 %v262, %v289
  %v295 = vadd.f32 %v267, %v291
  %v296 = vlaneseq
  %v297 = vshrl.u32 %v296, 7
  %v298 = vsub.s32 1, %v297
  %v299 = vrot.slane %v26, %v298
  %301 = vrot.lane.b32.xlu0 %v299, 64
  %v302 = vpop.permute.xlu0 %301
  %v304 = vadd.f32 %v294, %v302
  %v305 = vadd.f32 %v295, %v302
  %v306 = vlaneseq
  %v307 = vshrl.u32 %v306, 7
  %v308 = vsub.s32 2, %v307
  %v309 = vrot.slane %v26, %v308
  %312 = vrot.lane.b32.xlu0 %v304, 64
  %v313 = vpop.permute.xlu0 %312
  %314 = vrot.lane.b32.xlu0 %v305, 64
  %v315 = vpop.permute.xlu0 %314
  %vm316 = vcmask 64512
  %v317 = vsel %vm316, %v313, 0
  %v319 = vsel %vm316, %v315, 0
  %321 = vmatprep.subr.mxu0 0.0
  %322 = vmatpush1.msra.mxu0 %v29
  %323 = vmatprep.subr.mxu0 0.0
  %324 = vmatpush1.msra.mxu0 0.0
  %325 = vmatprep.subr.mxu0 0.0
  %326 = vmatpush1.msra.mxu0 0.0
  %327 = vmatprep.subr.mxu0 0.0
  %328 = vmatpush1.msra.mxu0 0.0
  %329 = vmatprep.subr.mxu0 0.0
  %330 = vmatpush1.msra.mxu0 0.0
  %331 = vmatprep.subr.mxu0 0.0
  %332 = vmatpush1.msra.mxu0 0.0
  %333 = vmatprep.subr.mxu0 0.0
  %334 = vmatpush1.msra.mxu0 0.0
  %335 = vmatprep.subr.mxu0 0.0
  %336 = vmatpush1.msra.mxu0 0.0
  %337 = vmatprep.subr.mxu0 0.0
  %338 = vmatpush1.msra.mxu0 0.0
  %339 = vmatprep.subr.mxu0 0.0
  %340 = vmatpush1.msra.mxu0 0.0
  %341 = vmatprep.subr.mxu0 0.0
  %342 = vmatpush1.msra.mxu0 0.0
  %343 = vmatprep.subr.mxu0 0.0
  %344 = vmatpush1.msra.mxu0 0.0
  %345 = vmatprep.subr.mxu0 0.0
  %346 = vmatpush1.msra.mxu0 0.0
  %347 = vmatprep.subr.mxu0 0.0
  %348 = vmatpush1.msra.mxu0 0.0
  %349 = vmatprep.subr.mxu0 0.0
  %350 = vmatpush1.msra.mxu0 0.0
  %351 = vmatprep.subr.mxu0 0.0
  %352 = vmatpush1.msra.mxu0 0.0
  %353 = vmatprep.subr.mxu0 0.0
  %354 = vmatpush1.msra.mxu0 0.0
  %355 = vmatprep.subr.mxu0 0.0
  %356 = vmatpush1.msra.mxu0 0.0
  %357 = vmatprep.subr.mxu0 0.0
  %358 = vmatpush1.msra.mxu0 0.0
  %359 = vmatprep.subr.mxu0 0.0
  %360 = vmatpush1.msra.mxu0 0.0
  %361 = vmatprep.subr.mxu0 0.0
  %362 = vmatpush1.msra.mxu0 0.0
  %363 = vmatprep.subr.mxu0 0.0
  %364 = vmatpush1.msra.mxu0 0.0
  %365 = vmatprep.subr.mxu0 0.0
  %366 = vmatpush1.msra.mxu0 0.0
  %367 = vmatprep.subr.mxu0 0.0
  %368 = vmatpush1.msra.mxu0 0.0
  %369 = vmatprep.subr.mxu0 0.0
  %370 = vmatpush1.msra.mxu0 0.0
  %371 = vmatprep.subr.mxu0 0.0
  %372 = vmatpush1.msra.mxu0 0.0
  %373 = vmatprep.subr.mxu0 0.0
  %374 = vmatpush1.msra.mxu0 0.0
  %375 = vmatprep.subr.mxu0 0.0
  %376 = vmatpush1.msra.mxu0 0.0
  %377 = vmatprep.subr.mxu0 0.0
  %378 = vmatpush1.msra.mxu0 0.0
  %379 = vmatprep.subr.mxu0 0.0
  %380 = vmatpush1.msra.mxu0 0.0
  %381 = vmatprep.subr.mxu0 0.0
  %382 = vmatpush1.msra.mxu0 0.0
  %383 = vmatprep.subr.mxu0 0.0
  %384 = vmatpush1.msra.mxu0 0.0
  %385 = vmatprep.mubr.f32.mxu0 0.0
  %386 = vmatmul.mubr.f32.gmra.mrb[0].mxu0 %v317
  %v387 = vpop.f32.mrb[0].mxu0
  %v388 = vadd.f32 %v309, %v387
  %v389 = vpop.f32.mrb[0].mxu0
  %390 = vmatprep.mubr.f32.mxu0 0.0
  %391 = vmatmul.mubr.f32.gmra.mrb[0].mxu0 %v319
  %v392 = vpop.f32.mrb[0].mxu0
  %v393 = vadd.f32 %v309, %v392
  %v394 = vpop.f32.mrb[0].mxu0
  %395 = vdwg.mxu0
  %v396 = vmul.f32 %v388, 0.5
  %v397 = vmul.f32 %v393, 0.5
  %v398 = vmul.f32 %v388, 0.70710677
  %v399 = vmul.f32 %v393, 0.70710677
  %v400 = vand.u32 2147483647, %v398
  %v401 = vand.u32 2147483647, %v399
  %v402 = vmul.f32 %v400, 0.3275911
  %v403 = vmul.f32 %v401, 0.3275911
  %v404 = vadd.f32 %v402, 1.0
  %v405 = vadd.f32 %v403, 1.0
  %v406 = vrcp.pop %v404
  %v407 = vmul.f32 1.0, %v406
  %v408 = vrcp.pop %v405
  %v409 = vmul.f32 1.0, %v408
  %v410 = vmul.f32 %v407, 1.0614054
  %v411 = vmul.f32 %v409, 1.0614054
  %v412 = vadd.f32 %v410, -1.4531521
  %v413 = vadd.f32 %v411, -1.4531521
  %v414 = vmul.f32 %v412, %v407
  %v415 = vmul.f32 %v413, %v409
  %v416 = vadd.f32 %v414, 1.4214138
  %v417 = vadd.f32 %v415, 1.4214138
  %v418 = vmul.f32 %v416, %v407
  %v419 = vmul.f32 %v417, %v409
  %v420 = vadd.f32 %v418, -0.28449672
  %v421 = vadd.f32 %v419, -0.28449672
  %v422 = vmul.f32 %v420, %v407
  %v423 = vmul.f32 %v421, %v409
  %v424 = vadd.f32 %v422, 0.2548296
  %v425 = vadd.f32 %v423, 0.2548296
  %v426 = vmul.f32 %v424, %v407
  %v427 = vmul.f32 %v425, %v409
  %v428 = vsub.f32 0.0, %v400
  %v429 = vsub.f32 0.0, %v401
  %v430 = vmul.f32 %v428, %v400
  %v431 = vmul.f32 %v429, %v401
  %v432 = vmul.f32 %v430, 1.442695
  %v433 = vpow.pop %v432
  %v434 = vmul.f32 %v431, 1.442695
  %v435 = vpow.pop %v434
  %v436 = vmul.f32 %v426, %v433
  %v437 = vmul.f32 %v427, %v435
  %v438 = vsub.f32 1.0, %v436
  %v439 = vsub.f32 1.0, %v437
  %vm440 = vcmp.ge.f32.partialorder %v398, 0.0
  %vm441 = vcmp.ge.f32.partialorder %v399, 0.0
  %v442 = vsub.f32 0.0, %v438
  %v443 = vsub.f32 0.0, %v439
  %v444 = vsel %vm440, %v438, %v442
  %v445 = vsel %vm441, %v439, %v443
  %v446 = vadd.f32 %v444, 1.0
  %v447 = vadd.f32 %v445, 1.0
  %v448 = vmul.f32 %v396, %v446
  %v449 = vmul.f32 %v397, %v447
  %v450 = vlaneseq
  %v451 = vshrl.u32 %v450, 7
  %v452 = vsub.s32 3, %v451
  %v453 = vrot.slane %v26, %v452
  %vm454 = vcmask 130048
  %v456 = vsel %vm454, %v448, 0
  %v459 = vsel %vm454, %v449, 0
  %461 = vmatprep.subr.mxu0 0.0
  %462 = vmatpush1.msra.mxu0 %v30
  %463 = vmatprep.subr.mxu0 0.0
  %464 = vmatpush1.msra.mxu0 %v31
  %465 = vmatprep.subr.mxu0 0.0
  %466 = vmatpush1.msra.mxu0 0.0
  %467 = vmatprep.subr.mxu0 0.0
  %468 = vmatpush1.msra.mxu0 0.0
  %469 = vmatprep.subr.mxu0 0.0
  %470 = vmatpush1.msra.mxu0 0.0
  %471 = vmatprep.subr.mxu0 0.0
  %472 = vmatpush1.msra.mxu0 0.0
  %473 = vmatprep.subr.mxu0 0.0
  %474 = vmatpush1.msra.mxu0 0.0
  %475 = vmatprep.subr.mxu0 0.0
  %476 = vmatpush1.msra.mxu0 0.0
  %477 = vmatprep.subr.mxu0 0.0
  %478 = vmatpush1.msra.mxu0 0.0
  %479 = vmatprep.subr.mxu0 0.0
  %480 = vmatpush1.msra.mxu0 0.0
  %481 = vmatprep.subr.mxu0 0.0
  %482 = vmatpush1.msra.mxu0 0.0
  %483 = vmatprep.subr.mxu0 0.0
  %484 = vmatpush1.msra.mxu0 0.0
  %485 = vmatprep.subr.mxu0 0.0
  %486 = vmatpush1.msra.mxu0 0.0
  %487 = vmatprep.subr.mxu0 0.0
  %488 = vmatpush1.msra.mxu0 0.0
  %489 = vmatprep.subr.mxu0 0.0
  %490 = vmatpush1.msra.mxu0 0.0
  %491 = vmatprep.subr.mxu0 0.0
  %492 = vmatpush1.msra.mxu0 0.0
  %493 = vmatprep.subr.mxu0 0.0
  %494 = vmatpush1.msra.mxu0 0.0
  %495 = vmatprep.subr.mxu0 0.0
  %496 = vmatpush1.msra.mxu0 0.0
  %497 = vmatprep.subr.mxu0 0.0
  %498 = vmatpush1.msra.mxu0 0.0
  %499 = vmatprep.subr.mxu0 0.0
  %500 = vmatpush1.msra.mxu0 0.0
  %501 = vmatprep.subr.mxu0 0.0
  %502 = vmatpush1.msra.mxu0 0.0
  %503 = vmatprep.subr.mxu0 0.0
  %504 = vmatpush1.msra.mxu0 0.0
  %505 = vmatprep.subr.mxu0 0.0
  %506 = vmatpush1.msra.mxu0 0.0
  %507 = vmatprep.subr.mxu0 0.0
  %508 = vmatpush1.msra.mxu0 0.0
  %509 = vmatprep.subr.mxu0 0.0
  %510 = vmatpush1.msra.mxu0 0.0
  %511 = vmatprep.subr.mxu0 0.0
  %512 = vmatpush1.msra.mxu0 0.0
  %513 = vmatprep.subr.mxu0 0.0
  %514 = vmatpush1.msra.mxu0 0.0
  %515 = vmatprep.subr.mxu0 0.0
  %516 = vmatpush1.msra.mxu0 0.0
  %517 = vmatprep.subr.mxu0 0.0
  %518 = vmatpush1.msra.mxu0 0.0
  %519 = vmatprep.subr.mxu0 0.0
  %520 = vmatpush1.msra.mxu0 0.0
  %521 = vmatprep.subr.mxu0 0.0
  %522 = vmatpush1.msra.mxu0 0.0
  %523 = vmatprep.subr.mxu0 0.0
  %524 = vmatpush1.msra.mxu0 0.0
  %525 = vmatprep.mubr.f32.mxu0 0.0
  %526 = vmatmul.mubr.f32.gmra.mrb[0].mxu0 %v456
  %v527 = vpop.f32.mrb[0].mxu0
  %v528 = vadd.f32 %v453, %v527
  %v529 = vpop.f32.mrb[0].mxu0
  %530 = vmatprep.mubr.f32.mxu0 0.0
  %531 = vmatmul.mubr.f32.gmra.mrb[0].mxu0 %v459
  %v532 = vpop.f32.mrb[0].mxu0
  %v533 = vadd.f32 %v453, %v532
  %v534 = vpop.f32.mrb[0].mxu0
  %535 = vdwg.mxu0
  %v537 = vsel %vm454, %v32, 0
  %v540 = vsel %vm454, %v33, 0
  %v543 = vsel %vm454, %v34, 0
  %545 = vmatprep.subr.mxu0 0.0
  %546 = vmatpush1.msra.mxu0 %v284
  %547 = vmatprep.subr.mxu0 0.0
  %548 = vmatpush1.msra.mxu0 %v285
  %549 = vmatprep.subr.mxu0 0.0
  %550 = vmatpush1.msra.mxu0 0.0
  %551 = vmatprep.subr.mxu0 0.0
  %552 = vmatpush1.msra.mxu0 0.0
  %553 = vmatprep.subr.mxu0 0.0
  %554 = vmatpush1.msra.mxu0 0.0
  %555 = vmatprep.subr.mxu0 0.0
  %556 = vmatpush1.msra.mxu0 0.0
  %557 = vmatprep.subr.mxu0 0.0
  %558 = vmatpush1.msra.mxu0 0.0
  %559 = vmatprep.subr.mxu0 0.0
  %560 = vmatpush1.msra.mxu0 0.0
  %561 = vmatprep.subr.mxu0 0.0
  %562 = vmatpush1.msra.mxu0 0.0
  %563 = vmatprep.subr.mxu0 0.0
  %564 = vmatpush1.msra.mxu0 0.0
  %565 = vmatprep.subr.mxu0 0.0
  %566 = vmatpush1.msra.mxu0 0.0
  %567 = vmatprep.subr.mxu0 0.0
  %568 = vmatpush1.msra.mxu0 0.0
  %569 = vmatprep.subr.mxu0 0.0
  %570 = vmatpush1.msra.mxu0 0.0
  %571 = vmatprep.subr.mxu0 0.0
  %572 = vmatpush1.msra.mxu0 0.0
  %573 = vmatprep.subr.mxu0 0.0
  %574 = vmatpush1.msra.mxu0 0.0
  %575 = vmatprep.subr.mxu0 0.0
  %576 = vmatpush1.msra.mxu0 0.0
  %577 = vmatprep.subr.mxu0 0.0
  %578 = vmatpush1.msra.mxu0 0.0
  %579 = vmatprep.subr.mxu0 0.0
  %580 = vmatpush1.msra.mxu0 0.0
  %581 = vmatprep.subr.mxu0 0.0
  %582 = vmatpush1.msra.mxu0 0.0
  %583 = vmatprep.subr.mxu0 0.0
  %584 = vmatpush1.msra.mxu0 0.0
  %585 = vmatprep.subr.mxu0 0.0
  %586 = vmatpush1.msra.mxu0 0.0
  %587 = vmatprep.subr.mxu0 0.0
  %588 = vmatpush1.msra.mxu0 0.0
  %589 = vmatprep.subr.mxu0 0.0
  %590 = vmatpush1.msra.mxu0 0.0
  %591 = vmatprep.subr.mxu0 0.0
  %592 = vmatpush1.msra.mxu0 0.0
  %593 = vmatprep.subr.mxu0 0.0
  %594 = vmatpush1.msra.mxu0 0.0
  %595 = vmatprep.subr.mxu0 0.0
  %596 = vmatpush1.msra.mxu0 0.0
  %597 = vmatprep.subr.mxu0 0.0
  %598 = vmatpush1.msra.mxu0 0.0
  %599 = vmatprep.subr.mxu0 0.0
  %600 = vmatpush1.msra.mxu0 0.0
  %601 = vmatprep.subr.mxu0 0.0
  %602 = vmatpush1.msra.mxu0 0.0
  %603 = vmatprep.subr.mxu0 0.0
  %604 = vmatpush1.msra.mxu0 0.0
  %605 = vmatprep.subr.mxu0 0.0
  %606 = vmatpush1.msra.mxu0 0.0
  %607 = vmatprep.subr.mxu0 0.0
  %608 = vmatpush1.msra.mxu0 0.0
  %609 = vmatprep.mubr.f32.mxu0 0.0
  %610 = vmatmul.mubr.f32.gmra.mrb[0].mxu0 %v537
  %v611 = vpop.f32.mrb[0].mxu0
  %v612 = vadd.f32 0.0, %v611
  %v613 = vpop.f32.mrb[0].mxu0
  %614 = vmatprep.mubr.f32.mxu0 0.0
  %615 = vmatmul.mubr.f32.gmra.mrb[0].mxu0 %v540
  %v616 = vpop.f32.mrb[0].mxu0
  %v617 = vadd.f32 0.0, %v616
  %v618 = vpop.f32.mrb[0].mxu0
  %619 = vmatprep.mubr.f32.mxu0 0.0
  %620 = vmatmul.mubr.f32.gmra.mrb[0].mxu0 %v543
  %v621 = vpop.f32.mrb[0].mxu0
  %v622 = vadd.f32 0.0, %v621
  %v623 = vpop.f32.mrb[0].mxu0
  %624 = vdwg.mxu0
  %v625 = vadd.f32 %v35, %v612
  %v626 = vadd.f32 %v36, %v617
  %v627 = vadd.f32 %v37, %v622
  %628 = vmatprep.subr.mxu0 0.0
  %629 = vmatpush1.msra.mxu0 %v528
  %630 = vmatprep.subr.mxu0 0.0
  %631 = vmatpush1.msra.mxu0 %v533
  %632 = vmatprep.subr.mxu0 0.0
  %633 = vmatpush1.msra.mxu0 0.0
  %634 = vmatprep.subr.mxu0 0.0
  %635 = vmatpush1.msra.mxu0 0.0
  %636 = vmatprep.subr.mxu0 0.0
  %637 = vmatpush1.msra.mxu0 0.0
  %638 = vmatprep.subr.mxu0 0.0
  %639 = vmatpush1.msra.mxu0 0.0
  %640 = vmatprep.subr.mxu0 0.0
  %641 = vmatpush1.msra.mxu0 0.0
  %642 = vmatprep.subr.mxu0 0.0
  %643 = vmatpush1.msra.mxu0 0.0
  %644 = vmatprep.subr.mxu0 0.0
  %645 = vmatpush1.msra.mxu0 0.0
  %646 = vmatprep.subr.mxu0 0.0
  %647 = vmatpush1.msra.mxu0 0.0
  %648 = vmatprep.subr.mxu0 0.0
  %649 = vmatpush1.msra.mxu0 0.0
  %650 = vmatprep.subr.mxu0 0.0
  %651 = vmatpush1.msra.mxu0 0.0
  %652 = vmatprep.subr.mxu0 0.0
  %653 = vmatpush1.msra.mxu0 0.0
  %654 = vmatprep.subr.mxu0 0.0
  %655 = vmatpush1.msra.mxu0 0.0
  %656 = vmatprep.subr.mxu0 0.0
  %657 = vmatpush1.msra.mxu0 0.0
  %658 = vmatprep.subr.mxu0 0.0
  %659 = vmatpush1.msra.mxu0 0.0
  %660 = vmatprep.subr.mxu0 0.0
  %661 = vmatpush1.msra.mxu0 0.0
  %662 = vmatprep.subr.mxu0 0.0
  %663 = vmatpush1.msra.mxu0 0.0
  %664 = vmatprep.subr.mxu0 0.0
  %665 = vmatpush1.msra.mxu0 0.0
  %666 = vmatprep.subr.mxu0 0.0
  %667 = vmatpush1.msra.mxu0 0.0
  %668 = vmatprep.subr.mxu0 0.0
  %669 = vmatpush1.msra.mxu0 0.0
  %670 = vmatprep.subr.mxu0 0.0
  %671 = vmatpush1.msra.mxu0 0.0
  %672 = vmatprep.subr.mxu0 0.0
  %673 = vmatpush1.msra.mxu0 0.0
  %674 = vmatprep.subr.mxu0 0.0
  %675 = vmatpush1.msra.mxu0 0.0
  %676 = vmatprep.subr.mxu0 0.0
  %677 = vmatpush1.msra.mxu0 0.0
  %678 = vmatprep.subr.mxu0 0.0
  %679 = vmatpush1.msra.mxu0 0.0
  %680 = vmatprep.subr.mxu0 0.0
  %681 = vmatpush1.msra.mxu0 0.0
  %682 = vmatprep.subr.mxu0 0.0
  %683 = vmatpush1.msra.mxu0 0.0
  %684 = vmatprep.subr.mxu0 0.0
  %685 = vmatpush1.msra.mxu0 0.0
  %686 = vmatprep.subr.mxu0 0.0
  %687 = vmatpush1.msra.mxu0 0.0
  %688 = vmatprep.subr.mxu0 0.0
  %689 = vmatpush1.msra.mxu0 0.0
  %690 = vmatprep.subr.mxu0 0.0
  %691 = vmatpush1.msra.mxu0 0.0
  %692 = vmatprep.mubr.f32.mxu0 0.0
  %693 = vmatmul.mubr.f32.gmra.mrb[0].mxu0 %v537
  %v694 = vpop.f32.mrb[0].mxu0
  %v695 = vadd.f32 0.0, %v694
  %v696 = vpop.f32.mrb[0].mxu0
  %697 = vmatprep.mubr.f32.mxu0 0.0
  %698 = vmatmul.mubr.f32.gmra.mrb[0].mxu0 %v540
  %v699 = vpop.f32.mrb[0].mxu0
  %v700 = vadd.f32 0.0, %v699
  %v701 = vpop.f32.mrb[0].mxu0
  %702 = vmatprep.mubr.f32.mxu0 0.0
  %703 = vmatmul.mubr.f32.gmra.mrb[0].mxu0 %v543
  %v704 = vpop.f32.mrb[0].mxu0
  %v705 = vadd.f32 0.0, %v704
  %v706 = vpop.f32.mrb[0].mxu0
  %707 = vdwg.mxu0
  %v708 = vadd.f32 %v625, %v695
  %v709 = vadd.f32 %v626, %v700
  %v710 = vadd.f32 %v627, %v705
  %vm711 = vcmask 523264
  %v712 = vsel %vm711, %v708, 0.0
  %713 = vadd.xlane.f32.xlu0 %v712
  %v714 = vpop.xlane.xlu0 %713
  %v715 = vsel %vm711, %v709, 0.0
  %716 = vadd.xlane.f32.xlu0 %v715
  %v717 = vpop.xlane.xlu0 %716
  %v718 = vsel %vm711, %v710, 0.0
  %719 = vadd.xlane.f32.xlu0 %v718
  %v720 = vpop.xlane.xlu0 %719
  %v721 = vrcp.pop 64.0
  %v722 = vmul.f32 %v714, %v721
  %v723 = vmul.f32 %v717, %v721
  %v724 = vmul.f32 %v720, %v721
  %v725 = vsub.f32 %v708, %v722
  %v726 = vsub.f32 %v709, %v723
  %v727 = vsub.f32 %v710, %v724
  %v728 = vmul.f32 %v725, %v725
  %v729 = vmul.f32 %v726, %v726
  %v730 = vmul.f32 %v727, %v727
  %v731 = vsel %vm711, %v728, 0.0
  %732 = vadd.xlane.f32.xlu0 %v731
  %v733 = vpop.xlane.xlu0 %732
  %v734 = vsel %vm711, %v729, 0.0
  %735 = vadd.xlane.f32.xlu0 %v734
  %v736 = vpop.xlane.xlu0 %735
  %v737 = vsel %vm711, %v730, 0.0
  %738 = vadd.xlane.f32.xlu0 %v737
  %v739 = vpop.xlane.xlu0 %738
  %v740 = vmul.f32 %v733, %v721
  %v741 = vmul.f32 %v736, %v721
  %v742 = vmul.f32 %v739, %v721
  %v743 = vadd.f32 %v740, 1e-05
  %v744 = vadd.f32 %v741, 1e-05
  %v745 = vadd.f32 %v742, 1e-05
  %v746 = vrsqrt.pop %v743
  %v747 = vrsqrt.pop %v744
  %v748 = vrsqrt.pop %v745
  %v749 = vmul.f32 %v725, %v746
  %v750 = vmul.f32 %v726, %v747
  %v751 = vmul.f32 %v727, %v748
  %v752 = vlaneseq
  %v753 = vshrl.u32 %v752, 7
  %v754 = vsub.s32 0, %v753
  %v755 = vrot.slane %v27, %v754
  %v756 = vmul.f32 %v749, %v755
  %v757 = vmul.f32 %v750, %v755
  %v758 = vmul.f32 %v751, %v755
  %v759 = vlaneseq
  %v760 = vshrl.u32 %v759, 7
  %v761 = vsub.s32 1, %v760
  %v762 = vrot.slane %v27, %v761
  %v763 = vadd.f32 %v756, %v762
  %v764 = vadd.f32 %v757, %v762
  %v765 = vadd.f32 %v758, %v762
  %v766 = vld [vmem:[%s4] sm:$0xff]
  %v767 = vld [vmem:[%s4 + $0x8] sm:$0xff]
  %v768 = vld [vmem:[%s4 + $0x10] sm:$0xff]
  %v769 = vld [vmem:[%s4 + $0x18] sm:$0xff]
  %v770 = vld [vmem:[%s4 + $0x20] sm:$0xff]
  %v771 = vld [vmem:[%s4 + $0x28] sm:$0xff]
  %v772 = vld [vmem:[%s4 + $0x30] sm:$0xff]
  %v773 = vld [vmem:[%s4 + $0x38] sm:$0xff]
  %v774 = vld [vmem:[%s4 + $0x40] sm:$0xff]
  %v775 = vld [vmem:[%s4 + $0x48] sm:$0xff]
  %v776 = vld [vmem:[%s4 + $0x50] sm:$0xff]
  %v777 = vld [vmem:[%s4 + $0x58] sm:$0xff]
  %v778 = vld [vmem:[%s4 + $0x60] sm:$0xff]
  %v779 = vld [vmem:[%s4 + $0x68] sm:$0xff]
  %v780 = vld [vmem:[%s4 + $0x70] sm:$0xff]
  %v781 = vld [vmem:[%s4 + $0x78] sm:$0xff]
  %v783 = vsel %vm711, %v763, 0
  %v786 = vsel %vm711, %v764, 0
  %v789 = vsel %vm711, %v765, 0
  %791 = vmatprep.subr.mxu0 %v767
  %792 = vmatpush1.msra.mxu0 %v766
  %793 = vmatprep.subr.mxu0 %v769
  %794 = vmatpush1.msra.mxu0 %v768
  %795 = vmatprep.subr.mxu0 %v771
  %796 = vmatpush1.msra.mxu0 %v770
  %797 = vmatprep.subr.mxu0 %v773
  %798 = vmatpush1.msra.mxu0 %v772
  %799 = vmatprep.subr.mxu0 %v775
  %800 = vmatpush1.msra.mxu0 %v774
  %801 = vmatprep.subr.mxu0 %v777
  %802 = vmatpush1.msra.mxu0 %v776
  %803 = vmatprep.subr.mxu0 %v779
  %804 = vmatpush1.msra.mxu0 %v778
  %805 = vmatprep.subr.mxu0 %v781
  %806 = vmatpush1.msra.mxu0 %v780
  %807 = vmatprep.subr.mxu0 0.0
  %808 = vmatpush1.msra.mxu0 0.0
  %809 = vmatprep.subr.mxu0 0.0
  %810 = vmatpush1.msra.mxu0 0.0
  %811 = vmatprep.subr.mxu0 0.0
  %812 = vmatpush1.msra.mxu0 0.0
  %813 = vmatprep.subr.mxu0 0.0
  %814 = vmatpush1.msra.mxu0 0.0
  %815 = vmatprep.subr.mxu0 0.0
  %816 = vmatpush1.msra.mxu0 0.0
  %817 = vmatprep.subr.mxu0 0.0
  %818 = vmatpush1.msra.mxu0 0.0
  %819 = vmatprep.subr.mxu0 0.0
  %820 = vmatpush1.msra.mxu0 0.0
  %821 = vmatprep.subr.mxu0 0.0
  %822 = vmatpush1.msra.mxu0 0.0
  %823 = vmatprep.subr.mxu0 0.0
  %824 = vmatpush1.msra.mxu0 0.0
  %825 = vmatprep.subr.mxu0 0.0
  %826 = vmatpush1.msra.mxu0 0.0
  %827 = vmatprep.subr.mxu0 0.0
  %828 = vmatpush1.msra.mxu0 0.0
  %829 = vmatprep.subr.mxu0 0.0
  %830 = vmatpush1.msra.mxu0 0.0
  %831 = vmatprep.subr.mxu0 0.0
  %832 = vmatpush1.msra.mxu0 0.0
  %833 = vmatprep.subr.mxu0 0.0
  %834 = vmatpush1.msra.mxu0 0.0
  %835 = vmatprep.subr.mxu0 0.0
  %836 = vmatpush1.msra.mxu0 0.0
  %837 = vmatprep.subr.mxu0 0.0
  %838 = vmatpush1.msra.mxu0 0.0
  %839 = vmatprep.subr.mxu0 0.0
  %840 = vmatpush1.msra.mxu0 0.0
  %841 = vmatprep.subr.mxu0 0.0
  %842 = vmatpush1.msra.mxu0 0.0
  %843 = vmatprep.subr.mxu0 0.0
  %844 = vmatpush1.msra.mxu0 0.0
  %845 = vmatprep.subr.mxu0 0.0
  %846 = vmatpush1.msra.mxu0 0.0
  %847 = vmatprep.subr.mxu0 0.0
  %848 = vmatpush1.msra.mxu0 0.0
  %849 = vmatprep.subr.mxu0 0.0
  %850 = vmatpush1.msra.mxu0 0.0
  %851 = vmatprep.subr.mxu0 0.0
  %852 = vmatpush1.msra.mxu0 0.0
  %853 = vmatprep.subr.mxu0 0.0
  %854 = vmatpush1.msra.mxu0 0.0
  %855 = vmatprep.mubr.f32.mxu0 0.0
  %856 = vmatmul.mubr.f32.gmra.mrb[0].mxu0 %v783
  %v857 = vpop.f32.mrb[0].mxu0
  %v858 = vadd.f32 0.0, %v857
  %v859 = vpop.f32.mrb[0].mxu0
  %v860 = vadd.f32 0.0, %v859
  %861 = vmatprep.mubr.f32.mxu0 0.0
  %862 = vmatmul.mubr.f32.gmra.mrb[0].mxu0 %v786
  %v863 = vpop.f32.mrb[0].mxu0
  %v864 = vadd.f32 0.0, %v863
  %v865 = vpop.f32.mrb[0].mxu0
  %v866 = vadd.f32 0.0, %v865
  %867 = vmatprep.mubr.f32.mxu0 0.0
  %868 = vmatmul.mubr.f32.gmra.mrb[0].mxu0 %v789
  %v869 = vpop.f32.mrb[0].mxu0
  %v870 = vadd.f32 0.0, %v869
  %v871 = vpop.f32.mrb[0].mxu0
  %v872 = vadd.f32 0.0, %v871
  %873 = vdwg.mxu0
  %877 = vrot.lane.b32.xlu0 %v858, 64
  %v878 = vpop.permute.xlu0 %877
  %879 = vrot.lane.b32.xlu0 %v864, 64
  %v880 = vpop.permute.xlu0 %879
  %881 = vrot.lane.b32.xlu0 %v870, 64
  %v882 = vpop.permute.xlu0 %881
  %vm883 = vcmask 261120
  %v884 = vsel %vm883, %v858, 0
  %v886 = vsel %vm883, %v864, 0
  %v888 = vsel %vm883, %v870, 0
  %v890 = vsel %vm883, %v878, 0
  %v892 = vsel %vm883, %v880, 0
  %v894 = vsel %vm883, %v882, 0
  %896 = vmatprep.subr.mxu0 0.0
  %897 = vmatpush1.xpose.msra.mxu0 %v890
  %898 = vmatprep.subr.mxu0 0.0
  %899 = vmatpush1.xpose.msra.mxu0 %v892
  %900 = vmatprep.subr.mxu0 0.0
  %901 = vmatpush1.xpose.msra.mxu0 %v894
  %902 = vmatprep.subr.mxu0 0.0
  %903 = vmatpush1.xpose.msra.mxu0 0.0
  %904 = vmatprep.subr.mxu0 0.0
  %905 = vmatpush1.xpose.msra.mxu0 0.0
  %906 = vmatprep.subr.mxu0 0.0
  %907 = vmatpush1.xpose.msra.mxu0 0.0
  %908 = vmatprep.subr.mxu0 0.0
  %909 = vmatpush1.xpose.msra.mxu0 0.0
  %910 = vmatprep.subr.mxu0 0.0
  %911 = vmatpush1.xpose.msra.mxu0 0.0
  %912 = vmatprep.subr.mxu0 0.0
  %913 = vmatpush1.xpose.msra.mxu0 0.0
  %914 = vmatprep.subr.mxu0 0.0
  %915 = vmatpush1.xpose.msra.mxu0 0.0
  %916 = vmatprep.subr.mxu0 0.0
  %917 = vmatpush1.xpose.msra.mxu0 0.0
  %918 = vmatprep.subr.mxu0 0.0
  %919 = vmatpush1.xpose.msra.mxu0 0.0
  %920 = vmatprep.subr.mxu0 0.0
  %921 = vmatpush1.xpose.msra.mxu0 0.0
  %922 = vmatprep.subr.mxu0 0.0
  %923 = vmatpush1.xpose.msra.mxu0 0.0
  %924 = vmatprep.subr.mxu0 0.0
  %925 = vmatpush1.xpose.msra.mxu0 0.0
  %926 = vmatprep.subr.mxu0 0.0
  %927 = vmatpush1.xpose.msra.mxu0 0.0
  %928 = vmatprep.subr.mxu0 0.0
  %929 = vmatpush1.xpose.msra.mxu0 0.0
  %930 = vmatprep.subr.mxu0 0.0
  %931 = vmatpush1.xpose.msra.mxu0 0.0
  %932 = vmatprep.subr.mxu0 0.0
  %933 = vmatpush1.xpose.msra.mxu0 0.0
  %934 = vmatprep.subr.mxu0 0.0
  %935 = vmatpush1.xpose.msra.mxu0 0.0
  %936 = vmatprep.subr.mxu0 0.0
  %937 = vmatpush1.xpose.msra.mxu0 0.0
  %938 = vmatprep.subr.mxu0 0.0
  %939 = vmatpush1.xpose.msra.mxu0 0.0
  %940 = vmatprep.subr.mxu0 0.0
  %941 = vmatpush1.xpose.msra.mxu0 0.0
  %942 = vmatprep.subr.mxu0 0.0
  %943 = vmatpush1.xpose.msra.mxu0 0.0
  %944 = vmatprep.subr.mxu0 0.0
  %945 = vmatpush1.xpose.msra.mxu0 0.0
  %946 = vmatprep.subr.mxu0 0.0
  %947 = vmatpush1.xpose.msra.mxu0 0.0
  %948 = vmatprep.subr.mxu0 0.0
  %949 = vmatpush1.xpose.msra.mxu0 0.0
  %950 = vmatprep.subr.mxu0 0.0
  %951 = vmatpush1.xpose.msra.mxu0 0.0
  %952 = vmatprep.subr.mxu0 0.0
  %953 = vmatpush1.xpose.msra.mxu0 0.0
  %954 = vmatprep.subr.mxu0 0.0
  %955 = vmatpush1.xpose.msra.mxu0 0.0
  %956 = vmatprep.subr.mxu0 0.0
  %957 = vmatpush1.xpose.msra.mxu0 0.0
  %958 = vmatprep.subr.mxu0 0.0
  %959 = vmatpush1.xpose.msra.mxu0 0.0
  %960 = vmatprep.mubr.f32.mxu0 0.0
  %961 = vmatmul.mubr.f32.gmra.mrb[0].mxu0 %v884
  %v962 = vpop.f32.mrb[0].mxu0
  %v963 = vadd.f32 %v38, %v962
  %v964 = vpop.f32.mrb[0].mxu0
  %965 = vmatprep.mubr.f32.mxu0 0.0
  %966 = vmatmul.mubr.f32.gmra.mrb[0].mxu0 %v886
  %v967 = vpop.f32.mrb[0].mxu0
  %v968 = vadd.f32 %v39, %v967
  %v969 = vpop.f32.mrb[0].mxu0
  %970 = vmatprep.mubr.f32.mxu0 0.0
  %971 = vmatmul.mubr.f32.gmra.mrb[0].mxu0 %v888
  %v972 = vpop.f32.mrb[0].mxu0
  %v973 = vadd.f32 %v40, %v972
  %v974 = vpop.f32.mrb[0].mxu0
  %975 = vdwg.mxu0
  %vm976 = vcmask 195584
  %v977 = vsel %vm976, %v963, -inf
  %978 = vmax.xlane.f32.xlu0 %v977
  %v979 = vpop.xlane.xlu0 %978
  %v980 = vsel %vm976, %v968, -inf
  %981 = vmax.xlane.f32.xlu0 %v980
  %v982 = vpop.xlane.xlu0 %981
  %v983 = vsel %vm976, %v973, -inf
  %984 = vmax.xlane.f32.xlu0 %v983
  %v985 = vpop.xlane.xlu0 %984
  %v986 = vsub.f32 %v963, %v979
  %v987 = vsub.f32 %v968, %v982
  %v988 = vsub.f32 %v973, %v985
  %v989 = vmul.f32 %v986, 1.442695
  %v990 = vpow.pop %v989
  %v991 = vmul.f32 %v987, 1.442695
  %v992 = vpow.pop %v991
  %v993 = vmul.f32 %v988, 1.442695
  %v994 = vpow.pop %v993
  %v995 = vsel %vm976, %v990, 0.0
  %996 = vadd.xlane.f32.xlu0 %v995
  %v997 = vpop.xlane.xlu0 %996
  %v998 = vsel %vm976, %v992, 0.0
  %999 = vadd.xlane.f32.xlu0 %v998
  %v1000 = vpop.xlane.xlu0 %999
  %v1001 = vsel %vm976, %v994, 0.0
  %1002 = vadd.xlane.f32.xlu0 %v1001
  %v1003 = vpop.xlane.xlu0 %1002
  %v1004 = vrcp.pop %v997
  %v1005 = vrcp.pop %v1000
  %v1006 = vrcp.pop %v1003
  %v1007 = vmul.f32 %v990, %v1004
  %v1008 = vmul.f32 %v992, %v1005
  %v1009 = vmul.f32 %v994, %v1006
  %v1011 = vsel %vm976, %v1007, 0
  %v1014 = vsel %vm976, %v1008, 0
  %v1017 = vsel %vm976, %v1009, 0
  %1019 = vmatprep.subr.mxu0 0.0
  %1020 = vmatpush1.msra.mxu0 %v860
  %1021 = vmatprep.subr.mxu0 0.0
  %1022 = vmatpush1.msra.mxu0 %v866
  %1023 = vmatprep.subr.mxu0 0.0
  %1024 = vmatpush1.msra.mxu0 %v872
  %1025 = vmatprep.subr.mxu0 0.0
  %1026 = vmatpush1.msra.mxu0 0.0
  %1027 = vmatprep.subr.mxu0 0.0
  %1028 = vmatpush1.msra.mxu0 0.0
  %1029 = vmatprep.subr.mxu0 0.0
  %1030 = vmatpush1.msra.mxu0 0.0
  %1031 = vmatprep.subr.mxu0 0.0
  %1032 = vmatpush1.msra.mxu0 0.0
  %1033 = vmatprep.subr.mxu0 0.0
  %1034 = vmatpush1.msra.mxu0 0.0
  %1035 = vmatprep.subr.mxu0 0.0
  %1036 = vmatpush1.msra.mxu0 0.0
  %1037 = vmatprep.subr.mxu0 0.0
  %1038 = vmatpush1.msra.mxu0 0.0
  %1039 = vmatprep.subr.mxu0 0.0
  %1040 = vmatpush1.msra.mxu0 0.0
  %1041 = vmatprep.subr.mxu0 0.0
  %1042 = vmatpush1.msra.mxu0 0.0
  %1043 = vmatprep.subr.mxu0 0.0
  %1044 = vmatpush1.msra.mxu0 0.0
  %1045 = vmatprep.subr.mxu0 0.0
  %1046 = vmatpush1.msra.mxu0 0.0
  %1047 = vmatprep.subr.mxu0 0.0
  %1048 = vmatpush1.msra.mxu0 0.0
  %1049 = vmatprep.subr.mxu0 0.0
  %1050 = vmatpush1.msra.mxu0 0.0
  %1051 = vmatprep.subr.mxu0 0.0
  %1052 = vmatpush1.msra.mxu0 0.0
  %1053 = vmatprep.subr.mxu0 0.0
  %1054 = vmatpush1.msra.mxu0 0.0
  %1055 = vmatprep.subr.mxu0 0.0
  %1056 = vmatpush1.msra.mxu0 0.0
  %1057 = vmatprep.subr.mxu0 0.0
  %1058 = vmatpush1.msra.mxu0 0.0
  %1059 = vmatprep.subr.mxu0 0.0
  %1060 = vmatpush1.msra.mxu0 0.0
  %1061 = vmatprep.subr.mxu0 0.0
  %1062 = vmatpush1.msra.mxu0 0.0
  %1063 = vmatprep.subr.mxu0 0.0
  %1064 = vmatpush1.msra.mxu0 0.0
  %1065 = vmatprep.subr.mxu0 0.0
  %1066 = vmatpush1.msra.mxu0 0.0
  %1067 = vmatprep.subr.mxu0 0.0
  %1068 = vmatpush1.msra.mxu0 0.0
  %1069 = vmatprep.subr.mxu0 0.0
  %1070 = vmatpush1.msra.mxu0 0.0
  %1071 = vmatprep.subr.mxu0 0.0
  %1072 = vmatpush1.msra.mxu0 0.0
  %1073 = vmatprep.subr.mxu0 0.0
  %1074 = vmatpush1.msra.mxu0 0.0
  %1075 = vmatprep.subr.mxu0 0.0
  %1076 = vmatpush1.msra.mxu0 0.0
  %1077 = vmatprep.subr.mxu0 0.0
  %1078 = vmatpush1.msra.mxu0 0.0
  %1079 = vmatprep.subr.mxu0 0.0
  %1080 = vmatpush1.msra.mxu0 0.0
  %1081 = vmatprep.subr.mxu0 0.0
  %1082 = vmatpush1.msra.mxu0 0.0
  %1083 = vmatprep.mubr.f32.mxu0 0.0
  %1084 = vmatmul.mubr.f32.gmra.mrb[0].mxu0 %v1011
  %v1085 = vpop.f32.mrb[0].mxu0
  %v1086 = vadd.f32 0.0, %v1085
  %v1087 = vpop.f32.mrb[0].mxu0
  %1088 = vmatprep.mubr.f32.mxu0 0.0
  %1089 = vmatmul.mubr.f32.gmra.mrb[0].mxu0 %v1014
  %v1090 = vpop.f32.mrb[0].mxu0
  %v1091 = vadd.f32 0.0, %v1090
  %v1092 = vpop.f32.mrb[0].mxu0
  %1093 = vmatprep.mubr.f32.mxu0 0.0
  %1094 = vmatmul.mubr.f32.gmra.mrb[0].mxu0 %v1017
  %v1095 = vpop.f32.mrb[0].mxu0
  %v1096 = vadd.f32 0.0, %v1095
  %v1097 = vpop.f32.mrb[0].mxu0
  %1098 = vdwg.mxu0
  %1099 = vrot.lane.b32.xlu0 %v858, 96
  %v1100 = vpop.permute.xlu0 %1099
  %1101 = vrot.lane.b32.xlu0 %v864, 96
  %v1102 = vpop.permute.xlu0 %1101
  %1103 = vrot.lane.b32.xlu0 %v870, 96
  %v1104 = vpop.permute.xlu0 %1103
  %1105 = vrot.lane.b32.xlu0 %v858, 32
  %v1106 = vpop.permute.xlu0 %1105
  %1107 = vrot.lane.b32.xlu0 %v864, 32
  %v1108 = vpop.permute.xlu0 %1107
  %1109 = vrot.lane.b32.xlu0 %v870, 32
  %v1110 = vpop.permute.xlu0 %1109
  %v1111 = vsel %vm883, %v1100, 0
  %v1113 = vsel %vm883, %v1102, 0
  %v1115 = vsel %vm883, %v1104, 0
  %v1117 = vsel %vm883, %v1106, 0
  %v1119 = vsel %vm883, %v1108, 0
  %v1121 = vsel %vm883, %v1110, 0
  %1123 = vmatprep.subr.mxu0 0.0
  %1124 = vmatpush1.xpose.msra.mxu0 %v1117
  %1125 = vmatprep.subr.mxu0 0.0
  %1126 = vmatpush1.xpose.msra.mxu0 %v1119
  %1127 = vmatprep.subr.mxu0 0.0
  %1128 = vmatpush1.xpose.msra.mxu0 %v1121
  %1129 = vmatprep.subr.mxu0 0.0
  %1130 = vmatpush1.xpose.msra.mxu0 0.0
  %1131 = vmatprep.subr.mxu0 0.0
  %1132 = vmatpush1.xpose.msra.mxu0 0.0
  %1133 = vmatprep.subr.mxu0 0.0
  %1134 = vmatpush1.xpose.msra.mxu0 0.0
  %1135 = vmatprep.subr.mxu0 0.0
  %1136 = vmatpush1.xpose.msra.mxu0 0.0
  %1137 = vmatprep.subr.mxu0 0.0
  %1138 = vmatpush1.xpose.msra.mxu0 0.0
  %1139 = vmatprep.subr.mxu0 0.0
  %1140 = vmatpush1.xpose.msra.mxu0 0.0
  %1141 = vmatprep.subr.mxu0 0.0
  %1142 = vmatpush1.xpose.msra.mxu0 0.0
  %1143 = vmatprep.subr.mxu0 0.0
  %1144 = vmatpush1.xpose.msra.mxu0 0.0
  %1145 = vmatprep.subr.mxu0 0.0
  %1146 = vmatpush1.xpose.msra.mxu0 0.0
  %1147 = vmatprep.subr.mxu0 0.0
  %1148 = vmatpush1.xpose.msra.mxu0 0.0
  %1149 = vmatprep.subr.mxu0 0.0
  %1150 = vmatpush1.xpose.msra.mxu0 0.0
  %1151 = vmatprep.subr.mxu0 0.0
  %1152 = vmatpush1.xpose.msra.mxu0 0.0
  %1153 = vmatprep.subr.mxu0 0.0
  %1154 = vmatpush1.xpose.msra.mxu0 0.0
  %1155 = vmatprep.subr.mxu0 0.0
  %1156 = vmatpush1.xpose.msra.mxu0 0.0
  %1157 = vmatprep.subr.mxu0 0.0
  %1158 = vmatpush1.xpose.msra.mxu0 0.0
  %1159 = vmatprep.subr.mxu0 0.0
  %1160 = vmatpush1.xpose.msra.mxu0 0.0
  %1161 = vmatprep.subr.mxu0 0.0
  %1162 = vmatpush1.xpose.msra.mxu0 0.0
  %1163 = vmatprep.subr.mxu0 0.0
  %1164 = vmatpush1.xpose.msra.mxu0 0.0
  %1165 = vmatprep.subr.mxu0 0.0
  %1166 = vmatpush1.xpose.msra.mxu0 0.0
  %1167 = vmatprep.subr.mxu0 0.0
  %1168 = vmatpush1.xpose.msra.mxu0 0.0
  %1169 = vmatprep.subr.mxu0 0.0
  %1170 = vmatpush1.xpose.msra.mxu0 0.0
  %1171 = vmatprep.subr.mxu0 0.0
  %1172 = vmatpush1.xpose.msra.mxu0 0.0
  %1173 = vmatprep.subr.mxu0 0.0
  %1174 = vmatpush1.xpose.msra.mxu0 0.0
  %1175 = vmatprep.subr.mxu0 0.0
  %1176 = vmatpush1.xpose.msra.mxu0 0.0
  %1177 = vmatprep.subr.mxu0 0.0
  %1178 = vmatpush1.xpose.msra.mxu0 0.0
  %1179 = vmatprep.subr.mxu0 0.0
  %1180 = vmatpush1.xpose.msra.mxu0 0.0
  %1181 = vmatprep.subr.mxu0 0.0
  %1182 = vmatpush1.xpose.msra.mxu0 0.0
  %1183 = vmatprep.subr.mxu0 0.0
  %1184 = vmatpush1.xpose.msra.mxu0 0.0
  %1185 = vmatprep.subr.mxu0 0.0
  %1186 = vmatpush1.xpose.msra.mxu0 0.0
  %1187 = vmatprep.mubr.f32.mxu0 0.0
  %1188 = vmatmul.mubr.f32.gmra.mrb[0].mxu0 %v1111
  %v1189 = vpop.f32.mrb[0].mxu0
  %v1190 = vadd.f32 %v38, %v1189
  %v1191 = vpop.f32.mrb[0].mxu0
  %1192 = vmatprep.mubr.f32.mxu0 0.0
  %1193 = vmatmul.mubr.f32.gmra.mrb[0].mxu0 %v1113
  %v1194 = vpop.f32.mrb[0].mxu0
  %v1195 = vadd.f32 %v39, %v1194
  %v1196 = vpop.f32.mrb[0].mxu0
  %1197 = vmatprep.mubr.f32.mxu0 0.0
  %1198 = vmatmul.mubr.f32.gmra.mrb[0].mxu0 %v1115
  %v1199 = vpop.f32.mrb[0].mxu0
  %v1200 = vadd.f32 %v40, %v1199
  %v1201 = vpop.f32.mrb[0].mxu0
  %1202 = vdwg.mxu0
  %v1203 = vsel %vm976, %v1190, -inf
  %1204 = vmax.xlane.f32.xlu0 %v1203
  %v1205 = vpop.xlane.xlu0 %1204
  %v1206 = vsel %vm976, %v1195, -inf
  %1207 = vmax.xlane.f32.xlu0 %v1206
  %v1208 = vpop.xlane.xlu0 %1207
  %v1209 = vsel %vm976, %v1200, -inf
  %1210 = vmax.xlane.f32.xlu0 %v1209
  %v1211 = vpop.xlane.xlu0 %1210
  %v1212 = vsub.f32 %v1190, %v1205
  %v1213 = vsub.f32 %v1195, %v1208
  %v1214 = vsub.f32 %v1200, %v1211
  %v1215 = vmul.f32 %v1212, 1.442695
  %v1216 = vpow.pop %v1215
  %v1217 = vmul.f32 %v1213, 1.442695
  %v1218 = vpow.pop %v1217
  %v1219 = vmul.f32 %v1214, 1.442695
  %v1220 = vpow.pop %v1219
  %v1221 = vsel %vm976, %v1216, 0.0
  %1222 = vadd.xlane.f32.xlu0 %v1221
  %v1223 = vpop.xlane.xlu0 %1222
  %v1224 = vsel %vm976, %v1218, 0.0
  %1225 = vadd.xlane.f32.xlu0 %v1224
  %v1226 = vpop.xlane.xlu0 %1225
  %v1227 = vsel %vm976, %v1220, 0.0
  %1228 = vadd.xlane.f32.xlu0 %v1227
  %v1229 = vpop.xlane.xlu0 %1228
  %v1230 = vrcp.pop %v1223
  %v1231 = vrcp.pop %v1226
  %v1232 = vrcp.pop %v1229
  %v1233 = vmul.f32 %v1216, %v1230
  %v1234 = vmul.f32 %v1218, %v1231
  %v1235 = vmul.f32 %v1220, %v1232
  %1239 = vrot.lane.b32.xlu0 %v860, 96
  %v1240 = vpop.permute.xlu0 %1239
  %1241 = vrot.lane.b32.xlu0 %v866, 96
  %v1242 = vpop.permute.xlu0 %1241
  %1243 = vrot.lane.b32.xlu0 %v872, 96
  %v1244 = vpop.permute.xlu0 %1243
  %v1249 = vsel %vm976, %v1233, 0
  %v1252 = vsel %vm976, %v1234, 0
  %v1255 = vsel %vm976, %v1235, 0
  %1257 = vmatprep.subr.mxu0 0.0
  %1258 = vmatpush1.msra.mxu0 %v1240
  %1259 = vmatprep.subr.mxu0 0.0
  %1260 = vmatpush1.msra.mxu0 %v1242
  %1261 = vmatprep.subr.mxu0 0.0
  %1262 = vmatpush1.msra.mxu0 %v1244
  %1263 = vmatprep.subr.mxu0 0.0
  %1264 = vmatpush1.msra.mxu0 0.0
  %1265 = vmatprep.subr.mxu0 0.0
  %1266 = vmatpush1.msra.mxu0 0.0
  %1267 = vmatprep.subr.mxu0 0.0
  %1268 = vmatpush1.msra.mxu0 0.0
  %1269 = vmatprep.subr.mxu0 0.0
  %1270 = vmatpush1.msra.mxu0 0.0
  %1271 = vmatprep.subr.mxu0 0.0
  %1272 = vmatpush1.msra.mxu0 0.0
  %1273 = vmatprep.subr.mxu0 0.0
  %1274 = vmatpush1.msra.mxu0 0.0
  %1275 = vmatprep.subr.mxu0 0.0
  %1276 = vmatpush1.msra.mxu0 0.0
  %1277 = vmatprep.subr.mxu0 0.0
  %1278 = vmatpush1.msra.mxu0 0.0
  %1279 = vmatprep.subr.mxu0 0.0
  %1280 = vmatpush1.msra.mxu0 0.0
  %1281 = vmatprep.subr.mxu0 0.0
  %1282 = vmatpush1.msra.mxu0 0.0
  %1283 = vmatprep.subr.mxu0 0.0
  %1284 = vmatpush1.msra.mxu0 0.0
  %1285 = vmatprep.subr.mxu0 0.0
  %1286 = vmatpush1.msra.mxu0 0.0
  %1287 = vmatprep.subr.mxu0 0.0
  %1288 = vmatpush1.msra.mxu0 0.0
  %1289 = vmatprep.subr.mxu0 0.0
  %1290 = vmatpush1.msra.mxu0 0.0
  %1291 = vmatprep.subr.mxu0 0.0
  %1292 = vmatpush1.msra.mxu0 0.0
  %1293 = vmatprep.subr.mxu0 0.0
  %1294 = vmatpush1.msra.mxu0 0.0
  %1295 = vmatprep.subr.mxu0 0.0
  %1296 = vmatpush1.msra.mxu0 0.0
  %1297 = vmatprep.subr.mxu0 0.0
  %1298 = vmatpush1.msra.mxu0 0.0
  %1299 = vmatprep.subr.mxu0 0.0
  %1300 = vmatpush1.msra.mxu0 0.0
  %1301 = vmatprep.subr.mxu0 0.0
  %1302 = vmatpush1.msra.mxu0 0.0
  %1303 = vmatprep.subr.mxu0 0.0
  %1304 = vmatpush1.msra.mxu0 0.0
  %1305 = vmatprep.subr.mxu0 0.0
  %1306 = vmatpush1.msra.mxu0 0.0
  %1307 = vmatprep.subr.mxu0 0.0
  %1308 = vmatpush1.msra.mxu0 0.0
  %1309 = vmatprep.subr.mxu0 0.0
  %1310 = vmatpush1.msra.mxu0 0.0
  %1311 = vmatprep.subr.mxu0 0.0
  %1312 = vmatpush1.msra.mxu0 0.0
  %1313 = vmatprep.subr.mxu0 0.0
  %1314 = vmatpush1.msra.mxu0 0.0
  %1315 = vmatprep.subr.mxu0 0.0
  %1316 = vmatpush1.msra.mxu0 0.0
  %1317 = vmatprep.subr.mxu0 0.0
  %1318 = vmatpush1.msra.mxu0 0.0
  %1319 = vmatprep.subr.mxu0 0.0
  %1320 = vmatpush1.msra.mxu0 0.0
  %1321 = vmatprep.mubr.f32.mxu0 0.0
  %1322 = vmatmul.mubr.f32.gmra.mrb[0].mxu0 %v1249
  %v1323 = vpop.f32.mrb[0].mxu0
  %v1324 = vadd.f32 0.0, %v1323
  %v1325 = vpop.f32.mrb[0].mxu0
  %1326 = vmatprep.mubr.f32.mxu0 0.0
  %1327 = vmatmul.mubr.f32.gmra.mrb[0].mxu0 %v1252
  %v1328 = vpop.f32.mrb[0].mxu0
  %v1329 = vadd.f32 0.0, %v1328
  %v1330 = vpop.f32.mrb[0].mxu0
  %1331 = vmatprep.mubr.f32.mxu0 0.0
  %1332 = vmatmul.mubr.f32.gmra.mrb[0].mxu0 %v1255
  %v1333 = vpop.f32.mrb[0].mxu0
  %v1334 = vadd.f32 0.0, %v1333
  %v1335 = vpop.f32.mrb[0].mxu0
  %1336 = vdwg.mxu0
  %1340 = vrot.lane.b32.xlu0 %v1324, 32
  %v1341 = vpop.permute.xlu0 %1340
  %1342 = vrot.lane.b32.xlu0 %v1329, 32
  %v1343 = vpop.permute.xlu0 %1342
  %1344 = vrot.lane.b32.xlu0 %v1334, 32
  %v1345 = vpop.permute.xlu0 %1344
  %v1349 = vsel %vm883, %v1086, %v1341
  %v1350 = vsel %vm883, %v1091, %v1343
  %v1351 = vsel %vm883, %v1096, %v1345
  %v1352 = vld [vmem:[%s6] sm:$0xff]
  %v1353 = vld [vmem:[%s6 + $0x8] sm:$0xff]
  %v1354 = vld [vmem:[%s6 + $0x10] sm:$0xff]
  %v1355 = vld [vmem:[%s6 + $0x18] sm:$0xff]
  %v1356 = vld [vmem:[%s6 + $0x20] sm:$0xff]
  %v1357 = vld [vmem:[%s6 + $0x28] sm:$0xff]
  %v1358 = vld [vmem:[%s6 + $0x30] sm:$0xff]
  %v1359 = vld [vmem:[%s6 + $0x38] sm:$0xff]
  %v1360 = vld [vmem:[%s6 + $0x40] sm:$0xff]
  %v1361 = vld [vmem:[%s6 + $0x48] sm:$0xff]
  %v1362 = vld [vmem:[%s6 + $0x50] sm:$0xff]
  %v1363 = vld [vmem:[%s6 + $0x58] sm:$0xff]
  %v1364 = vld [vmem:[%s6 + $0x60] sm:$0xff]
  %v1365 = vld [vmem:[%s6 + $0x68] sm:$0xff]
  %v1366 = vld [vmem:[%s6 + $0x70] sm:$0xff]
  %v1367 = vld [vmem:[%s6 + $0x78] sm:$0xff]
  %v1368 = vld [vmem:[%s6 + $0x80] sm:$0xff]
  %v1369 = vld [vmem:[%s6 + $0x88] sm:$0xff]
  %v1370 = vld [vmem:[%s6 + $0x90] sm:$0xff]
  %v1371 = vld [vmem:[%s6 + $0x98] sm:$0xff]
  %v1372 = vld [vmem:[%s6 + $0xa0] sm:$0xff]
  %v1373 = vld [vmem:[%s6 + $0xa8] sm:$0xff]
  %v1374 = vld [vmem:[%s6 + $0xb0] sm:$0xff]
  %v1375 = vld [vmem:[%s6 + $0xb8] sm:$0xff]
  %v1377 = vsel %vm711, %v1349, 0
  %v1380 = vsel %vm711, %v1350, 0
  %v1383 = vsel %vm711, %v1351, 0
  %1385 = vmatprep.subr.mxu0 0.0
  %1386 = vmatpush1.msra.mxu0 %v1352
  %1387 = vmatprep.subr.mxu0 0.0
  %1388 = vmatpush1.msra.mxu0 %v1353
  %1389 = vmatprep.subr.mxu0 0.0
  %1390 = vmatpush1.msra.mxu0 %v1354
  %1391 = vmatprep.subr.mxu0 0.0
  %1392 = vmatpush1.msra.mxu0 %v1355
  %1393 = vmatprep.subr.mxu0 0.0
  %1394 = vmatpush1.msra.mxu0 %v1356
  %1395 = vmatprep.subr.mxu0 0.0
  %1396 = vmatpush1.msra.mxu0 %v1357
  %1397 = vmatprep.subr.mxu0 0.0
  %1398 = vmatpush1.msra.mxu0 %v1358
  %1399 = vmatprep.subr.mxu0 0.0
  %1400 = vmatpush1.msra.mxu0 %v1359
  %1401 = vmatprep.subr.mxu0 0.0
  %1402 = vmatpush1.msra.mxu0 0.0
  %1403 = vmatprep.subr.mxu0 0.0
  %1404 = vmatpush1.msra.mxu0 0.0
  %1405 = vmatprep.subr.mxu0 0.0
  %1406 = vmatpush1.msra.mxu0 0.0
  %1407 = vmatprep.subr.mxu0 0.0
  %1408 = vmatpush1.msra.mxu0 0.0
  %1409 = vmatprep.subr.mxu0 0.0
  %1410 = vmatpush1.msra.mxu0 0.0
  %1411 = vmatprep.subr.mxu0 0.0
  %1412 = vmatpush1.msra.mxu0 0.0
  %1413 = vmatprep.subr.mxu0 0.0
  %1414 = vmatpush1.msra.mxu0 0.0
  %1415 = vmatprep.subr.mxu0 0.0
  %1416 = vmatpush1.msra.mxu0 0.0
  %1417 = vmatprep.subr.mxu0 0.0
  %1418 = vmatpush1.msra.mxu0 0.0
  %1419 = vmatprep.subr.mxu0 0.0
  %1420 = vmatpush1.msra.mxu0 0.0
  %1421 = vmatprep.subr.mxu0 0.0
  %1422 = vmatpush1.msra.mxu0 0.0
  %1423 = vmatprep.subr.mxu0 0.0
  %1424 = vmatpush1.msra.mxu0 0.0
  %1425 = vmatprep.subr.mxu0 0.0
  %1426 = vmatpush1.msra.mxu0 0.0
  %1427 = vmatprep.subr.mxu0 0.0
  %1428 = vmatpush1.msra.mxu0 0.0
  %1429 = vmatprep.subr.mxu0 0.0
  %1430 = vmatpush1.msra.mxu0 0.0
  %1431 = vmatprep.subr.mxu0 0.0
  %1432 = vmatpush1.msra.mxu0 0.0
  %1433 = vmatprep.subr.mxu0 0.0
  %1434 = vmatpush1.msra.mxu0 0.0
  %1435 = vmatprep.subr.mxu0 0.0
  %1436 = vmatpush1.msra.mxu0 0.0
  %1437 = vmatprep.subr.mxu0 0.0
  %1438 = vmatpush1.msra.mxu0 0.0
  %1439 = vmatprep.subr.mxu0 0.0
  %1440 = vmatpush1.msra.mxu0 0.0
  %1441 = vmatprep.subr.mxu0 0.0
  %1442 = vmatpush1.msra.mxu0 0.0
  %1443 = vmatprep.subr.mxu0 0.0
  %1444 = vmatpush1.msra.mxu0 0.0
  %1445 = vmatprep.subr.mxu0 0.0
  %1446 = vmatpush1.msra.mxu0 0.0
  %1447 = vmatprep.subr.mxu0 0.0
  %1448 = vmatpush1.msra.mxu0 0.0
  %1449 = vmatprep.mubr.f32.mxu0 0.0
  %1450 = vmatmul.mubr.f32.gmra.mrb[0].mxu0 %v1377
  %v1451 = vpop.f32.mrb[0].mxu0
  %v1452 = vadd.f32 0.0, %v1451
  %v1453 = vpop.f32.mrb[0].mxu0
  %1454 = vmatprep.mubr.f32.mxu0 0.0
  %1455 = vmatmul.mubr.f32.gmra.mrb[0].mxu0 %v1380
  %v1456 = vpop.f32.mrb[0].mxu0
  %v1457 = vadd.f32 0.0, %v1456
  %v1458 = vpop.f32.mrb[0].mxu0
  %1459 = vmatprep.mubr.f32.mxu0 0.0
  %1460 = vmatmul.mubr.f32.gmra.mrb[0].mxu0 %v1383
  %v1461 = vpop.f32.mrb[0].mxu0
  %v1462 = vadd.f32 0.0, %v1461
  %v1463 = vpop.f32.mrb[0].mxu0
  %1464 = vdwg.mxu0
  %v1465 = vadd.f32 %v708, %v1452
  %v1466 = vadd.f32 %v709, %v1457
  %v1467 = vadd.f32 %v710, %v1462
  %v1468 = vlaneseq
  %v1469 = vshrl.u32 %v1468, 7
  %v1470 = vsub.s32 2, %v1469
  %v1471 = vrot.slane %v27, %v1470
  %v1472 = vadd.f32 %v1465, %v1471
  %v1473 = vadd.f32 %v1466, %v1471
  %v1474 = vadd.f32 %v1467, %v1471
  %v1475 = vsel %vm711, %v1472, 0.0
  %1476 = vadd.xlane.f32.xlu0 %v1475
  %v1477 = vpop.xlane.xlu0 %1476
  %v1478 = vsel %vm711, %v1473, 0.0
  %1479 = vadd.xlane.f32.xlu0 %v1478
  %v1480 = vpop.xlane.xlu0 %1479
  %v1481 = vsel %vm711, %v1474, 0.0
  %1482 = vadd.xlane.f32.xlu0 %v1481
  %v1483 = vpop.xlane.xlu0 %1482
  %v1484 = vmul.f32 %v1477, %v721
  %v1485 = vmul.f32 %v1480, %v721
  %v1486 = vmul.f32 %v1483, %v721
  %v1487 = vsub.f32 %v1472, %v1484
  %v1488 = vsub.f32 %v1473, %v1485
  %v1489 = vsub.f32 %v1474, %v1486
  %v1490 = vmul.f32 %v1487, %v1487
  %v1491 = vmul.f32 %v1488, %v1488
  %v1492 = vmul.f32 %v1489, %v1489
  %v1493 = vsel %vm711, %v1490, 0.0
  %1494 = vadd.xlane.f32.xlu0 %v1493
  %v1495 = vpop.xlane.xlu0 %1494
  %v1496 = vsel %vm711, %v1491, 0.0
  %1497 = vadd.xlane.f32.xlu0 %v1496
  %v1498 = vpop.xlane.xlu0 %1497
  %v1499 = vsel %vm711, %v1492, 0.0
  %1500 = vadd.xlane.f32.xlu0 %v1499
  %v1501 = vpop.xlane.xlu0 %1500
  %v1502 = vmul.f32 %v1495, %v721
  %v1503 = vmul.f32 %v1498, %v721
  %v1504 = vmul.f32 %v1501, %v721
  %v1505 = vadd.f32 %v1502, 1e-05
  %v1506 = vadd.f32 %v1503, 1e-05
  %v1507 = vadd.f32 %v1504, 1e-05
  %v1508 = vrsqrt.pop %v1505
  %v1509 = vrsqrt.pop %v1506
  %v1510 = vrsqrt.pop %v1507
  %v1511 = vmul.f32 %v1487, %v1508
  %v1512 = vmul.f32 %v1488, %v1509
  %v1513 = vmul.f32 %v1489, %v1510
  %v1514 = vlaneseq
  %v1515 = vshrl.u32 %v1514, 7
  %v1516 = vsub.s32 3, %v1515
  %v1517 = vrot.slane %v27, %v1516
  %v1518 = vmul.f32 %v1511, %v1517
  %v1519 = vmul.f32 %v1512, %v1517
  %v1520 = vmul.f32 %v1513, %v1517
  %v1521 = vlaneseq
  %v1522 = vshrl.u32 %v1521, 7
  %v1523 = vsub.s32 4, %v1522
  %v1524 = vrot.slane %v27, %v1523
  %v1525 = vadd.f32 %v1518, %v1524
  %v1526 = vadd.f32 %v1519, %v1524
  %v1527 = vadd.f32 %v1520, %v1524
  %v1528 = vld [vmem:[%s5] sm:$0xff]
  %v1529 = vld [vmem:[%s5 + $0x8] sm:$0xff]
  %v1530 = vld [vmem:[%s5 + $0x10] sm:$0xff]
  %v1531 = vld [vmem:[%s5 + $0x18] sm:$0xff]
  %v1532 = vld [vmem:[%s5 + $0x20] sm:$0xff]
  %v1533 = vld [vmem:[%s5 + $0x28] sm:$0xff]
  %v1534 = vld [vmem:[%s5 + $0x30] sm:$0xff]
  %v1535 = vld [vmem:[%s5 + $0x38] sm:$0xff]
  %v1536 = vlaneseq
  %v1537 = vshrl.u32 %v1536, 7
  %v1538 = vsub.s32 5, %v1537
  %v1539 = vrot.slane %v27, %v1538
  %v1541 = vsel %vm711, %v1525, 0
  %v1544 = vsel %vm711, %v1526, 0
  %v1547 = vsel %vm711, %v1527, 0
  %1549 = vmatprep.subr.mxu0 0.0
  %1550 = vmatpush1.msra.mxu0 %v1528
  %1551 = vmatprep.subr.mxu0 0.0
  %1552 = vmatpush1.msra.mxu0 %v1529
  %1553 = vmatprep.subr.mxu0 0.0
  %1554 = vmatpush1.msra.mxu0 %v1530
  %1555 = vmatprep.subr.mxu0 0.0
  %1556 = vmatpush1.msra.mxu0 %v1531
  %1557 = vmatprep.subr.mxu0 0.0
  %1558 = vmatpush1.msra.mxu0 %v1532
  %1559 = vmatprep.subr.mxu0 0.0
  %1560 = vmatpush1.msra.mxu0 %v1533
  %1561 = vmatprep.subr.mxu0 0.0
  %1562 = vmatpush1.msra.mxu0 %v1534
  %1563 = vmatprep.subr.mxu0 0.0
  %1564 = vmatpush1.msra.mxu0 %v1535
  %1565 = vmatprep.subr.mxu0 0.0
  %1566 = vmatpush1.msra.mxu0 0.0
  %1567 = vmatprep.subr.mxu0 0.0
  %1568 = vmatpush1.msra.mxu0 0.0
  %1569 = vmatprep.subr.mxu0 0.0
  %1570 = vmatpush1.msra.mxu0 0.0
  %1571 = vmatprep.subr.mxu0 0.0
  %1572 = vmatpush1.msra.mxu0 0.0
  %1573 = vmatprep.subr.mxu0 0.0
  %1574 = vmatpush1.msra.mxu0 0.0
  %1575 = vmatprep.subr.mxu0 0.0
  %1576 = vmatpush1.msra.mxu0 0.0
  %1577 = vmatprep.subr.mxu0 0.0
  %1578 = vmatpush1.msra.mxu0 0.0
  %1579 = vmatprep.subr.mxu0 0.0
  %1580 = vmatpush1.msra.mxu0 0.0
  %1581 = vmatprep.subr.mxu0 0.0
  %1582 = vmatpush1.msra.mxu0 0.0
  %1583 = vmatprep.subr.mxu0 0.0
  %1584 = vmatpush1.msra.mxu0 0.0
  %1585 = vmatprep.subr.mxu0 0.0
  %1586 = vmatpush1.msra.mxu0 0.0
  %1587 = vmatprep.subr.mxu0 0.0
  %1588 = vmatpush1.msra.mxu0 0.0
  %1589 = vmatprep.subr.mxu0 0.0
  %1590 = vmatpush1.msra.mxu0 0.0
  %1591 = vmatprep.subr.mxu0 0.0
  %1592 = vmatpush1.msra.mxu0 0.0
  %1593 = vmatprep.subr.mxu0 0.0
  %1594 = vmatpush1.msra.mxu0 0.0
  %1595 = vmatprep.subr.mxu0 0.0
  %1596 = vmatpush1.msra.mxu0 0.0
  %1597 = vmatprep.subr.mxu0 0.0
  %1598 = vmatpush1.msra.mxu0 0.0
  %1599 = vmatprep.subr.mxu0 0.0
  %1600 = vmatpush1.msra.mxu0 0.0
  %1601 = vmatprep.subr.mxu0 0.0
  %1602 = vmatpush1.msra.mxu0 0.0
  %1603 = vmatprep.subr.mxu0 0.0
  %1604 = vmatpush1.msra.mxu0 0.0
  %1605 = vmatprep.subr.mxu0 0.0
  %1606 = vmatpush1.msra.mxu0 0.0
  %1607 = vmatprep.subr.mxu0 0.0
  %1608 = vmatpush1.msra.mxu0 0.0
  %1609 = vmatprep.subr.mxu0 0.0
  %1610 = vmatpush1.msra.mxu0 0.0
  %1611 = vmatprep.subr.mxu0 0.0
  %1612 = vmatpush1.msra.mxu0 0.0
  %1613 = vmatprep.mubr.f32.mxu0 0.0
  %1614 = vmatmul.mubr.f32.gmra.mrb[0].mxu0 %v1541
  %v1615 = vpop.f32.mrb[0].mxu0
  %v1616 = vadd.f32 %v1539, %v1615
  %v1617 = vpop.f32.mrb[0].mxu0
  %1618 = vmatprep.mubr.f32.mxu0 0.0
  %1619 = vmatmul.mubr.f32.gmra.mrb[0].mxu0 %v1544
  %v1620 = vpop.f32.mrb[0].mxu0
  %v1621 = vadd.f32 %v1539, %v1620
  %v1622 = vpop.f32.mrb[0].mxu0
  %1623 = vmatprep.mubr.f32.mxu0 0.0
  %1624 = vmatmul.mubr.f32.gmra.mrb[0].mxu0 %v1547
  %v1625 = vpop.f32.mrb[0].mxu0
  %v1626 = vadd.f32 %v1539, %v1625
  %v1627 = vpop.f32.mrb[0].mxu0
  %1628 = vdwg.mxu0
  %v1629 = vmul.f32 %v1616, 0.5
  %v1630 = vmul.f32 %v1621, 0.5
  %v1631 = vmul.f32 %v1626, 0.5
  %v1632 = vmul.f32 %v1616, 0.70710677
  %v1633 = vmul.f32 %v1621, 0.70710677
  %v1634 = vmul.f32 %v1626, 0.70710677
  %v1635 = vand.u32 2147483647, %v1632
  %v1636 = vand.u32 2147483647, %v1633
  %v1637 = vand.u32 2147483647, %v1634
  %v1638 = vmul.f32 %v1635, 0.3275911
  %v1639 = vmul.f32 %v1636, 0.3275911
  %v1640 = vmul.f32 %v1637, 0.3275911
  %v1641 = vadd.f32 %v1638, 1.0
  %v1642 = vadd.f32 %v1639, 1.0
  %v1643 = vadd.f32 %v1640, 1.0
  %v1644 = vrcp.pop %v1641
  %v1645 = vmul.f32 1.0, %v1644
  %v1646 = vrcp.pop %v1642
  %v1647 = vmul.f32 1.0, %v1646
  %v1648 = vrcp.pop %v1643
  %v1649 = vmul.f32 1.0, %v1648
  %v1650 = vmul.f32 %v1645, 1.0614054
  %v1651 = vmul.f32 %v1647, 1.0614054
  %v1652 = vmul.f32 %v1649, 1.0614054
  %v1653 = vadd.f32 %v1650, -1.4531521
  %v1654 = vadd.f32 %v1651, -1.4531521
  %v1655 = vadd.f32 %v1652, -1.4531521
  %v1656 = vmul.f32 %v1653, %v1645
  %v1657 = vmul.f32 %v1654, %v1647
  %v1658 = vmul.f32 %v1655, %v1649
  %v1659 = vadd.f32 %v1656, 1.4214138
  %v1660 = vadd.f32 %v1657, 1.4214138
  %v1661 = vadd.f32 %v1658, 1.4214138
  %v1662 = vmul.f32 %v1659, %v1645
  %v1663 = vmul.f32 %v1660, %v1647
  %v1664 = vmul.f32 %v1661, %v1649
  %v1665 = vadd.f32 %v1662, -0.28449672
  %v1666 = vadd.f32 %v1663, -0.28449672
  %v1667 = vadd.f32 %v1664, -0.28449672
  %v1668 = vmul.f32 %v1665, %v1645
  %v1669 = vmul.f32 %v1666, %v1647
  %v1670 = vmul.f32 %v1667, %v1649
  %v1671 = vadd.f32 %v1668, 0.2548296
  %v1672 = vadd.f32 %v1669, 0.2548296
  %v1673 = vadd.f32 %v1670, 0.2548296
  %v1674 = vmul.f32 %v1671, %v1645
  %v1675 = vmul.f32 %v1672, %v1647
  %v1676 = vmul.f32 %v1673, %v1649
  %v1677 = vsub.f32 0.0, %v1635
  %v1678 = vsub.f32 0.0, %v1636
  %v1679 = vsub.f32 0.0, %v1637
  %v1680 = vmul.f32 %v1677, %v1635
  %v1681 = vmul.f32 %v1678, %v1636
  %v1682 = vmul.f32 %v1679, %v1637
  %v1683 = vmul.f32 %v1680, 1.442695
  %v1684 = vpow.pop %v1683
  %v1685 = vmul.f32 %v1681, 1.442695
  %v1686 = vpow.pop %v1685
  %v1687 = vmul.f32 %v1682, 1.442695
  %v1688 = vpow.pop %v1687
  %v1689 = vmul.f32 %v1674, %v1684
  %v1690 = vmul.f32 %v1675, %v1686
  %v1691 = vmul.f32 %v1676, %v1688
  %v1692 = vsub.f32 1.0, %v1689
  %v1693 = vsub.f32 1.0, %v1690
  %v1694 = vsub.f32 1.0, %v1691
  %vm1695 = vcmp.ge.f32.partialorder %v1632, 0.0
  %vm1696 = vcmp.ge.f32.partialorder %v1633, 0.0
  %vm1697 = vcmp.ge.f32.partialorder %v1634, 0.0
  %v1698 = vsub.f32 0.0, %v1692
  %v1699 = vsub.f32 0.0, %v1693
  %v1700 = vsub.f32 0.0, %v1694
  %v1701 = vsel %vm1695, %v1692, %v1698
  %v1702 = vsel %vm1696, %v1693, %v1699
  %v1703 = vsel %vm1697, %v1694, %v1700
  %v1704 = vadd.f32 %v1701, 1.0
  %v1705 = vadd.f32 %v1702, 1.0
  %v1706 = vadd.f32 %v1703, 1.0
  %v1707 = vmul.f32 %v1629, %v1704
  %v1708 = vmul.f32 %v1630, %v1705
  %v1709 = vmul.f32 %v1631, %v1706
  %1710 = vmatprep.subr.mxu0 0.0
  %1711 = vmatpush1.msra.mxu0 %v1360
  %1712 = vmatprep.subr.mxu0 0.0
  %1713 = vmatpush1.msra.mxu0 %v1361
  %1714 = vmatprep.subr.mxu0 0.0
  %1715 = vmatpush1.msra.mxu0 %v1362
  %1716 = vmatprep.subr.mxu0 0.0
  %1717 = vmatpush1.msra.mxu0 %v1363
  %1718 = vmatprep.subr.mxu0 0.0
  %1719 = vmatpush1.msra.mxu0 %v1364
  %1720 = vmatprep.subr.mxu0 0.0
  %1721 = vmatpush1.msra.mxu0 %v1365
  %1722 = vmatprep.subr.mxu0 0.0
  %1723 = vmatpush1.msra.mxu0 %v1366
  %1724 = vmatprep.subr.mxu0 0.0
  %1725 = vmatpush1.msra.mxu0 %v1367
  %1726 = vmatprep.subr.mxu0 0.0
  %1727 = vmatpush1.msra.mxu0 %v1368
  %1728 = vmatprep.subr.mxu0 0.0
  %1729 = vmatpush1.msra.mxu0 %v1369
  %1730 = vmatprep.subr.mxu0 0.0
  %1731 = vmatpush1.msra.mxu0 %v1370
  %1732 = vmatprep.subr.mxu0 0.0
  %1733 = vmatpush1.msra.mxu0 %v1371
  %1734 = vmatprep.subr.mxu0 0.0
  %1735 = vmatpush1.msra.mxu0 %v1372
  %1736 = vmatprep.subr.mxu0 0.0
  %1737 = vmatpush1.msra.mxu0 %v1373
  %1738 = vmatprep.subr.mxu0 0.0
  %1739 = vmatpush1.msra.mxu0 %v1374
  %1740 = vmatprep.subr.mxu0 0.0
  %1741 = vmatpush1.msra.mxu0 %v1375
  %1742 = vmatprep.subr.mxu0 0.0
  %1743 = vmatpush1.msra.mxu0 0.0
  %1744 = vmatprep.subr.mxu0 0.0
  %1745 = vmatpush1.msra.mxu0 0.0
  %1746 = vmatprep.subr.mxu0 0.0
  %1747 = vmatpush1.msra.mxu0 0.0
  %1748 = vmatprep.subr.mxu0 0.0
  %1749 = vmatpush1.msra.mxu0 0.0
  %1750 = vmatprep.subr.mxu0 0.0
  %1751 = vmatpush1.msra.mxu0 0.0
  %1752 = vmatprep.subr.mxu0 0.0
  %1753 = vmatpush1.msra.mxu0 0.0
  %1754 = vmatprep.subr.mxu0 0.0
  %1755 = vmatpush1.msra.mxu0 0.0
  %1756 = vmatprep.subr.mxu0 0.0
  %1757 = vmatpush1.msra.mxu0 0.0
  %1758 = vmatprep.subr.mxu0 0.0
  %1759 = vmatpush1.msra.mxu0 0.0
  %1760 = vmatprep.subr.mxu0 0.0
  %1761 = vmatpush1.msra.mxu0 0.0
  %1762 = vmatprep.subr.mxu0 0.0
  %1763 = vmatpush1.msra.mxu0 0.0
  %1764 = vmatprep.subr.mxu0 0.0
  %1765 = vmatpush1.msra.mxu0 0.0
  %1766 = vmatprep.subr.mxu0 0.0
  %1767 = vmatpush1.msra.mxu0 0.0
  %1768 = vmatprep.subr.mxu0 0.0
  %1769 = vmatpush1.msra.mxu0 0.0
  %1770 = vmatprep.subr.mxu0 0.0
  %1771 = vmatpush1.msra.mxu0 0.0
  %1772 = vmatprep.subr.mxu0 0.0
  %1773 = vmatpush1.msra.mxu0 0.0
  %1774 = vmatprep.mubr.f32.mxu0 0.0
  %1775 = vmatmul.mubr.f32.gmra.mrb[0].mxu0 %v1707
  %v1776 = vpop.f32.mrb[0].mxu0
  %v1777 = vadd.f32 0.0, %v1776
  %v1778 = vpop.f32.mrb[0].mxu0
  %1779 = vmatprep.mubr.f32.mxu0 0.0
  %1780 = vmatmul.mubr.f32.gmra.mrb[0].mxu0 %v1708
  %v1781 = vpop.f32.mrb[0].mxu0
  %v1782 = vadd.f32 0.0, %v1781
  %v1783 = vpop.f32.mrb[0].mxu0
  %1784 = vmatprep.mubr.f32.mxu0 0.0
  %1785 = vmatmul.mubr.f32.gmra.mrb[0].mxu0 %v1709
  %v1786 = vpop.f32.mrb[0].mxu0
  %v1787 = vadd.f32 0.0, %v1786
  %v1788 = vpop.f32.mrb[0].mxu0
  %1789 = vdwg.mxu0
  %v1790 = vadd.f32 %v1472, %v1777
  %v1791 = vadd.f32 %v1473, %v1782
  %v1792 = vadd.f32 %v1474, %v1787
  %v1793 = vlaneseq
  %v1794 = vshrl.u32 %v1793, 7
  %v1795 = vsub.s32 6, %v1794
  %v1796 = vrot.slane %v27, %v1795
  %v1797 = vadd.f32 %v1790, %v1796
  %v1798 = vadd.f32 %v1791, %v1796
  %v1799 = vadd.f32 %v1792, %v1796
  %1803 = vrot.lane.b32.xlu0 %v695, 64
  %v1804 = vpop.permute.xlu0 %1803
  %1805 = vrot.lane.b32.xlu0 %v700, 64
  %v1806 = vpop.permute.xlu0 %1805
  %1807 = vrot.lane.b32.xlu0 %v705, 64
  %v1808 = vpop.permute.xlu0 %1807
  %v1812 = vadd.f32 %v1797, %v1804
  %v1813 = vadd.f32 %v1798, %v1806
  %v1814 = vadd.f32 %v1799, %v1808
  %v1815 = vsel %vm711, %v1812, 0.0
  %1816 = vadd.xlane.f32.xlu0 %v1815
  %v1817 = vpop.xlane.xlu0 %1816
  %v1818 = vsel %vm711, %v1813, 0.0
  %1819 = vadd.xlane.f32.xlu0 %v1818
  %v1820 = vpop.xlane.xlu0 %1819
  %v1821 = vsel %vm711, %v1814, 0.0
  %1822 = vadd.xlane.f32.xlu0 %v1821
  %v1823 = vpop.xlane.xlu0 %1822
  %v1824 = vmul.f32 %v1817, %v721
  %v1825 = vmul.f32 %v1820, %v721
  %v1826 = vmul.f32 %v1823, %v721
  %v1827 = vsub.f32 %v1812, %v1824
  %v1828 = vsub.f32 %v1813, %v1825
  %v1829 = vsub.f32 %v1814, %v1826
  %v1830 = vmul.f32 %v1827, %v1827
  %v1831 = vmul.f32 %v1828, %v1828
  %v1832 = vmul.f32 %v1829, %v1829
  %v1833 = vsel %vm711, %v1830, 0.0
  %1834 = vadd.xlane.f32.xlu0 %v1833
  %v1835 = vpop.xlane.xlu0 %1834
  %v1836 = vsel %vm711, %v1831, 0.0
  %1837 = vadd.xlane.f32.xlu0 %v1836
  %v1838 = vpop.xlane.xlu0 %1837
  %v1839 = vsel %vm711, %v1832, 0.0
  %1840 = vadd.xlane.f32.xlu0 %v1839
  %v1841 = vpop.xlane.xlu0 %1840
  %v1842 = vmul.f32 %v1835, %v721
  %v1843 = vmul.f32 %v1838, %v721
  %v1844 = vmul.f32 %v1841, %v721
  %v1845 = vadd.f32 %v1842, 1e-05
  %v1846 = vadd.f32 %v1843, 1e-05
  %v1847 = vadd.f32 %v1844, 1e-05
  %v1848 = vrsqrt.pop %v1845
  %v1849 = vrsqrt.pop %v1846
  %v1850 = vrsqrt.pop %v1847
  %v1851 = vmul.f32 %v1827, %v1848
  %v1852 = vmul.f32 %v1828, %v1849
  %v1853 = vmul.f32 %v1829, %v1850
  %v1854 = vlaneseq
  %v1855 = vshrl.u32 %v1854, 7
  %v1856 = vsub.s32 0, %v1855
  %v1857 = vrot.slane %v28, %v1856
  %v1858 = vmul.f32 %v1851, %v1857
  %v1859 = vmul.f32 %v1852, %v1857
  %v1860 = vmul.f32 %v1853, %v1857
  %v1861 = vlaneseq
  %v1862 = vshrl.u32 %v1861, 7
  %v1863 = vsub.s32 1, %v1862
  %v1864 = vrot.slane %v28, %v1863
  %v1865 = vadd.f32 %v1858, %v1864
  %v1866 = vadd.f32 %v1859, %v1864
  %v1867 = vadd.f32 %v1860, %v1864
  %s1868 = scalar_lea.vmem %s4, 128
  %v1869 = vld [vmem:[%s1868] sm:$0xff]
  %v1870 = vld [vmem:[%s1868 + $0x8] sm:$0xff]
  %v1871 = vld [vmem:[%s1868 + $0x10] sm:$0xff]
  %v1872 = vld [vmem:[%s1868 + $0x18] sm:$0xff]
  %v1873 = vld [vmem:[%s1868 + $0x20] sm:$0xff]
  %v1874 = vld [vmem:[%s1868 + $0x28] sm:$0xff]
  %v1875 = vld [vmem:[%s1868 + $0x30] sm:$0xff]
  %v1876 = vld [vmem:[%s1868 + $0x38] sm:$0xff]
  %v1877 = vld [vmem:[%s1868 + $0x40] sm:$0xff]
  %v1878 = vld [vmem:[%s1868 + $0x48] sm:$0xff]
  %v1879 = vld [vmem:[%s1868 + $0x50] sm:$0xff]
  %v1880 = vld [vmem:[%s1868 + $0x58] sm:$0xff]
  %v1881 = vld [vmem:[%s1868 + $0x60] sm:$0xff]
  %v1882 = vld [vmem:[%s1868 + $0x68] sm:$0xff]
  %v1883 = vld [vmem:[%s1868 + $0x70] sm:$0xff]
  %v1884 = vld [vmem:[%s1868 + $0x78] sm:$0xff]
  %v1886 = vsel %vm711, %v1865, 0
  %v1889 = vsel %vm711, %v1866, 0
  %v1892 = vsel %vm711, %v1867, 0
  %1894 = vmatprep.subr.mxu0 %v1870
  %1895 = vmatpush1.msra.mxu0 %v1869
  %1896 = vmatprep.subr.mxu0 %v1872
  %1897 = vmatpush1.msra.mxu0 %v1871
  %1898 = vmatprep.subr.mxu0 %v1874
  %1899 = vmatpush1.msra.mxu0 %v1873
  %1900 = vmatprep.subr.mxu0 %v1876
  %1901 = vmatpush1.msra.mxu0 %v1875
  %1902 = vmatprep.subr.mxu0 %v1878
  %1903 = vmatpush1.msra.mxu0 %v1877
  %1904 = vmatprep.subr.mxu0 %v1880
  %1905 = vmatpush1.msra.mxu0 %v1879
  %1906 = vmatprep.subr.mxu0 %v1882
  %1907 = vmatpush1.msra.mxu0 %v1881
  %1908 = vmatprep.subr.mxu0 %v1884
  %1909 = vmatpush1.msra.mxu0 %v1883
  %1910 = vmatprep.subr.mxu0 0.0
  %1911 = vmatpush1.msra.mxu0 0.0
  %1912 = vmatprep.subr.mxu0 0.0
  %1913 = vmatpush1.msra.mxu0 0.0
  %1914 = vmatprep.subr.mxu0 0.0
  %1915 = vmatpush1.msra.mxu0 0.0
  %1916 = vmatprep.subr.mxu0 0.0
  %1917 = vmatpush1.msra.mxu0 0.0
  %1918 = vmatprep.subr.mxu0 0.0
  %1919 = vmatpush1.msra.mxu0 0.0
  %1920 = vmatprep.subr.mxu0 0.0
  %1921 = vmatpush1.msra.mxu0 0.0
  %1922 = vmatprep.subr.mxu0 0.0
  %1923 = vmatpush1.msra.mxu0 0.0
  %1924 = vmatprep.subr.mxu0 0.0
  %1925 = vmatpush1.msra.mxu0 0.0
  %1926 = vmatprep.subr.mxu0 0.0
  %1927 = vmatpush1.msra.mxu0 0.0
  %1928 = vmatprep.subr.mxu0 0.0
  %1929 = vmatpush1.msra.mxu0 0.0
  %1930 = vmatprep.subr.mxu0 0.0
  %1931 = vmatpush1.msra.mxu0 0.0
  %1932 = vmatprep.subr.mxu0 0.0
  %1933 = vmatpush1.msra.mxu0 0.0
  %1934 = vmatprep.subr.mxu0 0.0
  %1935 = vmatpush1.msra.mxu0 0.0
  %1936 = vmatprep.subr.mxu0 0.0
  %1937 = vmatpush1.msra.mxu0 0.0
  %1938 = vmatprep.subr.mxu0 0.0
  %1939 = vmatpush1.msra.mxu0 0.0
  %1940 = vmatprep.subr.mxu0 0.0
  %1941 = vmatpush1.msra.mxu0 0.0
  %1942 = vmatprep.subr.mxu0 0.0
  %1943 = vmatpush1.msra.mxu0 0.0
  %1944 = vmatprep.subr.mxu0 0.0
  %1945 = vmatpush1.msra.mxu0 0.0
  %1946 = vmatprep.subr.mxu0 0.0
  %1947 = vmatpush1.msra.mxu0 0.0
  %1948 = vmatprep.subr.mxu0 0.0
  %1949 = vmatpush1.msra.mxu0 0.0
  %1950 = vmatprep.subr.mxu0 0.0
  %1951 = vmatpush1.msra.mxu0 0.0
  %1952 = vmatprep.subr.mxu0 0.0
  %1953 = vmatpush1.msra.mxu0 0.0
  %1954 = vmatprep.subr.mxu0 0.0
  %1955 = vmatpush1.msra.mxu0 0.0
  %1956 = vmatprep.subr.mxu0 0.0
  %1957 = vmatpush1.msra.mxu0 0.0
  %1958 = vmatprep.mubr.f32.mxu0 0.0
  %1959 = vmatmul.mubr.f32.gmra.mrb[0].mxu0 %v1886
  %v1960 = vpop.f32.mrb[0].mxu0
  %v1961 = vadd.f32 0.0, %v1960
  %v1962 = vpop.f32.mrb[0].mxu0
  %v1963 = vadd.f32 0.0, %v1962
  %1964 = vmatprep.mubr.f32.mxu0 0.0
  %1965 = vmatmul.mubr.f32.gmra.mrb[0].mxu0 %v1889
  %v1966 = vpop.f32.mrb[0].mxu0
  %v1967 = vadd.f32 0.0, %v1966
  %v1968 = vpop.f32.mrb[0].mxu0
  %v1969 = vadd.f32 0.0, %v1968
  %1970 = vmatprep.mubr.f32.mxu0 0.0
  %1971 = vmatmul.mubr.f32.gmra.mrb[0].mxu0 %v1892
  %v1972 = vpop.f32.mrb[0].mxu0
  %v1973 = vadd.f32 0.0, %v1972
  %v1974 = vpop.f32.mrb[0].mxu0
  %v1975 = vadd.f32 0.0, %v1974
  %1976 = vdwg.mxu0
  %1980 = vrot.lane.b32.xlu0 %v1961, 64
  %v1981 = vpop.permute.xlu0 %1980
  %1982 = vrot.lane.b32.xlu0 %v1967, 64
  %v1983 = vpop.permute.xlu0 %1982
  %1984 = vrot.lane.b32.xlu0 %v1973, 64
  %v1985 = vpop.permute.xlu0 %1984
  %v1986 = vsel %vm883, %v1961, 0
  %v1988 = vsel %vm883, %v1967, 0
  %v1990 = vsel %vm883, %v1973, 0
  %v1992 = vsel %vm883, %v1981, 0
  %v1994 = vsel %vm883, %v1983, 0
  %v1996 = vsel %vm883, %v1985, 0
  %1998 = vmatprep.subr.mxu0 0.0
  %1999 = vmatpush1.xpose.msra.mxu0 %v1992
  %2000 = vmatprep.subr.mxu0 0.0
  %2001 = vmatpush1.xpose.msra.mxu0 %v1994
  %2002 = vmatprep.subr.mxu0 0.0
  %2003 = vmatpush1.xpose.msra.mxu0 %v1996
  %2004 = vmatprep.subr.mxu0 0.0
  %2005 = vmatpush1.xpose.msra.mxu0 0.0
  %2006 = vmatprep.subr.mxu0 0.0
  %2007 = vmatpush1.xpose.msra.mxu0 0.0
  %2008 = vmatprep.subr.mxu0 0.0
  %2009 = vmatpush1.xpose.msra.mxu0 0.0
  %2010 = vmatprep.subr.mxu0 0.0
  %2011 = vmatpush1.xpose.msra.mxu0 0.0
  %2012 = vmatprep.subr.mxu0 0.0
  %2013 = vmatpush1.xpose.msra.mxu0 0.0
  %2014 = vmatprep.subr.mxu0 0.0
  %2015 = vmatpush1.xpose.msra.mxu0 0.0
  %2016 = vmatprep.subr.mxu0 0.0
  %2017 = vmatpush1.xpose.msra.mxu0 0.0
  %2018 = vmatprep.subr.mxu0 0.0
  %2019 = vmatpush1.xpose.msra.mxu0 0.0
  %2020 = vmatprep.subr.mxu0 0.0
  %2021 = vmatpush1.xpose.msra.mxu0 0.0
  %2022 = vmatprep.subr.mxu0 0.0
  %2023 = vmatpush1.xpose.msra.mxu0 0.0
  %2024 = vmatprep.subr.mxu0 0.0
  %2025 = vmatpush1.xpose.msra.mxu0 0.0
  %2026 = vmatprep.subr.mxu0 0.0
  %2027 = vmatpush1.xpose.msra.mxu0 0.0
  %2028 = vmatprep.subr.mxu0 0.0
  %2029 = vmatpush1.xpose.msra.mxu0 0.0
  %2030 = vmatprep.subr.mxu0 0.0
  %2031 = vmatpush1.xpose.msra.mxu0 0.0
  %2032 = vmatprep.subr.mxu0 0.0
  %2033 = vmatpush1.xpose.msra.mxu0 0.0
  %2034 = vmatprep.subr.mxu0 0.0
  %2035 = vmatpush1.xpose.msra.mxu0 0.0
  %2036 = vmatprep.subr.mxu0 0.0
  %2037 = vmatpush1.xpose.msra.mxu0 0.0
  %2038 = vmatprep.subr.mxu0 0.0
  %2039 = vmatpush1.xpose.msra.mxu0 0.0
  %2040 = vmatprep.subr.mxu0 0.0
  %2041 = vmatpush1.xpose.msra.mxu0 0.0
  %2042 = vmatprep.subr.mxu0 0.0
  %2043 = vmatpush1.xpose.msra.mxu0 0.0
  %2044 = vmatprep.subr.mxu0 0.0
  %2045 = vmatpush1.xpose.msra.mxu0 0.0
  %2046 = vmatprep.subr.mxu0 0.0
  %2047 = vmatpush1.xpose.msra.mxu0 0.0
  %2048 = vmatprep.subr.mxu0 0.0
  %2049 = vmatpush1.xpose.msra.mxu0 0.0
  %2050 = vmatprep.subr.mxu0 0.0
  %2051 = vmatpush1.xpose.msra.mxu0 0.0
  %2052 = vmatprep.subr.mxu0 0.0
  %2053 = vmatpush1.xpose.msra.mxu0 0.0
  %2054 = vmatprep.subr.mxu0 0.0
  %2055 = vmatpush1.xpose.msra.mxu0 0.0
  %2056 = vmatprep.subr.mxu0 0.0
  %2057 = vmatpush1.xpose.msra.mxu0 0.0
  %2058 = vmatprep.subr.mxu0 0.0
  %2059 = vmatpush1.xpose.msra.mxu0 0.0
  %2060 = vmatprep.subr.mxu0 0.0
  %2061 = vmatpush1.xpose.msra.mxu0 0.0
  %2062 = vmatprep.mubr.f32.mxu0 0.0
  %2063 = vmatmul.mubr.f32.gmra.mrb[0].mxu0 %v1986
  %v2064 = vpop.f32.mrb[0].mxu0
  %v2065 = vadd.f32 %v38, %v2064
  %v2066 = vpop.f32.mrb[0].mxu0
  %2067 = vmatprep.mubr.f32.mxu0 0.0
  %2068 = vmatmul.mubr.f32.gmra.mrb[0].mxu0 %v1988
  %v2069 = vpop.f32.mrb[0].mxu0
  %v2070 = vadd.f32 %v39, %v2069
  %v2071 = vpop.f32.mrb[0].mxu0
  %2072 = vmatprep.mubr.f32.mxu0 0.0
  %2073 = vmatmul.mubr.f32.gmra.mrb[0].mxu0 %v1990
  %v2074 = vpop.f32.mrb[0].mxu0
  %v2075 = vadd.f32 %v40, %v2074
  %v2076 = vpop.f32.mrb[0].mxu0
  %2077 = vdwg.mxu0
  %v2078 = vsel %vm976, %v2065, -inf
  %2079 = vmax.xlane.f32.xlu0 %v2078
  %v2080 = vpop.xlane.xlu0 %2079
  %v2081 = vsel %vm976, %v2070, -inf
  %2082 = vmax.xlane.f32.xlu0 %v2081
  %v2083 = vpop.xlane.xlu0 %2082
  %v2084 = vsel %vm976, %v2075, -inf
  %2085 = vmax.xlane.f32.xlu0 %v2084
  %v2086 = vpop.xlane.xlu0 %2085
  %v2087 = vsub.f32 %v2065, %v2080
  %v2088 = vsub.f32 %v2070, %v2083
  %v2089 = vsub.f32 %v2075, %v2086
  %v2090 = vmul.f32 %v2087, 1.442695
  %v2091 = vpow.pop %v2090
  %v2092 = vmul.f32 %v2088, 1.442695
  %v2093 = vpow.pop %v2092
  %v2094 = vmul.f32 %v2089, 1.442695
  %v2095 = vpow.pop %v2094
  %v2096 = vsel %vm976, %v2091, 0.0
  %2097 = vadd.xlane.f32.xlu0 %v2096
  %v2098 = vpop.xlane.xlu0 %2097
  %v2099 = vsel %vm976, %v2093, 0.0
  %2100 = vadd.xlane.f32.xlu0 %v2099
  %v2101 = vpop.xlane.xlu0 %2100
  %v2102 = vsel %vm976, %v2095, 0.0
  %2103 = vadd.xlane.f32.xlu0 %v2102
  %v2104 = vpop.xlane.xlu0 %2103
  %v2105 = vrcp.pop %v2098
  %v2106 = vrcp.pop %v2101
  %v2107 = vrcp.pop %v2104
  %v2108 = vmul.f32 %v2091, %v2105
  %v2109 = vmul.f32 %v2093, %v2106
  %v2110 = vmul.f32 %v2095, %v2107
  %v2112 = vsel %vm976, %v2108, 0
  %v2115 = vsel %vm976, %v2109, 0
  %v2118 = vsel %vm976, %v2110, 0
  %2120 = vmatprep.subr.mxu0 0.0
  %2121 = vmatpush1.msra.mxu0 %v1963
  %2122 = vmatprep.subr.mxu0 0.0
  %2123 = vmatpush1.msra.mxu0 %v1969
  %2124 = vmatprep.subr.mxu0 0.0
  %2125 = vmatpush1.msra.mxu0 %v1975
  %2126 = vmatprep.subr.mxu0 0.0
  %2127 = vmatpush1.msra.mxu0 0.0
  %2128 = vmatprep.subr.mxu0 0.0
  %2129 = vmatpush1.msra.mxu0 0.0
  %2130 = vmatprep.subr.mxu0 0.0
  %2131 = vmatpush1.msra.mxu0 0.0
  %2132 = vmatprep.subr.mxu0 0.0
  %2133 = vmatpush1.msra.mxu0 0.0
  %2134 = vmatprep.subr.mxu0 0.0
  %2135 = vmatpush1.msra.mxu0 0.0
  %2136 = vmatprep.subr.mxu0 0.0
  %2137 = vmatpush1.msra.mxu0 0.0
  %2138 = vmatprep.subr.mxu0 0.0
  %2139 = vmatpush1.msra.mxu0 0.0
  %2140 = vmatprep.subr.mxu0 0.0
  %2141 = vmatpush1.msra.mxu0 0.0
  %2142 = vmatprep.subr.mxu0 0.0
  %2143 = vmatpush1.msra.mxu0 0.0
  %2144 = vmatprep.subr.mxu0 0.0
  %2145 = vmatpush1.msra.mxu0 0.0
  %2146 = vmatprep.subr.mxu0 0.0
  %2147 = vmatpush1.msra.mxu0 0.0
  %2148 = vmatprep.subr.mxu0 0.0
  %2149 = vmatpush1.msra.mxu0 0.0
  %2150 = vmatprep.subr.mxu0 0.0
  %2151 = vmatpush1.msra.mxu0 0.0
  %2152 = vmatprep.subr.mxu0 0.0
  %2153 = vmatpush1.msra.mxu0 0.0
  %2154 = vmatprep.subr.mxu0 0.0
  %2155 = vmatpush1.msra.mxu0 0.0
  %2156 = vmatprep.subr.mxu0 0.0
  %2157 = vmatpush1.msra.mxu0 0.0
  %2158 = vmatprep.subr.mxu0 0.0
  %2159 = vmatpush1.msra.mxu0 0.0
  %2160 = vmatprep.subr.mxu0 0.0
  %2161 = vmatpush1.msra.mxu0 0.0
  %2162 = vmatprep.subr.mxu0 0.0
  %2163 = vmatpush1.msra.mxu0 0.0
  %2164 = vmatprep.subr.mxu0 0.0
  %2165 = vmatpush1.msra.mxu0 0.0
  %2166 = vmatprep.subr.mxu0 0.0
  %2167 = vmatpush1.msra.mxu0 0.0
  %2168 = vmatprep.subr.mxu0 0.0
  %2169 = vmatpush1.msra.mxu0 0.0
  %2170 = vmatprep.subr.mxu0 0.0
  %2171 = vmatpush1.msra.mxu0 0.0
  %2172 = vmatprep.subr.mxu0 0.0
  %2173 = vmatpush1.msra.mxu0 0.0
  %2174 = vmatprep.subr.mxu0 0.0
  %2175 = vmatpush1.msra.mxu0 0.0
  %2176 = vmatprep.subr.mxu0 0.0
  %2177 = vmatpush1.msra.mxu0 0.0
  %2178 = vmatprep.subr.mxu0 0.0
  %2179 = vmatpush1.msra.mxu0 0.0
  %2180 = vmatprep.subr.mxu0 0.0
  %2181 = vmatpush1.msra.mxu0 0.0
  %2182 = vmatprep.subr.mxu0 0.0
  %2183 = vmatpush1.msra.mxu0 0.0
  %2184 = vmatprep.mubr.f32.mxu0 0.0
  %2185 = vmatmul.mubr.f32.gmra.mrb[0].mxu0 %v2112
  %v2186 = vpop.f32.mrb[0].mxu0
  %v2187 = vadd.f32 0.0, %v2186
  %v2188 = vpop.f32.mrb[0].mxu0
  %2189 = vmatprep.mubr.f32.mxu0 0.0
  %2190 = vmatmul.mubr.f32.gmra.mrb[0].mxu0 %v2115
  %v2191 = vpop.f32.mrb[0].mxu0
  %v2192 = vadd.f32 0.0, %v2191
  %v2193 = vpop.f32.mrb[0].mxu0
  %2194 = vmatprep.mubr.f32.mxu0 0.0
  %2195 = vmatmul.mubr.f32.gmra.mrb[0].mxu0 %v2118
  %v2196 = vpop.f32.mrb[0].mxu0
  %v2197 = vadd.f32 0.0, %v2196
  %v2198 = vpop.f32.mrb[0].mxu0
  %2199 = vdwg.mxu0
  %2200 = vrot.lane.b32.xlu0 %v1961, 96
  %v2201 = vpop.permute.xlu0 %2200
  %2202 = vrot.lane.b32.xlu0 %v1967, 96
  %v2203 = vpop.permute.xlu0 %2202
  %2204 = vrot.lane.b32.xlu0 %v1973, 96
  %v2205 = vpop.permute.xlu0 %2204
  %2206 = vrot.lane.b32.xlu0 %v1961, 32
  %v2207 = vpop.permute.xlu0 %2206
  %2208 = vrot.lane.b32.xlu0 %v1967, 32
  %v2209 = vpop.permute.xlu0 %2208
  %2210 = vrot.lane.b32.xlu0 %v1973, 32
  %v2211 = vpop.permute.xlu0 %2210
  %v2212 = vsel %vm883, %v2201, 0
  %v2214 = vsel %vm883, %v2203, 0
  %v2216 = vsel %vm883, %v2205, 0
  %v2218 = vsel %vm883, %v2207, 0
  %v2220 = vsel %vm883, %v2209, 0
  %v2222 = vsel %vm883, %v2211, 0
  %2224 = vmatprep.subr.mxu0 0.0
  %2225 = vmatpush1.xpose.msra.mxu0 %v2218
  %2226 = vmatprep.subr.mxu0 0.0
  %2227 = vmatpush1.xpose.msra.mxu0 %v2220
  %2228 = vmatprep.subr.mxu0 0.0
  %2229 = vmatpush1.xpose.msra.mxu0 %v2222
  %2230 = vmatprep.subr.mxu0 0.0
  %2231 = vmatpush1.xpose.msra.mxu0 0.0
  %2232 = vmatprep.subr.mxu0 0.0
  %2233 = vmatpush1.xpose.msra.mxu0 0.0
  %2234 = vmatprep.subr.mxu0 0.0
  %2235 = vmatpush1.xpose.msra.mxu0 0.0
  %2236 = vmatprep.subr.mxu0 0.0
  %2237 = vmatpush1.xpose.msra.mxu0 0.0
  %2238 = vmatprep.subr.mxu0 0.0
  %2239 = vmatpush1.xpose.msra.mxu0 0.0
  %2240 = vmatprep.subr.mxu0 0.0
  %2241 = vmatpush1.xpose.msra.mxu0 0.0
  %2242 = vmatprep.subr.mxu0 0.0
  %2243 = vmatpush1.xpose.msra.mxu0 0.0
  %2244 = vmatprep.subr.mxu0 0.0
  %2245 = vmatpush1.xpose.msra.mxu0 0.0
  %2246 = vmatprep.subr.mxu0 0.0
  %2247 = vmatpush1.xpose.msra.mxu0 0.0
  %2248 = vmatprep.subr.mxu0 0.0
  %2249 = vmatpush1.xpose.msra.mxu0 0.0
  %2250 = vmatprep.subr.mxu0 0.0
  %2251 = vmatpush1.xpose.msra.mxu0 0.0
  %2252 = vmatprep.subr.mxu0 0.0
  %2253 = vmatpush1.xpose.msra.mxu0 0.0
  %2254 = vmatprep.subr.mxu0 0.0
  %2255 = vmatpush1.xpose.msra.mxu0 0.0
  %2256 = vmatprep.subr.mxu0 0.0
  %2257 = vmatpush1.xpose.msra.mxu0 0.0
  %2258 = vmatprep.subr.mxu0 0.0
  %2259 = vmatpush1.xpose.msra.mxu0 0.0
  %2260 = vmatprep.subr.mxu0 0.0
  %2261 = vmatpush1.xpose.msra.mxu0 0.0
  %2262 = vmatprep.subr.mxu0 0.0
  %2263 = vmatpush1.xpose.msra.mxu0 0.0
  %2264 = vmatprep.subr.mxu0 0.0
  %2265 = vmatpush1.xpose.msra.mxu0 0.0
  %2266 = vmatprep.subr.mxu0 0.0
  %2267 = vmatpush1.xpose.msra.mxu0 0.0
  %2268 = vmatprep.subr.mxu0 0.0
  %2269 = vmatpush1.xpose.msra.mxu0 0.0
  %2270 = vmatprep.subr.mxu0 0.0
  %2271 = vmatpush1.xpose.msra.mxu0 0.0
  %2272 = vmatprep.subr.mxu0 0.0
  %2273 = vmatpush1.xpose.msra.mxu0 0.0
  %2274 = vmatprep.subr.mxu0 0.0
  %2275 = vmatpush1.xpose.msra.mxu0 0.0
  %2276 = vmatprep.subr.mxu0 0.0
  %2277 = vmatpush1.xpose.msra.mxu0 0.0
  %2278 = vmatprep.subr.mxu0 0.0
  %2279 = vmatpush1.xpose.msra.mxu0 0.0
  %2280 = vmatprep.subr.mxu0 0.0
  %2281 = vmatpush1.xpose.msra.mxu0 0.0
  %2282 = vmatprep.subr.mxu0 0.0
  %2283 = vmatpush1.xpose.msra.mxu0 0.0
  %2284 = vmatprep.subr.mxu0 0.0
  %2285 = vmatpush1.xpose.msra.mxu0 0.0
  %2286 = vmatprep.subr.mxu0 0.0
  %2287 = vmatpush1.xpose.msra.mxu0 0.0
  %2288 = vmatprep.mubr.f32.mxu0 0.0
  %2289 = vmatmul.mubr.f32.gmra.mrb[0].mxu0 %v2212
  %v2290 = vpop.f32.mrb[0].mxu0
  %v2291 = vadd.f32 %v38, %v2290
  %v2292 = vpop.f32.mrb[0].mxu0
  %2293 = vmatprep.mubr.f32.mxu0 0.0
  %2294 = vmatmul.mubr.f32.gmra.mrb[0].mxu0 %v2214
  %v2295 = vpop.f32.mrb[0].mxu0
  %v2296 = vadd.f32 %v39, %v2295
  %v2297 = vpop.f32.mrb[0].mxu0
  %2298 = vmatprep.mubr.f32.mxu0 0.0
  %2299 = vmatmul.mubr.f32.gmra.mrb[0].mxu0 %v2216
  %v2300 = vpop.f32.mrb[0].mxu0
  %v2301 = vadd.f32 %v40, %v2300
  %v2302 = vpop.f32.mrb[0].mxu0
  %2303 = vdwg.mxu0
  %v2304 = vsel %vm976, %v2291, -inf
  %2305 = vmax.xlane.f32.xlu0 %v2304
  %v2306 = vpop.xlane.xlu0 %2305
  %v2307 = vsel %vm976, %v2296, -inf
  %2308 = vmax.xlane.f32.xlu0 %v2307
  %v2309 = vpop.xlane.xlu0 %2308
  %v2310 = vsel %vm976, %v2301, -inf
  %2311 = vmax.xlane.f32.xlu0 %v2310
  %v2312 = vpop.xlane.xlu0 %2311
  %v2313 = vsub.f32 %v2291, %v2306
  %v2314 = vsub.f32 %v2296, %v2309
  %v2315 = vsub.f32 %v2301, %v2312
  %v2316 = vmul.f32 %v2313, 1.442695
  %v2317 = vpow.pop %v2316
  %v2318 = vmul.f32 %v2314, 1.442695
  %v2319 = vpow.pop %v2318
  %v2320 = vmul.f32 %v2315, 1.442695
  %v2321 = vpow.pop %v2320
  %v2322 = vsel %vm976, %v2317, 0.0
  %2323 = vadd.xlane.f32.xlu0 %v2322
  %v2324 = vpop.xlane.xlu0 %2323
  %v2325 = vsel %vm976, %v2319, 0.0
  %2326 = vadd.xlane.f32.xlu0 %v2325
  %v2327 = vpop.xlane.xlu0 %2326
  %v2328 = vsel %vm976, %v2321, 0.0
  %2329 = vadd.xlane.f32.xlu0 %v2328
  %v2330 = vpop.xlane.xlu0 %2329
  %v2331 = vrcp.pop %v2324
  %v2332 = vrcp.pop %v2327
  %v2333 = vrcp.pop %v2330
  %v2334 = vmul.f32 %v2317, %v2331
  %v2335 = vmul.f32 %v2319, %v2332
  %v2336 = vmul.f32 %v2321, %v2333
  %2340 = vrot.lane.b32.xlu0 %v1963, 96
  %v2341 = vpop.permute.xlu0 %2340
  %2342 = vrot.lane.b32.xlu0 %v1969, 96
  %v2343 = vpop.permute.xlu0 %2342
  %2344 = vrot.lane.b32.xlu0 %v1975, 96
  %v2345 = vpop.permute.xlu0 %2344
  %v2350 = vsel %vm976, %v2334, 0
  %v2353 = vsel %vm976, %v2335, 0
  %v2356 = vsel %vm976, %v2336, 0
  %2358 = vmatprep.subr.mxu0 0.0
  %2359 = vmatpush1.msra.mxu0 %v2341
  %2360 = vmatprep.subr.mxu0 0.0
  %2361 = vmatpush1.msra.mxu0 %v2343
  %2362 = vmatprep.subr.mxu0 0.0
  %2363 = vmatpush1.msra.mxu0 %v2345
  %2364 = vmatprep.subr.mxu0 0.0
  %2365 = vmatpush1.msra.mxu0 0.0
  %2366 = vmatprep.subr.mxu0 0.0
  %2367 = vmatpush1.msra.mxu0 0.0
  %2368 = vmatprep.subr.mxu0 0.0
  %2369 = vmatpush1.msra.mxu0 0.0
  %2370 = vmatprep.subr.mxu0 0.0
  %2371 = vmatpush1.msra.mxu0 0.0
  %2372 = vmatprep.subr.mxu0 0.0
  %2373 = vmatpush1.msra.mxu0 0.0
  %2374 = vmatprep.subr.mxu0 0.0
  %2375 = vmatpush1.msra.mxu0 0.0
  %2376 = vmatprep.subr.mxu0 0.0
  %2377 = vmatpush1.msra.mxu0 0.0
  %2378 = vmatprep.subr.mxu0 0.0
  %2379 = vmatpush1.msra.mxu0 0.0
  %2380 = vmatprep.subr.mxu0 0.0
  %2381 = vmatpush1.msra.mxu0 0.0
  %2382 = vmatprep.subr.mxu0 0.0
  %2383 = vmatpush1.msra.mxu0 0.0
  %2384 = vmatprep.subr.mxu0 0.0
  %2385 = vmatpush1.msra.mxu0 0.0
  %2386 = vmatprep.subr.mxu0 0.0
  %2387 = vmatpush1.msra.mxu0 0.0
  %2388 = vmatprep.subr.mxu0 0.0
  %2389 = vmatpush1.msra.mxu0 0.0
  %2390 = vmatprep.subr.mxu0 0.0
  %2391 = vmatpush1.msra.mxu0 0.0
  %2392 = vmatprep.subr.mxu0 0.0
  %2393 = vmatpush1.msra.mxu0 0.0
  %2394 = vmatprep.subr.mxu0 0.0
  %2395 = vmatpush1.msra.mxu0 0.0
  %2396 = vmatprep.subr.mxu0 0.0
  %2397 = vmatpush1.msra.mxu0 0.0
  %2398 = vmatprep.subr.mxu0 0.0
  %2399 = vmatpush1.msra.mxu0 0.0
  %2400 = vmatprep.subr.mxu0 0.0
  %2401 = vmatpush1.msra.mxu0 0.0
  %2402 = vmatprep.subr.mxu0 0.0
  %2403 = vmatpush1.msra.mxu0 0.0
  %2404 = vmatprep.subr.mxu0 0.0
  %2405 = vmatpush1.msra.mxu0 0.0
  %2406 = vmatprep.subr.mxu0 0.0
  %2407 = vmatpush1.msra.mxu0 0.0
  %2408 = vmatprep.subr.mxu0 0.0
  %2409 = vmatpush1.msra.mxu0 0.0
  %2410 = vmatprep.subr.mxu0 0.0
  %2411 = vmatpush1.msra.mxu0 0.0
  %2412 = vmatprep.subr.mxu0 0.0
  %2413 = vmatpush1.msra.mxu0 0.0
  %2414 = vmatprep.subr.mxu0 0.0
  %2415 = vmatpush1.msra.mxu0 0.0
  %2416 = vmatprep.subr.mxu0 0.0
  %2417 = vmatpush1.msra.mxu0 0.0
  %2418 = vmatprep.subr.mxu0 0.0
  %2419 = vmatpush1.msra.mxu0 0.0
  %2420 = vmatprep.subr.mxu0 0.0
  %2421 = vmatpush1.msra.mxu0 0.0
  %2422 = vmatprep.mubr.f32.mxu0 0.0
  %2423 = vmatmul.mubr.f32.gmra.mrb[0].mxu0 %v2350
  %v2424 = vpop.f32.mrb[0].mxu0
  %v2425 = vadd.f32 0.0, %v2424
  %v2426 = vpop.f32.mrb[0].mxu0
  %2427 = vmatprep.mubr.f32.mxu0 0.0
  %2428 = vmatmul.mubr.f32.gmra.mrb[0].mxu0 %v2353
  %v2429 = vpop.f32.mrb[0].mxu0
  %v2430 = vadd.f32 0.0, %v2429
  %v2431 = vpop.f32.mrb[0].mxu0
  %2432 = vmatprep.mubr.f32.mxu0 0.0
  %2433 = vmatmul.mubr.f32.gmra.mrb[0].mxu0 %v2356
  %v2434 = vpop.f32.mrb[0].mxu0
  %v2435 = vadd.f32 0.0, %v2434
  %v2436 = vpop.f32.mrb[0].mxu0
  %2437 = vdwg.mxu0
  %2441 = vrot.lane.b32.xlu0 %v2425, 32
  %v2442 = vpop.permute.xlu0 %2441
  %2443 = vrot.lane.b32.xlu0 %v2430, 32
  %v2444 = vpop.permute.xlu0 %2443
  %2445 = vrot.lane.b32.xlu0 %v2435, 32
  %v2446 = vpop.permute.xlu0 %2445
  %v2450 = vsel %vm883, %v2187, %v2442
  %v2451 = vsel %vm883, %v2192, %v2444
  %v2452 = vsel %vm883, %v2197, %v2446
  %s2453 = scalar_lea.vmem %s6, 192
  %v2454 = vld [vmem:[%s2453] sm:$0xff]
  %v2455 = vld [vmem:[%s2453 + $0x8] sm:$0xff]
  %v2456 = vld [vmem:[%s2453 + $0x10] sm:$0xff]
  %v2457 = vld [vmem:[%s2453 + $0x18] sm:$0xff]
  %v2458 = vld [vmem:[%s2453 + $0x20] sm:$0xff]
  %v2459 = vld [vmem:[%s2453 + $0x28] sm:$0xff]
  %v2460 = vld [vmem:[%s2453 + $0x30] sm:$0xff]
  %v2461 = vld [vmem:[%s2453 + $0x38] sm:$0xff]
  %v2462 = vld [vmem:[%s2453 + $0x40] sm:$0xff]
  %v2463 = vld [vmem:[%s2453 + $0x48] sm:$0xff]
  %v2464 = vld [vmem:[%s2453 + $0x50] sm:$0xff]
  %v2465 = vld [vmem:[%s2453 + $0x58] sm:$0xff]
  %v2466 = vld [vmem:[%s2453 + $0x60] sm:$0xff]
  %v2467 = vld [vmem:[%s2453 + $0x68] sm:$0xff]
  %v2468 = vld [vmem:[%s2453 + $0x70] sm:$0xff]
  %v2469 = vld [vmem:[%s2453 + $0x78] sm:$0xff]
  %v2470 = vld [vmem:[%s2453 + $0x80] sm:$0xff]
  %v2471 = vld [vmem:[%s2453 + $0x88] sm:$0xff]
  %v2472 = vld [vmem:[%s2453 + $0x90] sm:$0xff]
  %v2473 = vld [vmem:[%s2453 + $0x98] sm:$0xff]
  %v2474 = vld [vmem:[%s2453 + $0xa0] sm:$0xff]
  %v2475 = vld [vmem:[%s2453 + $0xa8] sm:$0xff]
  %v2476 = vld [vmem:[%s2453 + $0xb0] sm:$0xff]
  %v2477 = vld [vmem:[%s2453 + $0xb8] sm:$0xff]
  %v2479 = vsel %vm711, %v2450, 0
  %v2482 = vsel %vm711, %v2451, 0
  %v2485 = vsel %vm711, %v2452, 0
  %2487 = vmatprep.subr.mxu0 0.0
  %2488 = vmatpush1.msra.mxu0 %v2454
  %2489 = vmatprep.subr.mxu0 0.0
  %2490 = vmatpush1.msra.mxu0 %v2455
  %2491 = vmatprep.subr.mxu0 0.0
  %2492 = vmatpush1.msra.mxu0 %v2456
  %2493 = vmatprep.subr.mxu0 0.0
  %2494 = vmatpush1.msra.mxu0 %v2457
  %2495 = vmatprep.subr.mxu0 0.0
  %2496 = vmatpush1.msra.mxu0 %v2458
  %2497 = vmatprep.subr.mxu0 0.0
  %2498 = vmatpush1.msra.mxu0 %v2459
  %2499 = vmatprep.subr.mxu0 0.0
  %2500 = vmatpush1.msra.mxu0 %v2460
  %2501 = vmatprep.subr.mxu0 0.0
  %2502 = vmatpush1.msra.mxu0 %v2461
  %2503 = vmatprep.subr.mxu0 0.0
  %2504 = vmatpush1.msra.mxu0 0.0
  %2505 = vmatprep.subr.mxu0 0.0
  %2506 = vmatpush1.msra.mxu0 0.0
  %2507 = vmatprep.subr.mxu0 0.0
  %2508 = vmatpush1.msra.mxu0 0.0
  %2509 = vmatprep.subr.mxu0 0.0
  %2510 = vmatpush1.msra.mxu0 0.0
  %2511 = vmatprep.subr.mxu0 0.0
  %2512 = vmatpush1.msra.mxu0 0.0
  %2513 = vmatprep.subr.mxu0 0.0
  %2514 = vmatpush1.msra.mxu0 0.0
  %2515 = vmatprep.subr.mxu0 0.0
  %2516 = vmatpush1.msra.mxu0 0.0
  %2517 = vmatprep.subr.mxu0 0.0
  %2518 = vmatpush1.msra.mxu0 0.0
  %2519 = vmatprep.subr.mxu0 0.0
  %2520 = vmatpush1.msra.mxu0 0.0
  %2521 = vmatprep.subr.mxu0 0.0
  %2522 = vmatpush1.msra.mxu0 0.0
  %2523 = vmatprep.subr.mxu0 0.0
  %2524 = vmatpush1.msra.mxu0 0.0
  %2525 = vmatprep.subr.mxu0 0.0
  %2526 = vmatpush1.msra.mxu0 0.0
  %2527 = vmatprep.subr.mxu0 0.0
  %2528 = vmatpush1.msra.mxu0 0.0
  %2529 = vmatprep.subr.mxu0 0.0
  %2530 = vmatpush1.msra.mxu0 0.0
  %2531 = vmatprep.subr.mxu0 0.0
  %2532 = vmatpush1.msra.mxu0 0.0
  %2533 = vmatprep.subr.mxu0 0.0
  %2534 = vmatpush1.msra.mxu0 0.0
  %2535 = vmatprep.subr.mxu0 0.0
  %2536 = vmatpush1.msra.mxu0 0.0
  %2537 = vmatprep.subr.mxu0 0.0
  %2538 = vmatpush1.msra.mxu0 0.0
  %2539 = vmatprep.subr.mxu0 0.0
  %2540 = vmatpush1.msra.mxu0 0.0
  %2541 = vmatprep.subr.mxu0 0.0
  %2542 = vmatpush1.msra.mxu0 0.0
  %2543 = vmatprep.subr.mxu0 0.0
  %2544 = vmatpush1.msra.mxu0 0.0
  %2545 = vmatprep.subr.mxu0 0.0
  %2546 = vmatpush1.msra.mxu0 0.0
  %2547 = vmatprep.subr.mxu0 0.0
  %2548 = vmatpush1.msra.mxu0 0.0
  %2549 = vmatprep.subr.mxu0 0.0
  %2550 = vmatpush1.msra.mxu0 0.0
  %2551 = vmatprep.mubr.f32.mxu0 0.0
  %2552 = vmatmul.mubr.f32.gmra.mrb[0].mxu0 %v2479
  %v2553 = vpop.f32.mrb[0].mxu0
  %v2554 = vadd.f32 0.0, %v2553
  %v2555 = vpop.f32.mrb[0].mxu0
  %2556 = vmatprep.mubr.f32.mxu0 0.0
  %2557 = vmatmul.mubr.f32.gmra.mrb[0].mxu0 %v2482
  %v2558 = vpop.f32.mrb[0].mxu0
  %v2559 = vadd.f32 0.0, %v2558
  %v2560 = vpop.f32.mrb[0].mxu0
  %2561 = vmatprep.mubr.f32.mxu0 0.0
  %2562 = vmatmul.mubr.f32.gmra.mrb[0].mxu0 %v2485
  %v2563 = vpop.f32.mrb[0].mxu0
  %v2564 = vadd.f32 0.0, %v2563
  %v2565 = vpop.f32.mrb[0].mxu0
  %2566 = vdwg.mxu0
  %v2567 = vadd.f32 %v1812, %v2554
  %v2568 = vadd.f32 %v1813, %v2559
  %v2569 = vadd.f32 %v1814, %v2564
  %v2570 = vlaneseq
  %v2571 = vshrl.u32 %v2570, 7
  %v2572 = vsub.s32 2, %v2571
  %v2573 = vrot.slane %v28, %v2572
  %v2574 = vadd.f32 %v2567, %v2573
  %v2575 = vadd.f32 %v2568, %v2573
  %v2576 = vadd.f32 %v2569, %v2573
  %v2577 = vsel %vm711, %v2574, 0.0
  %2578 = vadd.xlane.f32.xlu0 %v2577
  %v2579 = vpop.xlane.xlu0 %2578
  %v2580 = vsel %vm711, %v2575, 0.0
  %2581 = vadd.xlane.f32.xlu0 %v2580
  %v2582 = vpop.xlane.xlu0 %2581
  %v2583 = vsel %vm711, %v2576, 0.0
  %2584 = vadd.xlane.f32.xlu0 %v2583
  %v2585 = vpop.xlane.xlu0 %2584
  %v2586 = vmul.f32 %v2579, %v721
  %v2587 = vmul.f32 %v2582, %v721
  %v2588 = vmul.f32 %v2585, %v721
  %v2589 = vsub.f32 %v2574, %v2586
  %v2590 = vsub.f32 %v2575, %v2587
  %v2591 = vsub.f32 %v2576, %v2588
  %v2592 = vmul.f32 %v2589, %v2589
  %v2593 = vmul.f32 %v2590, %v2590
  %v2594 = vmul.f32 %v2591, %v2591
  %v2595 = vsel %vm711, %v2592, 0.0
  %2596 = vadd.xlane.f32.xlu0 %v2595
  %v2597 = vpop.xlane.xlu0 %2596
  %v2598 = vsel %vm711, %v2593, 0.0
  %2599 = vadd.xlane.f32.xlu0 %v2598
  %v2600 = vpop.xlane.xlu0 %2599
  %v2601 = vsel %vm711, %v2594, 0.0
  %2602 = vadd.xlane.f32.xlu0 %v2601
  %v2603 = vpop.xlane.xlu0 %2602
  %v2604 = vmul.f32 %v2597, %v721
  %v2605 = vmul.f32 %v2600, %v721
  %v2606 = vmul.f32 %v2603, %v721
  %v2607 = vadd.f32 %v2604, 1e-05
  %v2608 = vadd.f32 %v2605, 1e-05
  %v2609 = vadd.f32 %v2606, 1e-05
  %v2610 = vrsqrt.pop %v2607
  %v2611 = vrsqrt.pop %v2608
  %v2612 = vrsqrt.pop %v2609
  %v2613 = vmul.f32 %v2589, %v2610
  %v2614 = vmul.f32 %v2590, %v2611
  %v2615 = vmul.f32 %v2591, %v2612
  %v2616 = vlaneseq
  %v2617 = vshrl.u32 %v2616, 7
  %v2618 = vsub.s32 3, %v2617
  %v2619 = vrot.slane %v28, %v2618
  %v2620 = vmul.f32 %v2613, %v2619
  %v2621 = vmul.f32 %v2614, %v2619
  %v2622 = vmul.f32 %v2615, %v2619
  %v2623 = vlaneseq
  %v2624 = vshrl.u32 %v2623, 7
  %v2625 = vsub.s32 4, %v2624
  %v2626 = vrot.slane %v28, %v2625
  %v2627 = vadd.f32 %v2620, %v2626
  %v2628 = vadd.f32 %v2621, %v2626
  %v2629 = vadd.f32 %v2622, %v2626
  %s2630 = scalar_lea.vmem %s5, 64
  %v2631 = vld [vmem:[%s2630] sm:$0xff]
  %v2632 = vld [vmem:[%s2630 + $0x8] sm:$0xff]
  %v2633 = vld [vmem:[%s2630 + $0x10] sm:$0xff]
  %v2634 = vld [vmem:[%s2630 + $0x18] sm:$0xff]
  %v2635 = vld [vmem:[%s2630 + $0x20] sm:$0xff]
  %v2636 = vld [vmem:[%s2630 + $0x28] sm:$0xff]
  %v2637 = vld [vmem:[%s2630 + $0x30] sm:$0xff]
  %v2638 = vld [vmem:[%s2630 + $0x38] sm:$0xff]
  %v2639 = vlaneseq
  %v2640 = vshrl.u32 %v2639, 7
  %v2641 = vsub.s32 5, %v2640
  %v2642 = vrot.slane %v28, %v2641
  %v2644 = vsel %vm711, %v2627, 0
  %v2647 = vsel %vm711, %v2628, 0
  %v2650 = vsel %vm711, %v2629, 0
  %2652 = vmatprep.subr.mxu0 0.0
  %2653 = vmatpush1.msra.mxu0 %v2631
  %2654 = vmatprep.subr.mxu0 0.0
  %2655 = vmatpush1.msra.mxu0 %v2632
  %2656 = vmatprep.subr.mxu0 0.0
  %2657 = vmatpush1.msra.mxu0 %v2633
  %2658 = vmatprep.subr.mxu0 0.0
  %2659 = vmatpush1.msra.mxu0 %v2634
  %2660 = vmatprep.subr.mxu0 0.0
  %2661 = vmatpush1.msra.mxu0 %v2635
  %2662 = vmatprep.subr.mxu0 0.0
  %2663 = vmatpush1.msra.mxu0 %v2636
  %2664 = vmatprep.subr.mxu0 0.0
  %2665 = vmatpush1.msra.mxu0 %v2637
  %2666 = vmatprep.subr.mxu0 0.0
  %2667 = vmatpush1.msra.mxu0 %v2638
  %2668 = vmatprep.subr.mxu0 0.0
  %2669 = vmatpush1.msra.mxu0 0.0
  %2670 = vmatprep.subr.mxu0 0.0
  %2671 = vmatpush1.msra.mxu0 0.0
  %2672 = vmatprep.subr.mxu0 0.0
  %2673 = vmatpush1.msra.mxu0 0.0
  %2674 = vmatprep.subr.mxu0 0.0
  %2675 = vmatpush1.msra.mxu0 0.0
  %2676 = vmatprep.subr.mxu0 0.0
  %2677 = vmatpush1.msra.mxu0 0.0
  %2678 = vmatprep.subr.mxu0 0.0
  %2679 = vmatpush1.msra.mxu0 0.0
  %2680 = vmatprep.subr.mxu0 0.0
  %2681 = vmatpush1.msra.mxu0 0.0
  %2682 = vmatprep.subr.mxu0 0.0
  %2683 = vmatpush1.msra.mxu0 0.0
  %2684 = vmatprep.subr.mxu0 0.0
  %2685 = vmatpush1.msra.mxu0 0.0
  %2686 = vmatprep.subr.mxu0 0.0
  %2687 = vmatpush1.msra.mxu0 0.0
  %2688 = vmatprep.subr.mxu0 0.0
  %2689 = vmatpush1.msra.mxu0 0.0
  %2690 = vmatprep.subr.mxu0 0.0
  %2691 = vmatpush1.msra.mxu0 0.0
  %2692 = vmatprep.subr.mxu0 0.0
  %2693 = vmatpush1.msra.mxu0 0.0
  %2694 = vmatprep.subr.mxu0 0.0
  %2695 = vmatpush1.msra.mxu0 0.0
  %2696 = vmatprep.subr.mxu0 0.0
  %2697 = vmatpush1.msra.mxu0 0.0
  %2698 = vmatprep.subr.mxu0 0.0
  %2699 = vmatpush1.msra.mxu0 0.0
  %2700 = vmatprep.subr.mxu0 0.0
  %2701 = vmatpush1.msra.mxu0 0.0
  %2702 = vmatprep.subr.mxu0 0.0
  %2703 = vmatpush1.msra.mxu0 0.0
  %2704 = vmatprep.subr.mxu0 0.0
  %2705 = vmatpush1.msra.mxu0 0.0
  %2706 = vmatprep.subr.mxu0 0.0
  %2707 = vmatpush1.msra.mxu0 0.0
  %2708 = vmatprep.subr.mxu0 0.0
  %2709 = vmatpush1.msra.mxu0 0.0
  %2710 = vmatprep.subr.mxu0 0.0
  %2711 = vmatpush1.msra.mxu0 0.0
  %2712 = vmatprep.subr.mxu0 0.0
  %2713 = vmatpush1.msra.mxu0 0.0
  %2714 = vmatprep.subr.mxu0 0.0
  %2715 = vmatpush1.msra.mxu0 0.0
  %2716 = vmatprep.mubr.f32.mxu0 0.0
  %2717 = vmatmul.mubr.f32.gmra.mrb[0].mxu0 %v2644
  %v2718 = vpop.f32.mrb[0].mxu0
  %v2719 = vadd.f32 %v2642, %v2718
  %v2720 = vpop.f32.mrb[0].mxu0
  %2721 = vmatprep.mubr.f32.mxu0 0.0
  %2722 = vmatmul.mubr.f32.gmra.mrb[0].mxu0 %v2647
  %v2723 = vpop.f32.mrb[0].mxu0
  %v2724 = vadd.f32 %v2642, %v2723
  %v2725 = vpop.f32.mrb[0].mxu0
  %2726 = vmatprep.mubr.f32.mxu0 0.0
  %2727 = vmatmul.mubr.f32.gmra.mrb[0].mxu0 %v2650
  %v2728 = vpop.f32.mrb[0].mxu0
  %v2729 = vadd.f32 %v2642, %v2728
  %v2730 = vpop.f32.mrb[0].mxu0
  %2731 = vdwg.mxu0
  %v2732 = vmul.f32 %v2719, 0.5
  %v2733 = vmul.f32 %v2724, 0.5
  %v2734 = vmul.f32 %v2729, 0.5
  %v2735 = vmul.f32 %v2719, 0.70710677
  %v2736 = vmul.f32 %v2724, 0.70710677
  %v2737 = vmul.f32 %v2729, 0.70710677
  %v2738 = vand.u32 2147483647, %v2735
  %v2739 = vand.u32 2147483647, %v2736
  %v2740 = vand.u32 2147483647, %v2737
  %v2741 = vmul.f32 %v2738, 0.3275911
  %v2742 = vmul.f32 %v2739, 0.3275911
  %v2743 = vmul.f32 %v2740, 0.3275911
  %v2744 = vadd.f32 %v2741, 1.0
  %v2745 = vadd.f32 %v2742, 1.0
  %v2746 = vadd.f32 %v2743, 1.0
  %v2747 = vrcp.pop %v2744
  %v2748 = vmul.f32 1.0, %v2747
  %v2749 = vrcp.pop %v2745
  %v2750 = vmul.f32 1.0, %v2749
  %v2751 = vrcp.pop %v2746
  %v2752 = vmul.f32 1.0, %v2751
  %v2753 = vmul.f32 %v2748, 1.0614054
  %v2754 = vmul.f32 %v2750, 1.0614054
  %v2755 = vmul.f32 %v2752, 1.0614054
  %v2756 = vadd.f32 %v2753, -1.4531521
  %v2757 = vadd.f32 %v2754, -1.4531521
  %v2758 = vadd.f32 %v2755, -1.4531521
  %v2759 = vmul.f32 %v2756, %v2748
  %v2760 = vmul.f32 %v2757, %v2750
  %v2761 = vmul.f32 %v2758, %v2752
  %v2762 = vadd.f32 %v2759, 1.4214138
  %v2763 = vadd.f32 %v2760, 1.4214138
  %v2764 = vadd.f32 %v2761, 1.4214138
  %v2765 = vmul.f32 %v2762, %v2748
  %v2766 = vmul.f32 %v2763, %v2750
  %v2767 = vmul.f32 %v2764, %v2752
  %v2768 = vadd.f32 %v2765, -0.28449672
  %v2769 = vadd.f32 %v2766, -0.28449672
  %v2770 = vadd.f32 %v2767, -0.28449672
  %v2771 = vmul.f32 %v2768, %v2748
  %v2772 = vmul.f32 %v2769, %v2750
  %v2773 = vmul.f32 %v2770, %v2752
  %v2774 = vadd.f32 %v2771, 0.2548296
  %v2775 = vadd.f32 %v2772, 0.2548296
  %v2776 = vadd.f32 %v2773, 0.2548296
  %v2777 = vmul.f32 %v2774, %v2748
  %v2778 = vmul.f32 %v2775, %v2750
  %v2779 = vmul.f32 %v2776, %v2752
  %v2780 = vsub.f32 0.0, %v2738
  %v2781 = vsub.f32 0.0, %v2739
  %v2782 = vsub.f32 0.0, %v2740
  %v2783 = vmul.f32 %v2780, %v2738
  %v2784 = vmul.f32 %v2781, %v2739
  %v2785 = vmul.f32 %v2782, %v2740
  %v2786 = vmul.f32 %v2783, 1.442695
  %v2787 = vpow.pop %v2786
  %v2788 = vmul.f32 %v2784, 1.442695
  %v2789 = vpow.pop %v2788
  %v2790 = vmul.f32 %v2785, 1.442695
  %v2791 = vpow.pop %v2790
  %v2792 = vmul.f32 %v2777, %v2787
  %v2793 = vmul.f32 %v2778, %v2789
  %v2794 = vmul.f32 %v2779, %v2791
  %v2795 = vsub.f32 1.0, %v2792
  %v2796 = vsub.f32 1.0, %v2793
  %v2797 = vsub.f32 1.0, %v2794
  %vm2798 = vcmp.ge.f32.partialorder %v2735, 0.0
  %vm2799 = vcmp.ge.f32.partialorder %v2736, 0.0
  %vm2800 = vcmp.ge.f32.partialorder %v2737, 0.0
  %v2801 = vsub.f32 0.0, %v2795
  %v2802 = vsub.f32 0.0, %v2796
  %v2803 = vsub.f32 0.0, %v2797
  %v2804 = vsel %vm2798, %v2795, %v2801
  %v2805 = vsel %vm2799, %v2796, %v2802
  %v2806 = vsel %vm2800, %v2797, %v2803
  %v2807 = vadd.f32 %v2804, 1.0
  %v2808 = vadd.f32 %v2805, 1.0
  %v2809 = vadd.f32 %v2806, 1.0
  %v2810 = vmul.f32 %v2732, %v2807
  %v2811 = vmul.f32 %v2733, %v2808
  %v2812 = vmul.f32 %v2734, %v2809
  %2813 = vmatprep.subr.mxu0 0.0
  %2814 = vmatpush1.msra.mxu0 %v2462
  %2815 = vmatprep.subr.mxu0 0.0
  %2816 = vmatpush1.msra.mxu0 %v2463
  %2817 = vmatprep.subr.mxu0 0.0
  %2818 = vmatpush1.msra.mxu0 %v2464
  %2819 = vmatprep.subr.mxu0 0.0
  %2820 = vmatpush1.msra.mxu0 %v2465
  %2821 = vmatprep.subr.mxu0 0.0
  %2822 = vmatpush1.msra.mxu0 %v2466
  %2823 = vmatprep.subr.mxu0 0.0
  %2824 = vmatpush1.msra.mxu0 %v2467
  %2825 = vmatprep.subr.mxu0 0.0
  %2826 = vmatpush1.msra.mxu0 %v2468
  %2827 = vmatprep.subr.mxu0 0.0
  %2828 = vmatpush1.msra.mxu0 %v2469
  %2829 = vmatprep.subr.mxu0 0.0
  %2830 = vmatpush1.msra.mxu0 %v2470
  %2831 = vmatprep.subr.mxu0 0.0
  %2832 = vmatpush1.msra.mxu0 %v2471
  %2833 = vmatprep.subr.mxu0 0.0
  %2834 = vmatpush1.msra.mxu0 %v2472
  %2835 = vmatprep.subr.mxu0 0.0
  %2836 = vmatpush1.msra.mxu0 %v2473
  %2837 = vmatprep.subr.mxu0 0.0
  %2838 = vmatpush1.msra.mxu0 %v2474
  %2839 = vmatprep.subr.mxu0 0.0
  %2840 = vmatpush1.msra.mxu0 %v2475
  %2841 = vmatprep.subr.mxu0 0.0
  %2842 = vmatpush1.msra.mxu0 %v2476
  %2843 = vmatprep.subr.mxu0 0.0
  %2844 = vmatpush1.msra.mxu0 %v2477
  %2845 = vmatprep.subr.mxu0 0.0
  %2846 = vmatpush1.msra.mxu0 0.0
  %2847 = vmatprep.subr.mxu0 0.0
  %2848 = vmatpush1.msra.mxu0 0.0
  %2849 = vmatprep.subr.mxu0 0.0
  %2850 = vmatpush1.msra.mxu0 0.0
  %2851 = vmatprep.subr.mxu0 0.0
  %2852 = vmatpush1.msra.mxu0 0.0
  %2853 = vmatprep.subr.mxu0 0.0
  %2854 = vmatpush1.msra.mxu0 0.0
  %2855 = vmatprep.subr.mxu0 0.0
  %2856 = vmatpush1.msra.mxu0 0.0
  %2857 = vmatprep.subr.mxu0 0.0
  %2858 = vmatpush1.msra.mxu0 0.0
  %2859 = vmatprep.subr.mxu0 0.0
  %2860 = vmatpush1.msra.mxu0 0.0
  %2861 = vmatprep.subr.mxu0 0.0
  %2862 = vmatpush1.msra.mxu0 0.0
  %2863 = vmatprep.subr.mxu0 0.0
  %2864 = vmatpush1.msra.mxu0 0.0
  %2865 = vmatprep.subr.mxu0 0.0
  %2866 = vmatpush1.msra.mxu0 0.0
  %2867 = vmatprep.subr.mxu0 0.0
  %2868 = vmatpush1.msra.mxu0 0.0
  %2869 = vmatprep.subr.mxu0 0.0
  %2870 = vmatpush1.msra.mxu0 0.0
  %2871 = vmatprep.subr.mxu0 0.0
  %2872 = vmatpush1.msra.mxu0 0.0
  %2873 = vmatprep.subr.mxu0 0.0
  %2874 = vmatpush1.msra.mxu0 0.0
  %2875 = vmatprep.subr.mxu0 0.0
  %2876 = vmatpush1.msra.mxu0 0.0
  %2877 = vmatprep.mubr.f32.mxu0 0.0
  %2878 = vmatmul.mubr.f32.gmra.mrb[0].mxu0 %v2810
  %v2879 = vpop.f32.mrb[0].mxu0
  %v2880 = vadd.f32 0.0, %v2879
  %v2881 = vpop.f32.mrb[0].mxu0
  %2882 = vmatprep.mubr.f32.mxu0 0.0
  %2883 = vmatmul.mubr.f32.gmra.mrb[0].mxu0 %v2811
  %v2884 = vpop.f32.mrb[0].mxu0
  %v2885 = vadd.f32 0.0, %v2884
  %v2886 = vpop.f32.mrb[0].mxu0
  %2887 = vmatprep.mubr.f32.mxu0 0.0
  %2888 = vmatmul.mubr.f32.gmra.mrb[0].mxu0 %v2812
  %v2889 = vpop.f32.mrb[0].mxu0
  %v2890 = vadd.f32 0.0, %v2889
  %v2891 = vpop.f32.mrb[0].mxu0
  %2892 = vdwg.mxu0
  %v2893 = vadd.f32 %v2574, %v2880
  %v2894 = vadd.f32 %v2575, %v2885
  %v2895 = vadd.f32 %v2576, %v2890
  %v2896 = vlaneseq
  %v2897 = vshrl.u32 %v2896, 7
  %v2898 = vsub.s32 6, %v2897
  %v2899 = vrot.slane %v28, %v2898
  %v2900 = vadd.f32 %v2893, %v2899
  %v2901 = vadd.f32 %v2894, %v2899
  %v2902 = vadd.f32 %v2895, %v2899
  %v2903 = vsel %vm711, %v2900, 0.0
  %2904 = vadd.xlane.f32.xlu0 %v2903
  %v2905 = vpop.xlane.xlu0 %2904
  %v2906 = vsel %vm711, %v2901, 0.0
  %2907 = vadd.xlane.f32.xlu0 %v2906
  %v2908 = vpop.xlane.xlu0 %2907
  %v2909 = vsel %vm711, %v2902, 0.0
  %2910 = vadd.xlane.f32.xlu0 %v2909
  %v2911 = vpop.xlane.xlu0 %2910
  %v2912 = vmul.f32 %v2905, %v721
  %v2913 = vmul.f32 %v2908, %v721
  %v2914 = vmul.f32 %v2911, %v721
  %v2915 = vsub.f32 %v2900, %v2912
  %v2916 = vsub.f32 %v2901, %v2913
  %v2917 = vsub.f32 %v2902, %v2914
  %v2918 = vmul.f32 %v2915, %v2915
  %v2919 = vmul.f32 %v2916, %v2916
  %v2920 = vmul.f32 %v2917, %v2917
  %v2921 = vsel %vm711, %v2918, 0.0
  %2922 = vadd.xlane.f32.xlu0 %v2921
  %v2923 = vpop.xlane.xlu0 %2922
  %v2924 = vsel %vm711, %v2919, 0.0
  %2925 = vadd.xlane.f32.xlu0 %v2924
  %v2926 = vpop.xlane.xlu0 %2925
  %v2927 = vsel %vm711, %v2920, 0.0
  %2928 = vadd.xlane.f32.xlu0 %v2927
  %v2929 = vpop.xlane.xlu0 %2928
  %v2930 = vmul.f32 %v2923, %v721
  %v2931 = vmul.f32 %v2926, %v721
  %v2932 = vmul.f32 %v2929, %v721
  %v2933 = vadd.f32 %v2930, 1e-05
  %v2934 = vadd.f32 %v2931, 1e-05
  %v2935 = vadd.f32 %v2932, 1e-05
  %v2936 = vrsqrt.pop %v2933
  %v2937 = vrsqrt.pop %v2934
  %v2938 = vrsqrt.pop %v2935
  %v2939 = vmul.f32 %v2915, %v2936
  %v2940 = vmul.f32 %v2916, %v2937
  %v2941 = vmul.f32 %v2917, %v2938
  %v2942 = vlaneseq
  %v2943 = vshrl.u32 %v2942, 7
  %v2944 = vsub.s32 4, %v2943
  %v2945 = vrot.slane %v26, %v2944
  %v2946 = vmul.f32 %v2939, %v2945
  %v2947 = vmul.f32 %v2940, %v2945
  %v2948 = vmul.f32 %v2941, %v2945
  %v2949 = vlaneseq
  %v2950 = vshrl.u32 %v2949, 7
  %v2951 = vsub.s32 5, %v2950
  %v2952 = vrot.slane %v26, %v2951
  %v2953 = vadd.f32 %v2946, %v2952
  %v2954 = vadd.f32 %v2947, %v2952
  %v2955 = vadd.f32 %v2948, %v2952
  %v2957 = vsel %vm976, %v41, 0
  %2959 = vmatprep.subr.mxu0 0.0
  %2960 = vmatpush1.msra.mxu0 %v2953
  %2961 = vmatprep.subr.mxu0 0.0
  %2962 = vmatpush1.msra.mxu0 %v2954
  %2963 = vmatprep.subr.mxu0 0.0
  %2964 = vmatpush1.msra.mxu0 %v2955
  %2965 = vmatprep.subr.mxu0 0.0
  %2966 = vmatpush1.msra.mxu0 0.0
  %2967 = vmatprep.subr.mxu0 0.0
  %2968 = vmatpush1.msra.mxu0 0.0
  %2969 = vmatprep.subr.mxu0 0.0
  %2970 = vmatpush1.msra.mxu0 0.0
  %2971 = vmatprep.subr.mxu0 0.0
  %2972 = vmatpush1.msra.mxu0 0.0
  %2973 = vmatprep.subr.mxu0 0.0
  %2974 = vmatpush1.msra.mxu0 0.0
  %2975 = vmatprep.subr.mxu0 0.0
  %2976 = vmatpush1.msra.mxu0 0.0
  %2977 = vmatprep.subr.mxu0 0.0
  %2978 = vmatpush1.msra.mxu0 0.0
  %2979 = vmatprep.subr.mxu0 0.0
  %2980 = vmatpush1.msra.mxu0 0.0
  %2981 = vmatprep.subr.mxu0 0.0
  %2982 = vmatpush1.msra.mxu0 0.0
  %2983 = vmatprep.subr.mxu0 0.0
  %2984 = vmatpush1.msra.mxu0 0.0
  %2985 = vmatprep.subr.mxu0 0.0
  %2986 = vmatpush1.msra.mxu0 0.0
  %2987 = vmatprep.subr.mxu0 0.0
  %2988 = vmatpush1.msra.mxu0 0.0
  %2989 = vmatprep.subr.mxu0 0.0
  %2990 = vmatpush1.msra.mxu0 0.0
  %2991 = vmatprep.subr.mxu0 0.0
  %2992 = vmatpush1.msra.mxu0 0.0
  %2993 = vmatprep.subr.mxu0 0.0
  %2994 = vmatpush1.msra.mxu0 0.0
  %2995 = vmatprep.subr.mxu0 0.0
  %2996 = vmatpush1.msra.mxu0 0.0
  %2997 = vmatprep.subr.mxu0 0.0
  %2998 = vmatpush1.msra.mxu0 0.0
  %2999 = vmatprep.subr.mxu0 0.0
  %3000 = vmatpush1.msra.mxu0 0.0
  %3001 = vmatprep.subr.mxu0 0.0
  %3002 = vmatpush1.msra.mxu0 0.0
  %3003 = vmatprep.subr.mxu0 0.0
  %3004 = vmatpush1.msra.mxu0 0.0
  %3005 = vmatprep.subr.mxu0 0.0
  %3006 = vmatpush1.msra.mxu0 0.0
  %3007 = vmatprep.subr.mxu0 0.0
  %3008 = vmatpush1.msra.mxu0 0.0
  %3009 = vmatprep.subr.mxu0 0.0
  %3010 = vmatpush1.msra.mxu0 0.0
  %3011 = vmatprep.subr.mxu0 0.0
  %3012 = vmatpush1.msra.mxu0 0.0
  %3013 = vmatprep.subr.mxu0 0.0
  %3014 = vmatpush1.msra.mxu0 0.0
  %3015 = vmatprep.subr.mxu0 0.0
  %3016 = vmatpush1.msra.mxu0 0.0
  %3017 = vmatprep.subr.mxu0 0.0
  %3018 = vmatpush1.msra.mxu0 0.0
  %3019 = vmatprep.subr.mxu0 0.0
  %3020 = vmatpush1.msra.mxu0 0.0
  %3021 = vmatprep.subr.mxu0 0.0
  %3022 = vmatpush1.msra.mxu0 0.0
  %3023 = vmatprep.mubr.f32.mxu0 0.0
  %3024 = vmatmul.mubr.f32.gmra.mrb[0].mxu0 %v2957
  %v3025 = vpop.f32.mrb[0].mxu0
  %v3026 = vadd.f32 0.0, %v3025
  %v3027 = vpop.f32.mrb[0].mxu0
  %3028 = vdwg.mxu0
  %v3029 = vlaneseq
  %v3030 = vshrl.u32 %v3029, 7
  %v3031 = vsub.s32 6, %v3030
  %v3032 = vrot.slane %v26, %v3031
  %v3034 = vsel %vm711, %v3026, 0
  %3036 = vmatprep.subr.mxu0 0.0
  %3037 = vmatpush1.msra.mxu0 %v42
  %3038 = vmatprep.subr.mxu0 0.0
  %3039 = vmatpush1.msra.mxu0 %v43
  %3040 = vmatprep.subr.mxu0 0.0
  %3041 = vmatpush1.msra.mxu0 %v44
  %3042 = vmatprep.subr.mxu0 0.0
  %3043 = vmatpush1.msra.mxu0 %v45
  %3044 = vmatprep.subr.mxu0 0.0
  %3045 = vmatpush1.msra.mxu0 %v46
  %3046 = vmatprep.subr.mxu0 0.0
  %3047 = vmatpush1.msra.mxu0 %v47
  %3048 = vmatprep.subr.mxu0 0.0
  %3049 = vmatpush1.msra.mxu0 %v48
  %3050 = vmatprep.subr.mxu0 0.0
  %3051 = vmatpush1.msra.mxu0 %v49
  %3052 = vmatprep.subr.mxu0 0.0
  %3053 = vmatpush1.msra.mxu0 0.0
  %3054 = vmatprep.subr.mxu0 0.0
  %3055 = vmatpush1.msra.mxu0 0.0
  %3056 = vmatprep.subr.mxu0 0.0
  %3057 = vmatpush1.msra.mxu0 0.0
  %3058 = vmatprep.subr.mxu0 0.0
  %3059 = vmatpush1.msra.mxu0 0.0
  %3060 = vmatprep.subr.mxu0 0.0
  %3061 = vmatpush1.msra.mxu0 0.0
  %3062 = vmatprep.subr.mxu0 0.0
  %3063 = vmatpush1.msra.mxu0 0.0
  %3064 = vmatprep.subr.mxu0 0.0
  %3065 = vmatpush1.msra.mxu0 0.0
  %3066 = vmatprep.subr.mxu0 0.0
  %3067 = vmatpush1.msra.mxu0 0.0
  %3068 = vmatprep.subr.mxu0 0.0
  %3069 = vmatpush1.msra.mxu0 0.0
  %3070 = vmatprep.subr.mxu0 0.0
  %3071 = vmatpush1.msra.mxu0 0.0
  %3072 = vmatprep.subr.mxu0 0.0
  %3073 = vmatpush1.msra.mxu0 0.0
  %3074 = vmatprep.subr.mxu0 0.0
  %3075 = vmatpush1.msra.mxu0 0.0
  %3076 = vmatprep.subr.mxu0 0.0
  %3077 = vmatpush1.msra.mxu0 0.0
  %3078 = vmatprep.subr.mxu0 0.0
  %3079 = vmatpush1.msra.mxu0 0.0
  %3080 = vmatprep.subr.mxu0 0.0
  %3081 = vmatpush1.msra.mxu0 0.0
  %3082 = vmatprep.subr.mxu0 0.0
  %3083 = vmatpush1.msra.mxu0 0.0
  %3084 = vmatprep.subr.mxu0 0.0
  %3085 = vmatpush1.msra.mxu0 0.0
  %3086 = vmatprep.subr.mxu0 0.0
  %3087 = vmatpush1.msra.mxu0 0.0
  %3088 = vmatprep.subr.mxu0 0.0
  %3089 = vmatpush1.msra.mxu0 0.0
  %3090 = vmatprep.subr.mxu0 0.0
  %3091 = vmatpush1.msra.mxu0 0.0
  %3092 = vmatprep.subr.mxu0 0.0
  %3093 = vmatpush1.msra.mxu0 0.0
  %3094 = vmatprep.subr.mxu0 0.0
  %3095 = vmatpush1.msra.mxu0 0.0
  %3096 = vmatprep.subr.mxu0 0.0
  %3097 = vmatpush1.msra.mxu0 0.0
  %3098 = vmatprep.subr.mxu0 0.0
  %3099 = vmatpush1.msra.mxu0 0.0
  %3100 = vmatprep.mubr.f32.mxu0 0.0
  %3101 = vmatmul.mubr.f32.gmra.mrb[0].mxu0 %v3034
  %v3102 = vpop.f32.mrb[0].mxu0
  %v3103 = vadd.f32 %v3032, %v3102
  %v3104 = vpop.f32.mrb[0].mxu0
  %3105 = vdwg.mxu0
  %3106 = vst [vmem:[%s7] sm:$0xff] %v3103
  // Predicated region
  $region30: #{forward.1} parent=0 // pred_check
    _
  $region31: #{forward.1} parent=0 // pred_check_branch
    %3108 = sbr.rel (0) target = $region33
  $region32: #{forward.1} parent=0 // pred_region
    _
  $region33: #{forward.1} parent=0 // pred_fallthru
    _
  // Predicated region
  $region34: #{forward.1} parent=0 // pred_check
    _
  $region35: #{forward.1} parent=0 // pred_check_branch
    %3110 = sbr.rel (0) target = $region37
  $region36: #{forward.1} parent=0 // pred_region
    _
  $region37: #{forward.1} parent=0 // pred_fallthru
    _

</llo_original>
